<compile_context>
chip_gen: v6e
topology: v6e:2x2x1
jax: 0.10.0
libtpu: 0.0.40
codegen_flags: <defaults>
</compile_context>

<pallas_src>
import functools

import jax
import jax.numpy as jnp
from jax.experimental import pallas as pl
from jax.experimental.pallas import tpu as pltpu


def _stem_kernel(x_ref, wm_ref, bias_ref, sel_ref, o_ref, *,
                 pieces, Ho, Wo, Ho2, Wo2):
    """Fused conv (in-VMEM patch build) + BN bias + ReLU + 3x3/2 max-pool.

    x_ref  : [1, Hq, G, Wq]  space-to-depth raw input window for one (n, t_out)
    wm_ref : [Co, K]         conv weights with BN scale folded in
    bias_ref: [Co, 1]        folded BN shift
    sel_ref: [3, Wo, Wo2]    0/1 column-selection matrices for the width pool
    o_ref  : [1, Ho2, Co, Wo2]
    """
    xt = x_ref[0]                                        # [Hq, G, Wq]

    # ---- in-VMEM patch extraction (unit-stride static slices only) ----------
    parts = [xt[dh:dh + Ho, g0:g1, dw:dw + Wo] for (dh, dw, g0, g1) in pieces]
    p = jnp.concatenate(parts, axis=1)                   # [Ho, K, Wo]

    # ---- conv as batched matmul (batch = output row) + bias + ReLU ----------
    wm = wm_ref[...]                                     # [Co, K]
    wb = jnp.broadcast_to(wm[None], (Ho,) + wm.shape)    # [Ho, Co, K]
    y = jax.lax.dot_general(wb, p, (((2,), (1,)), ((0,), (0,))),
                            preferred_element_type=jnp.float32)   # [Ho, Co, Wo]
    y = jnp.maximum(y + bias_ref[...][None, :, :], 0.0)

    # ---- max-pool 3x3, stride 2, pad 1 (temporal window/stride is 1) --------
    # Height direction: even/odd row split (leading-dim ops only). Zero padding
    # is safe because every value is post-ReLU (>= 0).
    co = y.shape[1]
    yr = y.reshape(Ho2, 2, co, Wo)
    even, odd = yr[:, 0], yr[:, 1]
    odd_up = jnp.concatenate([jnp.zeros_like(odd[:1]), odd[:-1]], axis=0)
    hp = jnp.maximum(jnp.maximum(even, odd), odd_up)     # [Ho2, Co, Wo]

    # Width direction: out[wo] = max over cols {2wo-1, 2wo, 2wo+1}; each shifted
    # column selection is a tiny 0/1 matmul (missing border columns contribute 0).
    res = None
    for d in range(3):
        seld = jnp.broadcast_to(sel_ref[d][None], (Ho2, Wo, Wo2))
        t = jax.lax.dot_general(hp, seld, (((2,), (1,)), ((0,), (0,))),
                                preferred_element_type=jnp.float32)
        res = t if res is None else jnp.maximum(res, t)  # [Ho2, Co, Wo2]

    o_ref[0] = res.astype(o_ref.dtype)


def resnet_basic_stem(x, weight, gamma, beta, running_mean, running_var,
                      *, stride, padding, eps=1e-5):
    N, Ci, T, H, W = x.shape
    Co, Ci_w, kt, kh, kw = weight.shape
    assert Ci == Ci_w
    st, sh, sw = stride
    pt, ph, pw = padding

    Tp, Hp, Wp = T + 2 * pt, H + 2 * ph, W + 2 * pw
    To = (Tp - kt) // st + 1
    Ho = (Hp - kh) // sh + 1
    Wo = (Wp - kw) // sw + 1
    # TODO(synk): odd conv-output H/W would need one extra pooled-edge case.
    assert Ho % 2 == 0 and Wo % 2 == 0, "fused pool path assumes even conv output H/W"
    Ho2 = (Ho - 1) // 2 + 1
    Wo2 = (Wo - 1) // 2 + 1

    # ---- raw-input prep: pad + space-to-depth + temporal gather (small, ~kt/st x) ----
    Hp2 = pl.cdiv(Hp, sh) * sh
    Wp2 = pl.cdiv(Wp, sw) * sw
    xpad = jnp.pad(x.astype(jnp.float32),
                   ((0, 0), (0, 0), (pt, pt),
                    (ph, ph + Hp2 - Hp), (pw, pw + Wp2 - Wp)))
    Hq, Wq = Hp2 // sh, Wp2 // sw
    xq = xpad.reshape(N, Ci, Tp, Hq, sh, Wq, sw)
    slabs = [jax.lax.slice_in_dim(xq, it, it + (To - 1) * st + 1, st, axis=2)
             for it in range(kt)]
    xg = jnp.stack(slabs, axis=0)            # [kt, N, Ci, To, Hq, sh, Wq, sw]
    a = xg.transpose(1, 3, 4, 5, 7, 0, 2, 6)  # [N, To, Hq, rh, rw, kt, Ci, Wq]
    G = sh * sw * kt * Ci
    a = a.reshape(N * To, Hq, G, Wq)

    # ---- static tap enumeration: shared by kernel slices and weight layout ----
    Dh = -(-kh // sh)
    Dw = -(-kw // sw)
    pieces = []
    ci_i, it_i, ih_i, iw_i = [], [], [], []
    for dh in range(Dh):
        nrh = min(sh, kh - sh * dh)
        for dw in range(Dw):
            nrw = min(sw, kw - sw * dw)
            for rh in range(nrh):
                g0 = rh * sw * kt * Ci
                g1 = (rh * sw + nrw) * kt * Ci
                pieces.append((dh, dw, g0, g1))
                for rw in range(nrw):
                    for it in range(kt):
                        for ci in range(Ci):
                            ci_i.append(ci)
                            it_i.append(it)
                            ih_i.append(sh * dh + rh)
                            iw_i.append(sw * dw + rw)
    K = Ci * kt * kh * kw
    assert len(ci_i) == K

    # ---- fold BN (eval) into weights / bias ----
    scale = (gamma / jnp.sqrt(running_var + eps)).astype(jnp.float32)
    shift = (beta - running_mean * scale).astype(jnp.float32)
    wmat = weight[:, jnp.array(ci_i), jnp.array(it_i),
                  jnp.array(ih_i), jnp.array(iw_i)].astype(jnp.float32)   # [Co, K]
    wmat = wmat * scale[:, None]
    bias = shift.reshape(Co, 1)

    # ---- width-pool selection matrices (0/1) ----
    w_idx = jnp.arange(Wo)[:, None]
    wo_idx = jnp.arange(Wo2)[None, :]
    sel = jnp.stack([(w_idx == 2 * wo_idx + d).astype(jnp.float32)
                     for d in (-1, 0, 1)], axis=0)        # [3, Wo, Wo2]

    NT = N * To
    kern = functools.partial(_stem_kernel, pieces=tuple(pieces),
                             Ho=Ho, Wo=Wo, Ho2=Ho2, Wo2=Wo2)
    pooled = pl.pallas_call(
        kern,
        out_shape=jax.ShapeDtypeStruct((NT, Ho2, Co, Wo2), jnp.float32),
        grid=(NT,),
        in_specs=[
            pl.BlockSpec((1, Hq, G, Wq), lambda b: (b, 0, 0, 0)),
            pl.BlockSpec((Co, K), lambda b: (0, 0)),
            pl.BlockSpec((Co, 1), lambda b: (0, 0)),
            pl.BlockSpec((3, Wo, Wo2), lambda b: (0, 0, 0)),
        ],
        out_specs=pl.BlockSpec((1, Ho2, Co, Wo2), lambda b: (b, 0, 0, 0)),
        compiler_params=pltpu.CompilerParams(
            dimension_semantics=("parallel",),
            vmem_limit_bytes=48 * 1024 * 1024),   # stays under v7x's 64 MiB physical VMEM
    )(a, wmat, bias, sel)

    # Back to PyTorch's NCDHW.
    return pooled.reshape(N, To, Ho2, Co, Wo2).transpose(0, 3, 1, 2, 4)


def _reference(x, weight, gamma, beta, rmean, rvar, *, stride, padding, eps):
    """Pure-JAX reference of the PyTorch forward (BN in eval mode)."""
    y = jax.lax.conv_general_dilated(
        x, weight, window_strides=stride,
        padding=[(p, p) for p in padding],
        dimension_numbers=("NCDHW", "OIDHW", "NCDHW"))
    inv = 1.0 / jnp.sqrt(rvar + eps)
    y = (y - rmean[None, :, None, None, None]) * inv[None, :, None, None, None]
    y = y * gamma[None, :, None, None, None] + beta[None, :, None, None, None]
    y = jnp.maximum(y, 0.0)
    y = jax.lax.reduce_window(
        y, -jnp.inf, jax.lax.max,
        window_dimensions=(1, 1, 1, 3, 3),
        window_strides=(1, 1, 1, 2, 2),
        padding=((0, 0), (0, 0), (0, 0), (1, 1), (1, 1)))
    return y


if __name__ == "__main__":
    # Typical stem config (dim_in=3 RGB, small dim_out), small shapes.
    dim_in, dim_out = 3, 8
    kernel = (3, 7, 7)
    stride = (1, 2, 2)
    padding = (1, 3, 3)
    N, T, H, W = 2, 4, 16, 16

    key = jax.random.PRNGKey(0)
    k_w, k_g, k_b, k_m, k_v, k_x = jax.random.split(key, 6)
    weight = 0.05 * jax.random.normal(k_w, (dim_out, dim_in) + kernel, dtype=jnp.float32)
    gamma = jax.random.uniform(k_g, (dim_out,), minval=0.5, maxval=1.5, dtype=jnp.float32)
    beta = 0.1 * jax.random.normal(k_b, (dim_out,), dtype=jnp.float32)
    running_mean = 0.1 * jax.random.normal(k_m, (dim_out,), dtype=jnp.float32)
    running_var = jax.random.uniform(k_v, (dim_out,), minval=0.5, maxval=1.5, dtype=jnp.float32)
    x = jax.random.normal(k_x, (N, dim_in, T, H, W), dtype=jnp.float32)

    stem = jax.jit(functools.partial(resnet_basic_stem,
                                     stride=stride, padding=padding, eps=1e-5))
    out = stem(x, weight, gamma, beta, running_mean, running_var)
    out = jax.block_until_ready(out)

    ref = _reference(x, weight, gamma, beta, running_mean, running_var,
                     stride=stride, padding=padding, eps=1e-5)
    assert out.shape == ref.shape, (out.shape, ref.shape)
    assert jnp.allclose(out, ref, atol=1e-3, rtol=1e-3), float(jnp.max(jnp.abs(out - ref)))
    print("KERNEL_OK")
</pallas_src>

<mosaic_0001>
module attributes {stable_mosaic.version = 11 : i64} {
  func.func @_stem_kernel(%arg0: i32, %arg1: memref<1x11x36x11xf32, #tpu.memory_space<vmem>>, %arg2: memref<8x441xf32, #tpu.memory_space<vmem>>, %arg3: memref<8x1xf32, #tpu.memory_space<vmem>>, %arg4: memref<3x8x4xf32, #tpu.memory_space<vmem>>, %arg5: memref<1x4x8x4xf32, #tpu.memory_space<vmem>>) attributes {dimension_semantics = [#tpu.dimension_semantics<parallel>], iteration_bounds = array<i64: 8>, scalar_prefetch = 0 : i64, scratch_operands = 0 : i64, tpu.core_type = #tpu.core_type<tc>, window_params = [{transform_indices = @transform_0, window_bounds = array<i64: 1, 11, 36, 11>}, {pipeline_mode = #tpu.pipeline_mode<synchronous>, transform_indices = @transform_1, window_bounds = array<i64: 8, 441>}, {pipeline_mode = #tpu.pipeline_mode<synchronous>, transform_indices = @transform_2, window_bounds = array<i64: 8, 1>}, {pipeline_mode = #tpu.pipeline_mode<synchronous>, transform_indices = @transform_3, window_bounds = array<i64: 3, 8, 4>}, {transform_indices = @transform_4, window_bounds = array<i64: 1, 4, 8, 4>}]} {
    %c0 = arith.constant 0 : index
    %c0_0 = arith.constant 0 : index
    %c0_1 = arith.constant 0 : index
    %c0_2 = arith.constant 0 : index
    %0 = vector.load %arg1[%c0, %c0_0, %c0_1, %c0_2] : memref<1x11x36x11xf32, #tpu.memory_space<vmem>>, vector<1x11x36x11xf32>
    %1 = vector.shape_cast %0 : vector<1x11x36x11xf32> to vector<11x36x11xf32>
    %2 = vector.extract_strided_slice %1 {offsets = [0, 0, 0], sizes = [8, 18, 8], strides = [1, 1, 1]} : vector<11x36x11xf32> to vector<8x18x8xf32>
    %3 = vector.extract_strided_slice %1 {offsets = [0, 18, 0], sizes = [8, 18, 8], strides = [1, 1, 1]} : vector<11x36x11xf32> to vector<8x18x8xf32>
    %4 = vector.extract_strided_slice %1 {offsets = [0, 0, 1], sizes = [8, 18, 8], strides = [1, 1, 1]} : vector<11x36x11xf32> to vector<8x18x8xf32>
    %5 = vector.extract_strided_slice %1 {offsets = [0, 18, 1], sizes = [8, 18, 8], strides = [1, 1, 1]} : vector<11x36x11xf32> to vector<8x18x8xf32>
    %6 = vector.extract_strided_slice %1 {offsets = [0, 0, 2], sizes = [8, 18, 8], strides = [1, 1, 1]} : vector<11x36x11xf32> to vector<8x18x8xf32>
    %7 = vector.extract_strided_slice %1 {offsets = [0, 18, 2], sizes = [8, 18, 8], strides = [1, 1, 1]} : vector<11x36x11xf32> to vector<8x18x8xf32>
    %8 = vector.extract_strided_slice %1 {offsets = [0, 0, 3], sizes = [8, 9, 8], strides = [1, 1, 1]} : vector<11x36x11xf32> to vector<8x9x8xf32>
    %9 = vector.extract_strided_slice %1 {offsets = [0, 18, 3], sizes = [8, 9, 8], strides = [1, 1, 1]} : vector<11x36x11xf32> to vector<8x9x8xf32>
    %10 = vector.extract_strided_slice %1 {offsets = [1, 0, 0], sizes = [8, 18, 8], strides = [1, 1, 1]} : vector<11x36x11xf32> to vector<8x18x8xf32>
    %11 = vector.extract_strided_slice %1 {offsets = [1, 18, 0], sizes = [8, 18, 8], strides = [1, 1, 1]} : vector<11x36x11xf32> to vector<8x18x8xf32>
    %12 = vector.extract_strided_slice %1 {offsets = [1, 0, 1], sizes = [8, 18, 8], strides = [1, 1, 1]} : vector<11x36x11xf32> to vector<8x18x8xf32>
    %13 = vector.extract_strided_slice %1 {offsets = [1, 18, 1], sizes = [8, 18, 8], strides = [1, 1, 1]} : vector<11x36x11xf32> to vector<8x18x8xf32>
    %14 = vector.extract_strided_slice %1 {offsets = [1, 0, 2], sizes = [8, 18, 8], strides = [1, 1, 1]} : vector<11x36x11xf32> to vector<8x18x8xf32>
    %15 = vector.extract_strided_slice %1 {offsets = [1, 18, 2], sizes = [8, 18, 8], strides = [1, 1, 1]} : vector<11x36x11xf32> to vector<8x18x8xf32>
    %16 = vector.extract_strided_slice %1 {offsets = [1, 0, 3], sizes = [8, 9, 8], strides = [1, 1, 1]} : vector<11x36x11xf32> to vector<8x9x8xf32>
    %17 = vector.extract_strided_slice %1 {offsets = [1, 18, 3], sizes = [8, 9, 8], strides = [1, 1, 1]} : vector<11x36x11xf32> to vector<8x9x8xf32>
    %18 = vector.extract_strided_slice %1 {offsets = [2, 0, 0], sizes = [8, 18, 8], strides = [1, 1, 1]} : vector<11x36x11xf32> to vector<8x18x8xf32>
    %19 = vector.extract_strided_slice %1 {offsets = [2, 18, 0], sizes = [8, 18, 8], strides = [1, 1, 1]} : vector<11x36x11xf32> to vector<8x18x8xf32>
    %20 = vector.extract_strided_slice %1 {offsets = [2, 0, 1], sizes = [8, 18, 8], strides = [1, 1, 1]} : vector<11x36x11xf32> to vector<8x18x8xf32>
    %21 = vector.extract_strided_slice %1 {offsets = [2, 18, 1], sizes = [8, 18, 8], strides = [1, 1, 1]} : vector<11x36x11xf32> to vector<8x18x8xf32>
    %22 = vector.extract_strided_slice %1 {offsets = [2, 0, 2], sizes = [8, 18, 8], strides = [1, 1, 1]} : vector<11x36x11xf32> to vector<8x18x8xf32>
    %23 = vector.extract_strided_slice %1 {offsets = [2, 18, 2], sizes = [8, 18, 8], strides = [1, 1, 1]} : vector<11x36x11xf32> to vector<8x18x8xf32>
    %24 = vector.extract_strided_slice %1 {offsets = [2, 0, 3], sizes = [8, 9, 8], strides = [1, 1, 1]} : vector<11x36x11xf32> to vector<8x9x8xf32>
    %25 = vector.extract_strided_slice %1 {offsets = [2, 18, 3], sizes = [8, 9, 8], strides = [1, 1, 1]} : vector<11x36x11xf32> to vector<8x9x8xf32>
    %26 = vector.extract_strided_slice %1 {offsets = [3, 0, 0], sizes = [8, 18, 8], strides = [1, 1, 1]} : vector<11x36x11xf32> to vector<8x18x8xf32>
    %27 = vector.extract_strided_slice %1 {offsets = [3, 0, 1], sizes = [8, 18, 8], strides = [1, 1, 1]} : vector<11x36x11xf32> to vector<8x18x8xf32>
    %28 = vector.extract_strided_slice %1 {offsets = [3, 0, 2], sizes = [8, 18, 8], strides = [1, 1, 1]} : vector<11x36x11xf32> to vector<8x18x8xf32>
    %29 = vector.extract_strided_slice %1 {offsets = [3, 0, 3], sizes = [8, 9, 8], strides = [1, 1, 1]} : vector<11x36x11xf32> to vector<8x9x8xf32>
    %30 = tpu.concatenate %2, %3, %4, %5, %6, %7, %8, %9, %10, %11, %12, %13, %14, %15, %16, %17 in 1 : vector<8x18x8xf32>, vector<8x18x8xf32>, vector<8x18x8xf32>, vector<8x18x8xf32>, vector<8x18x8xf32>, vector<8x18x8xf32>, vector<8x9x8xf32>, vector<8x9x8xf32>, vector<8x18x8xf32>, vector<8x18x8xf32>, vector<8x18x8xf32>, vector<8x18x8xf32>, vector<8x18x8xf32>, vector<8x18x8xf32>, vector<8x9x8xf32>, vector<8x9x8xf32> -> vector<8x252x8xf32>
    %31 = tpu.concatenate %18, %19, %20, %21, %22, %23, %24, %25, %26, %27, %28, %29 in 1 : vector<8x18x8xf32>, vector<8x18x8xf32>, vector<8x18x8xf32>, vector<8x18x8xf32>, vector<8x18x8xf32>, vector<8x18x8xf32>, vector<8x9x8xf32>, vector<8x9x8xf32>, vector<8x18x8xf32>, vector<8x18x8xf32>, vector<8x18x8xf32>, vector<8x9x8xf32> -> vector<8x189x8xf32>
    %32 = tpu.concatenate %30, %31 in 1 : vector<8x252x8xf32>, vector<8x189x8xf32> -> vector<8x441x8xf32>
    %c0_3 = arith.constant 0 : index
    %c0_4 = arith.constant 0 : index
    %33 = vector.load %arg2[%c0_3, %c0_4] : memref<8x441xf32, #tpu.memory_space<vmem>>, vector<8x441xf32>
    %34 = vector.shape_cast %33 : vector<8x441xf32> to vector<1x8x441xf32>
    %35 = vector.shape_cast %34 : vector<1x8x441xf32> to vector<1x8x441xf32>
    %36 = vector.broadcast %35 : vector<1x8x441xf32> to vector<8x8x441xf32>
    %cst = arith.constant dense<0.000000e+00> : vector<8x8x8xf32>
    %37 = tpu.matmul %36, %32, %cst {dimension_numbers = #tpu.dot_dimension_numbers<[2], [1], [1], [2], [0, 0, 0, 1, 1, 2], [0], [0]>} : vector<8x8x441xf32>, vector<8x441x8xf32>, vector<8x8x8xf32> -> vector<8x8x8xf32>
    %c0_5 = arith.constant 0 : index
    %c0_6 = arith.constant 0 : index
    %38 = vector.load %arg3[%c0_5, %c0_6] : memref<8x1xf32, #tpu.memory_space<vmem>>, vector<8x1xf32>
    %39 = vector.shape_cast %38 : vector<8x1xf32> to vector<1x8x1xf32>
    %40 = vector.broadcast %39 : vector<1x8x1xf32> to vector<8x8x8xf32>
    %41 = arith.addf %37, %40 : vector<8x8x8xf32>
    %cst_7 = arith.constant 0.000000e+00 : f32
    %42 = vector.broadcast %cst_7 : f32 to vector<8x8x8xf32>
    %43 = arith.maximumf %41, %42 : vector<8x8x8xf32>
    %44 = vector.shape_cast %43 : vector<8x8x8xf32> to vector<4x2x8x8xf32>
    %45 = vector.extract_strided_slice %44 {offsets = [0, 0, 0, 0], sizes = [4, 1, 8, 8], strides = [1, 1, 1, 1]} : vector<4x2x8x8xf32> to vector<4x1x8x8xf32>
    %46 = vector.shape_cast %45 : vector<4x1x8x8xf32> to vector<4x8x8xf32>
    %47 = vector.extract_strided_slice %44 {offsets = [0, 1, 0, 0], sizes = [4, 1, 8, 8], strides = [1, 1, 1, 1]} : vector<4x2x8x8xf32> to vector<4x1x8x8xf32>
    %48 = vector.shape_cast %47 : vector<4x1x8x8xf32> to vector<4x8x8xf32>
    %cst_8 = arith.constant 0.000000e+00 : f32
    %49 = vector.broadcast %cst_8 : f32 to vector<1x8x8xf32>
    %50 = vector.extract_strided_slice %48 {offsets = [0, 0, 0], sizes = [3, 8, 8], strides = [1, 1, 1]} : vector<4x8x8xf32> to vector<3x8x8xf32>
    %51 = tpu.concatenate %49, %50 in 0 : vector<1x8x8xf32>, vector<3x8x8xf32> -> vector<4x8x8xf32>
    %52 = arith.maximumf %46, %48 : vector<4x8x8xf32>
    %53 = arith.maximumf %52, %51 : vector<4x8x8xf32>
    %c0_9 = arith.constant 0 : index
    %c0_10 = arith.constant 0 : index
    %c0_11 = arith.constant 0 : index
    %54 = vector.load %arg4[%c0_9, %c0_10, %c0_11] : memref<3x8x4xf32, #tpu.memory_space<vmem>>, vector<1x8x4xf32>
    %55 = vector.shape_cast %54 : vector<1x8x4xf32> to vector<8x4xf32>
    %56 = vector.shape_cast %55 : vector<8x4xf32> to vector<1x8x4xf32>
    %57 = vector.shape_cast %56 : vector<1x8x4xf32> to vector<1x8x4xf32>
    %58 = vector.broadcast %57 : vector<1x8x4xf32> to vector<4x8x4xf32>
    %cst_12 = arith.constant dense<0.000000e+00> : vector<4x8x4xf32>
    %59 = tpu.matmul %53, %58, %cst_12 {dimension_numbers = #tpu.dot_dimension_numbers<[2], [1], [1], [2], [0, 0, 0, 1, 1, 2], [0], [0]>} : vector<4x8x8xf32>, vector<4x8x4xf32>, vector<4x8x4xf32> -> vector<4x8x4xf32>
    %c1 = arith.constant 1 : index
    %c0_13 = arith.constant 0 : index
    %c0_14 = arith.constant 0 : index
    %60 = vector.load %arg4[%c1, %c0_13, %c0_14] : memref<3x8x4xf32, #tpu.memory_space<vmem>>, vector<1x8x4xf32>
    %61 = vector.shape_cast %60 : vector<1x8x4xf32> to vector<8x4xf32>
    %62 = vector.shape_cast %61 : vector<8x4xf32> to vector<1x8x4xf32>
    %63 = vector.shape_cast %62 : vector<1x8x4xf32> to vector<1x8x4xf32>
    %64 = vector.broadcast %63 : vector<1x8x4xf32> to vector<4x8x4xf32>
    %cst_15 = arith.constant dense<0.000000e+00> : vector<4x8x4xf32>
    %65 = tpu.matmul %53, %64, %cst_15 {dimension_numbers = #tpu.dot_dimension_numbers<[2], [1], [1], [2], [0, 0, 0, 1, 1, 2], [0], [0]>} : vector<4x8x8xf32>, vector<4x8x4xf32>, vector<4x8x4xf32> -> vector<4x8x4xf32>
    %66 = arith.maximumf %59, %65 : vector<4x8x4xf32>
    %c2 = arith.constant 2 : index
    %c0_16 = arith.constant 0 : index
    %c0_17 = arith.constant 0 : index
    %67 = vector.load %arg4[%c2, %c0_16, %c0_17] : memref<3x8x4xf32, #tpu.memory_space<vmem>>, vector<1x8x4xf32>
    %68 = vector.shape_cast %67 : vector<1x8x4xf32> to vector<8x4xf32>
    %69 = vector.shape_cast %68 : vector<8x4xf32> to vector<1x8x4xf32>
    %70 = vector.shape_cast %69 : vector<1x8x4xf32> to vector<1x8x4xf32>
    %71 = vector.broadcast %70 : vector<1x8x4xf32> to vector<4x8x4xf32>
    %cst_18 = arith.constant dense<0.000000e+00> : vector<4x8x4xf32>
    %72 = tpu.matmul %53, %71, %cst_18 {dimension_numbers = #tpu.dot_dimension_numbers<[2], [1], [1], [2], [0, 0, 0, 1, 1, 2], [0], [0]>} : vector<4x8x8xf32>, vector<4x8x4xf32>, vector<4x8x4xf32> -> vector<4x8x4xf32>
    %73 = arith.maximumf %66, %72 : vector<4x8x4xf32>
    %c0_19 = arith.constant 0 : index
    %c0_20 = arith.constant 0 : index
    %c0_21 = arith.constant 0 : index
    %c0_22 = arith.constant 0 : index
    %74 = vector.load %arg5[%c0_19, %c0_20, %c0_21, %c0_22] : memref<1x4x8x4xf32, #tpu.memory_space<vmem>>, vector<1x4x8x4xf32>
    %75 = vector.shape_cast %74 : vector<1x4x8x4xf32> to vector<4x8x4xf32>
    %76 = vector.shape_cast %73 : vector<4x8x4xf32> to vector<1x4x8x4xf32>
    tpu.vector_store %arg5[%c0_19, %c0_20, %c0_21, %c0_22], %76 {strides = array<i32>} : memref<1x4x8x4xf32, #tpu.memory_space<vmem>>, vector<1x4x8x4xf32>,
    return
  }
  func.func @transform_0(%arg0: i32) -> (i32, i32, i32, i32) {
    %c0_i32 = arith.constant 0 : i32
    %c0_i32_0 = arith.constant 0 : i32
    %c0_i32_1 = arith.constant 0 : i32
    %c0_i32_2 = arith.constant 0 : i32
    return %arg0, %c0_i32, %c0_i32_0, %c0_i32_1 : i32, i32, i32, i32
  }
  func.func @transform_1(%arg0: i32) -> (i32, i32) {
    %c0_i32 = arith.constant 0 : i32
    %c0_i32_0 = arith.constant 0 : i32
    %c0_i32_1 = arith.constant 0 : i32
    return %c0_i32, %c0_i32_0 : i32, i32
  }
  func.func @transform_2(%arg0: i32) -> (i32, i32) {
    %c0_i32 = arith.constant 0 : i32
    %c0_i32_0 = arith.constant 0 : i32
    %c0_i32_1 = arith.constant 0 : i32
    return %c0_i32, %c0_i32_0 : i32, i32
  }
  func.func @transform_3(%arg0: i32) -> (i32, i32, i32) {
    %c0_i32 = arith.constant 0 : i32
    %c0_i32_0 = arith.constant 0 : i32
    %c0_i32_1 = arith.constant 0 : i32
    %c0_i32_2 = arith.constant 0 : i32
    return %c0_i32, %c0_i32_0, %c0_i32_1 : i32, i32, i32
  }
  func.func @transform_4(%arg0: i32) -> (i32, i32, i32, i32) {
    %c0_i32 = arith.constant 0 : i32
    %c0_i32_0 = arith.constant 0 : i32
    %c0_i32_1 = arith.constant 0 : i32
    %c0_i32_2 = arith.constant 0 : i32
    return %arg0, %c0_i32, %c0_i32_0, %c0_i32_1 : i32, i32, i32, i32
  }
}

</mosaic_0001>

<llo_original>
// kernel: resnet_basic_stem.1
$region0: #{resnet_basic_stem.1}
  #allocation0 [shape = 'u32[]', space=smem, size = 0x4, offset = 0x4, fixed_abs, tag = 'smem constant byte address 0x4 - core index']
  #allocation1 [shape = 'u32[144,128]{1,0:T(1,128)}', space=vmem, size = 0x12000, scoped, tag = 'internal scratch']
  %s0 = inlined_call_operand.vmem [shape: f32[8,11,36,11], index: 0, kind: input, shape index: {}]
  %s1 = inlined_call_operand.vmem [shape: f32[8,441], index: 1, kind: input, shape index: {}]
  %s2 = inlined_call_operand.vmem [shape: f32[8,1], index: 2, kind: input, shape index: {}]
  %s3 = inlined_call_operand.vmem [shape: f32[3,8,4], index: 3, kind: input, shape index: {}]
  %s4 = inlined_call_operand.vmem [shape: f32[8,4,8,4], index: 4, kind: output, shape index: {}]
  %s5 = sld [smem:[#allocation0]]
  $region49: #{resnet_basic_stem.1} parent=0
    _
  %s7 = ssub.s32 1, %s5
  %s8 = scalar_select 0, %s7, %s5
  loop: start=0, step=1, limit=10
  $region2: #{resnet_basic_stem.1} parent=0 // loop_pre_header
    _
  $region3: #{resnet_basic_stem.1} parent=0 // loop_header
    %s10 = sphi 0, %s14
    %p11 = scmp.ge.s32.totalorder %s10, 10
    %s20 = sphi 0, %s22
    %s23 = sphi 0, %s20
    %s24 = sphi 0, %s23
    %s40 = sphi 0, %s24
    %s44 = sphi 0, %s44
    %s46 = sphi 0, %s44
    %s47 = sphi 0, %s46
    %s61 = sphi 0, %s47
    %s65 = sphi 0, %s65
    %s67 = sphi 0, %s65
    %s68 = sphi 0, %s67
    %s82 = sphi 0, %s68
    %s86 = sphi 0, %s86
    %s88 = sphi 0, %s86
    %s89 = sphi 0, %s88
    %s103 = sphi 0, %s89
    %s109 = sphi 0, %s111
    %s112 = sphi 0, %s109
    %s113 = sphi 0, %s112
    %s129 = sphi 0, %s113
  $region4: #{resnet_basic_stem.1} parent=0 // loop_header_branch
    %13 = sbr.rel (%p11) target = $region8
  $region5: #{resnet_basic_stem.1} parent=0 // loop_body
    %s15 = ssub.s32 %s10, 1
    %s16 = ssub.s32 %s10, 2
    %s17 = sadd.s32 %s10, 1
    %s18 = ssub.s32 %s10, %s17
    %p19 = scmp.eq.s32.totalorder %s18, 0
    %s21 = sadd.s32 %s20, 1
    %s22 = scalar_select %p19, %s20, %s21
    %p25 = pneg %p19
    %p26 = scmp.eq.s32.totalorder %s10, 7
    %p27 = por %p25, %p26
    %p28 = scmp.ne.s32.totalorder %s20, %s23
    %p29 = scmp.eq.s32.totalorder %s10, 0
    %p30 = por %p28, %p29
    %p31 = scmp.ne.s32.totalorder %s20, %s23
    %p32 = scmp.eq.s32.totalorder %s15, 7
    %p33 = por %p31, %p32
    %p34 = scmp.ne.s32.totalorder %s23, %s24
    %p35 = scmp.eq.s32.totalorder %s15, 0
    %p36 = por %p34, %p35
    %p37 = scmp.ne.s32.totalorder %s23, %s24
    %p38 = scmp.eq.s32.totalorder %s16, 7
    %p39 = por %p37, %p38
    %p41 = scmp.ne.s32.totalorder %s24, %s40
    %p42 = scmp.eq.s32.totalorder %s16, 0
    %p43 = por %p41, %p42
    %s45 = sadd.s32 %s44, 1
    %p48 = scmp.eq.s32.totalorder %s10, 7
    %p49 = scmp.ne.s32.totalorder %s44, %s46
    %p50 = scmp.eq.s32.totalorder %s10, 0
    %p51 = por %p49, %p50
    %p52 = scmp.ne.s32.totalorder %s44, %s46
    %p53 = scmp.eq.s32.totalorder %s15, 7
    %p54 = por %p52, %p53
    %p55 = scmp.ne.s32.totalorder %s46, %s47
    %p56 = scmp.eq.s32.totalorder %s15, 0
    %p57 = por %p55, %p56
    %p58 = scmp.ne.s32.totalorder %s46, %s47
    %p59 = scmp.eq.s32.totalorder %s16, 7
    %p60 = por %p58, %p59
    %p62 = scmp.ne.s32.totalorder %s47, %s61
    %p63 = scmp.eq.s32.totalorder %s16, 0
    %p64 = por %p62, %p63
    %s66 = sadd.s32 %s65, 1
    %p69 = scmp.eq.s32.totalorder %s10, 7
    %p70 = scmp.ne.s32.totalorder %s65, %s67
    %p71 = scmp.eq.s32.totalorder %s10, 0
    %p72 = por %p70, %p71
    %p73 = scmp.ne.s32.totalorder %s65, %s67
    %p74 = scmp.eq.s32.totalorder %s15, 7
    %p75 = por %p73, %p74
    %p76 = scmp.ne.s32.totalorder %s67, %s68
    %p77 = scmp.eq.s32.totalorder %s15, 0
    %p78 = por %p76, %p77
    %p79 = scmp.ne.s32.totalorder %s67, %s68
    %p80 = scmp.eq.s32.totalorder %s16, 7
    %p81 = por %p79, %p80
    %p83 = scmp.ne.s32.totalorder %s68, %s82
    %p84 = scmp.eq.s32.totalorder %s16, 0
    %p85 = por %p83, %p84
    %s87 = sadd.s32 %s86, 1
    %p90 = scmp.eq.s32.totalorder %s10, 7
    %p91 = scmp.ne.s32.totalorder %s86, %s88
    %p92 = scmp.eq.s32.totalorder %s10, 0
    %p93 = por %p91, %p92
    %p94 = scmp.ne.s32.totalorder %s86, %s88
    %p95 = scmp.eq.s32.totalorder %s15, 7
    %p96 = por %p94, %p95
    %p97 = scmp.ne.s32.totalorder %s88, %s89
    %p98 = scmp.eq.s32.totalorder %s15, 0
    %p99 = por %p97, %p98
    %p100 = scmp.ne.s32.totalorder %s88, %s89
    %p101 = scmp.eq.s32.totalorder %s16, 7
    %p102 = por %p100, %p101
    %p104 = scmp.ne.s32.totalorder %s89, %s103
    %p105 = scmp.eq.s32.totalorder %s16, 0
    %p106 = por %p104, %p105
    %s107 = ssub.s32 %s10, %s17
    %p108 = scmp.eq.s32.totalorder %s107, 0
    %s110 = sadd.s32 %s109, 1
    %s111 = scalar_select %p108, %s109, %s110
    %p114 = pneg %p108
    %p115 = scmp.eq.s32.totalorder %s10, 7
    %p116 = por %p114, %p115
    %p117 = scmp.ne.s32.totalorder %s109, %s112
    %p118 = scmp.eq.s32.totalorder %s10, 0
    %p119 = por %p117, %p118
    %p120 = scmp.ne.s32.totalorder %s109, %s112
    %p121 = scmp.eq.s32.totalorder %s15, 7
    %p122 = por %p120, %p121
    %p123 = scmp.ne.s32.totalorder %s112, %s113
    %p124 = scmp.eq.s32.totalorder %s15, 0
    %p125 = por %p123, %p124
    %p126 = scmp.ne.s32.totalorder %s112, %s113
    %p127 = scmp.eq.s32.totalorder %s16, 7
    %p128 = por %p126, %p127
    %p130 = scmp.ne.s32.totalorder %s113, %s129
    %p131 = scmp.eq.s32.totalorder %s16, 0
    %p132 = por %p130, %p131
    %p133 = scmp.le.s32.totalorder 1, %s10
    %p134 = scmp.lt.s32.totalorder %s10, 9
    %p135 = pnand %p133, %p134
    %p136 = pneg %p135
    // Predicated region
    $region9: #{resnet_basic_stem.1} parent=5 // pred_check
      _
    $region10: #{resnet_basic_stem.1} parent=5 // pred_check_branch
      %138 = sbr.rel (%p135) target = $region12
    $region11: #{resnet_basic_stem.1} parent=5 // pred_region
      %s139 = ssub.s32 %s10, 1
      // Predicated region
      $region13: #{resnet_basic_stem.1} parent=11 // pred_check
        %p140 = pneg %p57
      $region14: #{resnet_basic_stem.1} parent=11 // pred_check_branch
        %142 = sbr.rel (%p140) target = $region16
      $region15: #{resnet_basic_stem.1} parent=11 // pred_region
        _
      $region16: #{resnet_basic_stem.1} parent=11 // pred_fallthru
        _
      // Predicated region
      $region17: #{resnet_basic_stem.1} parent=11 // pred_check
        %p143 = pneg %p78
      $region18: #{resnet_basic_stem.1} parent=11 // pred_check_branch
        %145 = sbr.rel (%p143) target = $region20
      $region19: #{resnet_basic_stem.1} parent=11 // pred_region
        _
      $region20: #{resnet_basic_stem.1} parent=11 // pred_fallthru
        _
      // Predicated region
      $region21: #{resnet_basic_stem.1} parent=11 // pred_check
        %p146 = pneg %p99
      $region22: #{resnet_basic_stem.1} parent=11 // pred_check_branch
        %148 = sbr.rel (%p146) target = $region24
      $region23: #{resnet_basic_stem.1} parent=11 // pred_region
        _
      $region24: #{resnet_basic_stem.1} parent=11 // pred_fallthru
        _
    $region12: #{resnet_basic_stem.1} parent=5 // pred_fallthru
      _
    %p149 = scmp.lt.s32.totalorder %s10, 8
    // Predicated region
    $region25: #{resnet_basic_stem.1} parent=5 // pred_check
      %p150 = pneg %p149
    $region26: #{resnet_basic_stem.1} parent=5 // pred_check_branch
      %152 = sbr.rel (%p150) target = $region28
    $region27: #{resnet_basic_stem.1} parent=5 // pred_region
      // Predicated region
      $region29: #{resnet_basic_stem.1} parent=27 // pred_check
        %p153 = pneg %p30
      $region30: #{resnet_basic_stem.1} parent=27 // pred_check_branch
        %155 = sbr.rel (%p153) target = $region32
      $region31: #{resnet_basic_stem.1} parent=27 // pred_region
        %p156 = scmp.lt.s32.totalorder %s10, 7
        %s157 = scalar_select %p156, %s10, 7
        %s158 = smul.addr %s157, 55
        %s159 = smul.addr %s158, 8
        %s160 = scalar_lea.vmem %s0, %s159
      $region32: #{resnet_basic_stem.1} parent=27 // pred_fallthru
        _
    $region28: #{resnet_basic_stem.1} parent=5 // pred_fallthru
      _
    %p161 = scmp.le.s32.totalorder 1, %s10
    %p162 = scmp.lt.s32.totalorder %s10, 9
    %p163 = pnand %p161, %p162
    %p164 = pneg %p163
    // Predicated region
    $region33: #{resnet_basic_stem.1} parent=5 // pred_check
      _
    $region34: #{resnet_basic_stem.1} parent=5 // pred_check_branch
      %166 = sbr.rel (%p163) target = $region36
    $region35: #{resnet_basic_stem.1} parent=5 // pred_region
      %s167 = ssub.s32 %s10, 1
      %p168 = scmp.lt.s32.totalorder %s15, 7
      %s169 = scalar_select %p168, %s15, 7
      %s170 = smul.addr %s169, 55
      %s171 = smul.addr %s170, 8
      %s172 = scalar_lea.vmem %s0, %s171
      %p173 = pneg %p36
      %p174 = pneg %p33
      %p175 = pneg %p57
      %p176 = pneg %p54
      %p177 = pneg %p78
      %p178 = pneg %p75
      %p179 = pneg %p99
      %p180 = pneg %p96
      %p181 = pneg %p125
      %p182 = pneg %p122
      %p183 = scmp.lt.s32.totalorder %s15, 7
      %s184 = scalar_select %p183, %s15, 7
      %s185 = smul.addr %s184, 4
      %s186 = smul.addr %s185, 8
      %s187 = scalar_lea.vmem %s4, %s186
      %p188 = scmp.lt.s32.totalorder %s15, 7
      %s189 = scalar_select %p188, %s15, 7
      %s190 = smul.addr %s189, 55
      %s191 = smul.addr %s190, 8
      %s192 = scalar_lea.vmem %s0, %s191
      %p193 = scmp.lt.s32.totalorder %s15, 7
      %s194 = scalar_select %p193, %s15, 7
      %s195 = smul.addr %s194, 4
      %s196 = smul.addr %s195, 8
      %s197 = scalar_lea.vmem %s4, %s196
      %v198 = vld [vmem:[%s192] sm:$0xff]
      %v199 = vld [vmem:[%s192 + $0x8] sm:$0xff]
      %v200 = vld [vmem:[%s192 + $0x10] sm:$0xff]
      %v201 = vld [vmem:[%s192 + $0x18] sm:$0xff]
      %v202 = vld [vmem:[%s192 + $0x20] sm:$0xf]
      %v203 = vld [vmem:[%s192 + $0x28] sm:$0xff]
      %v204 = vld [vmem:[%s192 + $0x30] sm:$0xff]
      %v205 = vld [vmem:[%s192 + $0x38] sm:$0xff]
      %v206 = vld [vmem:[%s192 + $0x40] sm:$0xff]
      %v207 = vld [vmem:[%s192 + $0x48] sm:$0xf]
      %v208 = vld [vmem:[%s192 + $0x50] sm:$0xff]
      %v209 = vld [vmem:[%s192 + $0x58] sm:$0xff]
      %v210 = vld [vmem:[%s192 + $0x60] sm:$0xff]
      %v211 = vld [vmem:[%s192 + $0x68] sm:$0xff]
      %v212 = vld [vmem:[%s192 + $0x70] sm:$0xf]
      %v213 = vld [vmem:[%s192 + $0x78] sm:$0xff]
      %v214 = vld [vmem:[%s192 + $0x80] sm:$0xff]
      %v215 = vld [vmem:[%s192 + $0x88] sm:$0xff]
      %v216 = vld [vmem:[%s192 + $0x90] sm:$0xff]
      %v217 = vld [vmem:[%s192 + $0x98] sm:$0xf]
      %v218 = vld [vmem:[%s192 + $0xa0] sm:$0xff]
      %v219 = vld [vmem:[%s192 + $0xa8] sm:$0xff]
      %v220 = vld [vmem:[%s192 + $0xb0] sm:$0xff]
      %v221 = vld [vmem:[%s192 + $0xb8] sm:$0xff]
      %v222 = vld [vmem:[%s192 + $0xc0] sm:$0xf]
      %v223 = vld [vmem:[%s192 + $0xc8] sm:$0xff]
      %v224 = vld [vmem:[%s192 + $0xd0] sm:$0xff]
      %v225 = vld [vmem:[%s192 + $0xd8] sm:$0xff]
      %v226 = vld [vmem:[%s192 + $0xe0] sm:$0xff]
      %v227 = vld [vmem:[%s192 + $0xe8] sm:$0xf]
      %v228 = vld [vmem:[%s192 + $0xf0] sm:$0xff]
      %v229 = vld [vmem:[%s192 + $0xf8] sm:$0xff]
      %v230 = vld [vmem:[%s192 + $0x100] sm:$0xff]
      %v231 = vld [vmem:[%s192 + $0x108] sm:$0xff]
      %v232 = vld [vmem:[%s192 + $0x110] sm:$0xf]
      %v233 = vld [vmem:[%s192 + $0x118] sm:$0xff]
      %v234 = vld [vmem:[%s192 + $0x120] sm:$0xff]
      %v235 = vld [vmem:[%s192 + $0x128] sm:$0xff]
      %v236 = vld [vmem:[%s192 + $0x130] sm:$0xff]
      %v237 = vld [vmem:[%s192 + $0x138] sm:$0xf]
      %v238 = vld [vmem:[%s192 + $0x140] sm:$0xff]
      %v239 = vld [vmem:[%s192 + $0x148] sm:$0xff]
      %v240 = vld [vmem:[%s192 + $0x150] sm:$0xff]
      %v241 = vld [vmem:[%s192 + $0x158] sm:$0xff]
      %v242 = vld [vmem:[%s192 + $0x160] sm:$0xf]
      %v243 = vld [vmem:[%s192 + $0x168] sm:$0xff]
      %v244 = vld [vmem:[%s192 + $0x170] sm:$0xff]
      %v245 = vld [vmem:[%s192 + $0x178] sm:$0xff]
      %v246 = vld [vmem:[%s192 + $0x180] sm:$0xff]
      %v247 = vld [vmem:[%s192 + $0x188] sm:$0xf]
      %v248 = vld [vmem:[%s192 + $0x190] sm:$0xff]
      %v249 = vld [vmem:[%s192 + $0x198] sm:$0xff]
      %v250 = vld [vmem:[%s192 + $0x1a0] sm:$0xff]
      %vm275 = vcmask 1043456
      %v276 = vrot.slane %v198, 4
      %v277 = vrot.slane %v199, 4
      %v278 = vsel %vm275, %v276, %v277
      %v279 = vrot.slane %v200, 4
      %v280 = vsel %vm275, %v277, %v279
      %v281 = vrot.slane %v203, 4
      %v282 = vrot.slane %v204, 4
      %v283 = vsel %vm275, %v281, %v282
      %v284 = vrot.slane %v205, 4
      %v285 = vsel %vm275, %v282, %v284
      %v286 = vrot.slane %v208, 4
      %v287 = vrot.slane %v209, 4
      %v288 = vsel %vm275, %v286, %v287
      %v289 = vrot.slane %v210, 4
      %v290 = vsel %vm275, %v287, %v289
      %v291 = vrot.slane %v213, 4
      %v292 = vrot.slane %v214, 4
      %v293 = vsel %vm275, %v291, %v292
      %v294 = vrot.slane %v215, 4
      %v295 = vsel %vm275, %v292, %v294
      %v296 = vrot.slane %v218, 4
      %v297 = vrot.slane %v219, 4
      %v298 = vsel %vm275, %v296, %v297
      %v299 = vrot.slane %v220, 4
      %v300 = vsel %vm275, %v297, %v299
      %v301 = vrot.slane %v223, 4
      %v302 = vrot.slane %v224, 4
      %v303 = vsel %vm275, %v301, %v302
      %v304 = vrot.slane %v225, 4
      %v305 = vsel %vm275, %v302, %v304
      %v306 = vrot.slane %v228, 4
      %v307 = vrot.slane %v229, 4
      %v308 = vsel %vm275, %v306, %v307
      %v309 = vrot.slane %v230, 4
      %v310 = vsel %vm275, %v307, %v309
      %v311 = vrot.slane %v233, 4
      %v312 = vrot.slane %v234, 4
      %v313 = vsel %vm275, %v311, %v312
      %v314 = vrot.slane %v235, 4
      %v315 = vsel %vm275, %v312, %v314
      %316 = vrot.lane.b32.xlu0 %v276, 127
      %v317 = vpop.permute.xlu0 %316
      %318 = vrot.lane.b32.xlu0 %v278, 127
      %v319 = vpop.permute.xlu0 %318
      %320 = vrot.lane.b32.xlu0 %v280, 127
      %v321 = vpop.permute.xlu0 %320
      %322 = vrot.lane.b32.xlu0 %v281, 127
      %v323 = vpop.permute.xlu0 %322
      %324 = vrot.lane.b32.xlu0 %v283, 127
      %v325 = vpop.permute.xlu0 %324
      %326 = vrot.lane.b32.xlu0 %v285, 127
      %v327 = vpop.permute.xlu0 %326
      %328 = vrot.lane.b32.xlu0 %v286, 127
      %v329 = vpop.permute.xlu0 %328
      %330 = vrot.lane.b32.xlu0 %v288, 127
      %v331 = vpop.permute.xlu0 %330
      %332 = vrot.lane.b32.xlu0 %v290, 127
      %v333 = vpop.permute.xlu0 %332
      %334 = vrot.lane.b32.xlu0 %v291, 127
      %v335 = vpop.permute.xlu0 %334
      %336 = vrot.lane.b32.xlu0 %v293, 127
      %v337 = vpop.permute.xlu0 %336
      %338 = vrot.lane.b32.xlu0 %v295, 127
      %v339 = vpop.permute.xlu0 %338
      %340 = vrot.lane.b32.xlu0 %v296, 127
      %v341 = vpop.permute.xlu0 %340
      %342 = vrot.lane.b32.xlu0 %v298, 127
      %v343 = vpop.permute.xlu0 %342
      %344 = vrot.lane.b32.xlu0 %v300, 127
      %v345 = vpop.permute.xlu0 %344
      %346 = vrot.lane.b32.xlu0 %v301, 127
      %v347 = vpop.permute.xlu0 %346
      %348 = vrot.lane.b32.xlu0 %v303, 127
      %v349 = vpop.permute.xlu0 %348
      %350 = vrot.lane.b32.xlu0 %v305, 127
      %v351 = vpop.permute.xlu0 %350
      %352 = vrot.lane.b32.xlu0 %v306, 127
      %v353 = vpop.permute.xlu0 %352
      %354 = vrot.lane.b32.xlu0 %v308, 127
      %v355 = vpop.permute.xlu0 %354
      %356 = vrot.lane.b32.xlu0 %v310, 127
      %v357 = vpop.permute.xlu0 %356
      %358 = vrot.lane.b32.xlu0 %v311, 127
      %v359 = vpop.permute.xlu0 %358
      %360 = vrot.lane.b32.xlu0 %v313, 127
      %v361 = vpop.permute.xlu0 %360
      %362 = vrot.lane.b32.xlu0 %v315, 127
      %v363 = vpop.permute.xlu0 %362
      %v404 = vrot.slane %v201, 4
      %v405 = vsel %vm275, %v279, %v404
      %v406 = vrot.slane %v202, 4
      %v407 = vsel %vm275, %v404, %v406
      %v408 = vrot.slane %v206, 4
      %v409 = vsel %vm275, %v284, %v408
      %v410 = vrot.slane %v207, 4
      %v411 = vsel %vm275, %v408, %v410
      %v412 = vrot.slane %v211, 4
      %v413 = vsel %vm275, %v289, %v412
      %v414 = vrot.slane %v212, 4
      %v415 = vsel %vm275, %v412, %v414
      %v416 = vrot.slane %v216, 4
      %v417 = vsel %vm275, %v294, %v416
      %v418 = vrot.slane %v217, 4
      %v419 = vsel %vm275, %v416, %v418
      %v420 = vrot.slane %v221, 4
      %v421 = vsel %vm275, %v299, %v420
      %v422 = vrot.slane %v222, 4
      %v423 = vsel %vm275, %v420, %v422
      %v424 = vrot.slane %v226, 4
      %v425 = vsel %vm275, %v304, %v424
      %v426 = vrot.slane %v227, 4
      %v427 = vsel %vm275, %v424, %v426
      %v428 = vrot.slane %v231, 4
      %v429 = vsel %vm275, %v309, %v428
      %v430 = vrot.slane %v232, 4
      %v431 = vsel %vm275, %v428, %v430
      %v432 = vrot.slane %v236, 4
      %v433 = vsel %vm275, %v314, %v432
      %v434 = vrot.slane %v237, 4
      %v435 = vsel %vm275, %v432, %v434
      %436 = vrot.lane.b32.xlu0 %v279, 127
      %v437 = vpop.permute.xlu0 %436
      %438 = vrot.lane.b32.xlu0 %v405, 127
      %v439 = vpop.permute.xlu0 %438
      %440 = vrot.lane.b32.xlu0 %v407, 127
      %v441 = vpop.permute.xlu0 %440
      %442 = vrot.lane.b32.xlu0 %v284, 127
      %v443 = vpop.permute.xlu0 %442
      %444 = vrot.lane.b32.xlu0 %v409, 127
      %v445 = vpop.permute.xlu0 %444
      %446 = vrot.lane.b32.xlu0 %v411, 127
      %v447 = vpop.permute.xlu0 %446
      %448 = vrot.lane.b32.xlu0 %v289, 127
      %v449 = vpop.permute.xlu0 %448
      %450 = vrot.lane.b32.xlu0 %v413, 127
      %v451 = vpop.permute.xlu0 %450
      %452 = vrot.lane.b32.xlu0 %v415, 127
      %v453 = vpop.permute.xlu0 %452
      %454 = vrot.lane.b32.xlu0 %v294, 127
      %v455 = vpop.permute.xlu0 %454
      %456 = vrot.lane.b32.xlu0 %v417, 127
      %v457 = vpop.permute.xlu0 %456
      %458 = vrot.lane.b32.xlu0 %v419, 127
      %v459 = vpop.permute.xlu0 %458
      %460 = vrot.lane.b32.xlu0 %v299, 127
      %v461 = vpop.permute.xlu0 %460
      %462 = vrot.lane.b32.xlu0 %v421, 127
      %v463 = vpop.permute.xlu0 %462
      %464 = vrot.lane.b32.xlu0 %v423, 127
      %v465 = vpop.permute.xlu0 %464
      %466 = vrot.lane.b32.xlu0 %v304, 127
      %v467 = vpop.permute.xlu0 %466
      %468 = vrot.lane.b32.xlu0 %v425, 127
      %v469 = vpop.permute.xlu0 %468
      %470 = vrot.lane.b32.xlu0 %v427, 127
      %v471 = vpop.permute.xlu0 %470
      %472 = vrot.lane.b32.xlu0 %v309, 127
      %v473 = vpop.permute.xlu0 %472
      %474 = vrot.lane.b32.xlu0 %v429, 127
      %v475 = vpop.permute.xlu0 %474
      %476 = vrot.lane.b32.xlu0 %v431, 127
      %v477 = vpop.permute.xlu0 %476
      %478 = vrot.lane.b32.xlu0 %v314, 127
      %v479 = vpop.permute.xlu0 %478
      %480 = vrot.lane.b32.xlu0 %v433, 127
      %v481 = vpop.permute.xlu0 %480
      %482 = vrot.lane.b32.xlu0 %v435, 127
      %v483 = vpop.permute.xlu0 %482
      %508 = vrot.lane.b32.xlu0 %v198, 126
      %v509 = vpop.permute.xlu0 %508
      %510 = vrot.lane.b32.xlu0 %v199, 126
      %v511 = vpop.permute.xlu0 %510
      %512 = vrot.lane.b32.xlu0 %v200, 126
      %v513 = vpop.permute.xlu0 %512
      %514 = vrot.lane.b32.xlu0 %v203, 126
      %v515 = vpop.permute.xlu0 %514
      %516 = vrot.lane.b32.xlu0 %v204, 126
      %v517 = vpop.permute.xlu0 %516
      %518 = vrot.lane.b32.xlu0 %v205, 126
      %v519 = vpop.permute.xlu0 %518
      %520 = vrot.lane.b32.xlu0 %v208, 126
      %v521 = vpop.permute.xlu0 %520
      %522 = vrot.lane.b32.xlu0 %v209, 126
      %v523 = vpop.permute.xlu0 %522
      %524 = vrot.lane.b32.xlu0 %v210, 126
      %v525 = vpop.permute.xlu0 %524
      %526 = vrot.lane.b32.xlu0 %v213, 126
      %v527 = vpop.permute.xlu0 %526
      %528 = vrot.lane.b32.xlu0 %v214, 126
      %v529 = vpop.permute.xlu0 %528
      %530 = vrot.lane.b32.xlu0 %v215, 126
      %v531 = vpop.permute.xlu0 %530
      %532 = vrot.lane.b32.xlu0 %v218, 126
      %v533 = vpop.permute.xlu0 %532
      %534 = vrot.lane.b32.xlu0 %v219, 126
      %v535 = vpop.permute.xlu0 %534
      %536 = vrot.lane.b32.xlu0 %v220, 126
      %v537 = vpop.permute.xlu0 %536
      %538 = vrot.lane.b32.xlu0 %v223, 126
      %v539 = vpop.permute.xlu0 %538
      %540 = vrot.lane.b32.xlu0 %v224, 126
      %v541 = vpop.permute.xlu0 %540
      %542 = vrot.lane.b32.xlu0 %v225, 126
      %v543 = vpop.permute.xlu0 %542
      %544 = vrot.lane.b32.xlu0 %v228, 126
      %v545 = vpop.permute.xlu0 %544
      %546 = vrot.lane.b32.xlu0 %v229, 126
      %v547 = vpop.permute.xlu0 %546
      %548 = vrot.lane.b32.xlu0 %v230, 126
      %v549 = vpop.permute.xlu0 %548
      %550 = vrot.lane.b32.xlu0 %v233, 126
      %v551 = vpop.permute.xlu0 %550
      %552 = vrot.lane.b32.xlu0 %v234, 126
      %v553 = vpop.permute.xlu0 %552
      %554 = vrot.lane.b32.xlu0 %v235, 126
      %v555 = vpop.permute.xlu0 %554
      %580 = vrot.lane.b32.xlu0 %v201, 126
      %v581 = vpop.permute.xlu0 %580
      %582 = vrot.lane.b32.xlu0 %v202, 126
      %v583 = vpop.permute.xlu0 %582
      %584 = vrot.lane.b32.xlu0 %v206, 126
      %v585 = vpop.permute.xlu0 %584
      %586 = vrot.lane.b32.xlu0 %v207, 126
      %v587 = vpop.permute.xlu0 %586
      %588 = vrot.lane.b32.xlu0 %v211, 126
      %v589 = vpop.permute.xlu0 %588
      %590 = vrot.lane.b32.xlu0 %v212, 126
      %v591 = vpop.permute.xlu0 %590
      %592 = vrot.lane.b32.xlu0 %v216, 126
      %v593 = vpop.permute.xlu0 %592
      %594 = vrot.lane.b32.xlu0 %v217, 126
      %v595 = vpop.permute.xlu0 %594
      %596 = vrot.lane.b32.xlu0 %v221, 126
      %v597 = vpop.permute.xlu0 %596
      %598 = vrot.lane.b32.xlu0 %v222, 126
      %v599 = vpop.permute.xlu0 %598
      %600 = vrot.lane.b32.xlu0 %v226, 126
      %v601 = vpop.permute.xlu0 %600
      %602 = vrot.lane.b32.xlu0 %v227, 126
      %v603 = vpop.permute.xlu0 %602
      %604 = vrot.lane.b32.xlu0 %v231, 126
      %v605 = vpop.permute.xlu0 %604
      %606 = vrot.lane.b32.xlu0 %v232, 126
      %v607 = vpop.permute.xlu0 %606
      %608 = vrot.lane.b32.xlu0 %v236, 126
      %v609 = vpop.permute.xlu0 %608
      %610 = vrot.lane.b32.xlu0 %v237, 126
      %v611 = vpop.permute.xlu0 %610
      %628 = vrot.lane.b32.xlu0 %v276, 125
      %v629 = vpop.permute.xlu0 %628
      %630 = vrot.lane.b32.xlu0 %v278, 125
      %v631 = vpop.permute.xlu0 %630
      %632 = vrot.lane.b32.xlu0 %v281, 125
      %v633 = vpop.permute.xlu0 %632
      %634 = vrot.lane.b32.xlu0 %v283, 125
      %v635 = vpop.permute.xlu0 %634
      %636 = vrot.lane.b32.xlu0 %v286, 125
      %v637 = vpop.permute.xlu0 %636
      %638 = vrot.lane.b32.xlu0 %v288, 125
      %v639 = vpop.permute.xlu0 %638
      %640 = vrot.lane.b32.xlu0 %v291, 125
      %v641 = vpop.permute.xlu0 %640
      %642 = vrot.lane.b32.xlu0 %v293, 125
      %v643 = vpop.permute.xlu0 %642
      %644 = vrot.lane.b32.xlu0 %v296, 125
      %v645 = vpop.permute.xlu0 %644
      %646 = vrot.lane.b32.xlu0 %v298, 125
      %v647 = vpop.permute.xlu0 %646
      %648 = vrot.lane.b32.xlu0 %v301, 125
      %v649 = vpop.permute.xlu0 %648
      %650 = vrot.lane.b32.xlu0 %v303, 125
      %v651 = vpop.permute.xlu0 %650
      %652 = vrot.lane.b32.xlu0 %v306, 125
      %v653 = vpop.permute.xlu0 %652
      %654 = vrot.lane.b32.xlu0 %v308, 125
      %v655 = vpop.permute.xlu0 %654
      %656 = vrot.lane.b32.xlu0 %v311, 125
      %v657 = vpop.permute.xlu0 %656
      %658 = vrot.lane.b32.xlu0 %v313, 125
      %v659 = vpop.permute.xlu0 %658
      %vm676 = vcmask 1042432
      %v677 = vrot.slane %v200, 5
      %v678 = vrot.slane %v201, 5
      %v679 = vsel %vm676, %v677, %v678
      %v680 = vrot.slane %v205, 5
      %v681 = vrot.slane %v206, 5
      %v682 = vsel %vm676, %v680, %v681
      %v683 = vrot.slane %v210, 5
      %v684 = vrot.slane %v211, 5
      %v685 = vsel %vm676, %v683, %v684
      %v686 = vrot.slane %v215, 5
      %v687 = vrot.slane %v216, 5
      %v688 = vsel %vm676, %v686, %v687
      %v689 = vrot.slane %v220, 5
      %v690 = vrot.slane %v221, 5
      %v691 = vsel %vm676, %v689, %v690
      %v692 = vrot.slane %v225, 5
      %v693 = vrot.slane %v226, 5
      %v694 = vsel %vm676, %v692, %v693
      %v695 = vrot.slane %v230, 5
      %v696 = vrot.slane %v231, 5
      %v697 = vsel %vm676, %v695, %v696
      %v698 = vrot.slane %v235, 5
      %v699 = vrot.slane %v236, 5
      %v700 = vsel %vm676, %v698, %v699
      %701 = vrot.lane.b32.xlu0 %v677, 125
      %v702 = vpop.permute.xlu0 %701
      %703 = vrot.lane.b32.xlu0 %v679, 125
      %v704 = vpop.permute.xlu0 %703
      %705 = vrot.lane.b32.xlu0 %v680, 125
      %v706 = vpop.permute.xlu0 %705
      %707 = vrot.lane.b32.xlu0 %v682, 125
      %v708 = vpop.permute.xlu0 %707
      %709 = vrot.lane.b32.xlu0 %v683, 125
      %v710 = vpop.permute.xlu0 %709
      %711 = vrot.lane.b32.xlu0 %v685, 125
      %v712 = vpop.permute.xlu0 %711
      %713 = vrot.lane.b32.xlu0 %v686, 125
      %v714 = vpop.permute.xlu0 %713
      %715 = vrot.lane.b32.xlu0 %v688, 125
      %v716 = vpop.permute.xlu0 %715
      %717 = vrot.lane.b32.xlu0 %v689, 125
      %v718 = vpop.permute.xlu0 %717
      %719 = vrot.lane.b32.xlu0 %v691, 125
      %v720 = vpop.permute.xlu0 %719
      %721 = vrot.lane.b32.xlu0 %v692, 125
      %v722 = vpop.permute.xlu0 %721
      %723 = vrot.lane.b32.xlu0 %v694, 125
      %v724 = vpop.permute.xlu0 %723
      %725 = vrot.lane.b32.xlu0 %v695, 125
      %v726 = vpop.permute.xlu0 %725
      %727 = vrot.lane.b32.xlu0 %v697, 125
      %v728 = vpop.permute.xlu0 %727
      %729 = vrot.lane.b32.xlu0 %v698, 125
      %v730 = vpop.permute.xlu0 %729
      %731 = vrot.lane.b32.xlu0 %v700, 125
      %v732 = vpop.permute.xlu0 %731
      %vm752 = vcmask 1045504
      %v753 = vrot.slane %v203, 2
      %v754 = vrot.slane %v204, 2
      %v755 = vsel %vm752, %v753, %v754
      %v756 = vrot.slane %v205, 2
      %v757 = vsel %vm752, %v754, %v756
      %v758 = vrot.slane %v208, 2
      %v759 = vrot.slane %v209, 2
      %v760 = vsel %vm752, %v758, %v759
      %v761 = vrot.slane %v210, 2
      %v762 = vsel %vm752, %v759, %v761
      %v763 = vrot.slane %v213, 2
      %v764 = vrot.slane %v214, 2
      %v765 = vsel %vm752, %v763, %v764
      %v766 = vrot.slane %v215, 2
      %v767 = vsel %vm752, %v764, %v766
      %v768 = vrot.slane %v218, 2
      %v769 = vrot.slane %v219, 2
      %v770 = vsel %vm752, %v768, %v769
      %v771 = vrot.slane %v220, 2
      %v772 = vsel %vm752, %v769, %v771
      %v773 = vrot.slane %v223, 2
      %v774 = vrot.slane %v224, 2
      %v775 = vsel %vm752, %v773, %v774
      %v776 = vrot.slane %v225, 2
      %v777 = vsel %vm752, %v774, %v776
      %v778 = vrot.slane %v228, 2
      %v779 = vrot.slane %v229, 2
      %v780 = vsel %vm752, %v778, %v779
      %v781 = vrot.slane %v230, 2
      %v782 = vsel %vm752, %v779, %v781
      %v783 = vrot.slane %v233, 2
      %v784 = vrot.slane %v234, 2
      %v785 = vsel %vm752, %v783, %v784
      %v786 = vrot.slane %v235, 2
      %v787 = vsel %vm752, %v784, %v786
      %v788 = vrot.slane %v238, 2
      %v789 = vrot.slane %v239, 2
      %v790 = vsel %vm752, %v788, %v789
      %v791 = vrot.slane %v240, 2
      %v792 = vsel %vm752, %v789, %v791
      %v819 = vrot.slane %v206, 2
      %v820 = vsel %vm752, %v756, %v819
      %v821 = vrot.slane %v207, 2
      %v822 = vsel %vm752, %v819, %v821
      %v823 = vrot.slane %v211, 2
      %v824 = vsel %vm752, %v761, %v823
      %v825 = vrot.slane %v212, 2
      %v826 = vsel %vm752, %v823, %v825
      %v827 = vrot.slane %v216, 2
      %v828 = vsel %vm752, %v766, %v827
      %v829 = vrot.slane %v217, 2
      %v830 = vsel %vm752, %v827, %v829
      %v831 = vrot.slane %v221, 2
      %v832 = vsel %vm752, %v771, %v831
      %v833 = vrot.slane %v222, 2
      %v834 = vsel %vm752, %v831, %v833
      %v835 = vrot.slane %v226, 2
      %v836 = vsel %vm752, %v776, %v835
      %v837 = vrot.slane %v227, 2
      %v838 = vsel %vm752, %v835, %v837
      %v839 = vrot.slane %v231, 2
      %v840 = vsel %vm752, %v781, %v839
      %v841 = vrot.slane %v232, 2
      %v842 = vsel %vm752, %v839, %v841
      %v843 = vrot.slane %v236, 2
      %v844 = vsel %vm752, %v786, %v843
      %v845 = vrot.slane %v237, 2
      %v846 = vsel %vm752, %v843, %v845
      %v847 = vrot.slane %v241, 2
      %v848 = vsel %vm752, %v791, %v847
      %v849 = vrot.slane %v242, 2
      %v850 = vsel %vm752, %v847, %v849
      %vm875 = vcmask 1041408
      %v876 = vrot.slane %v203, 6
      %v877 = vrot.slane %v204, 6
      %v878 = vsel %vm875, %v876, %v877
      %v879 = vrot.slane %v205, 6
      %v880 = vsel %vm875, %v877, %v879
      %v881 = vrot.slane %v208, 6
      %v882 = vrot.slane %v209, 6
      %v883 = vsel %vm875, %v881, %v882
      %v884 = vrot.slane %v210, 6
      %v885 = vsel %vm875, %v882, %v884
      %v886 = vrot.slane %v213, 6
      %v887 = vrot.slane %v214, 6
      %v888 = vsel %vm875, %v886, %v887
      %v889 = vrot.slane %v215, 6
      %v890 = vsel %vm875, %v887, %v889
      %v891 = vrot.slane %v218, 6
      %v892 = vrot.slane %v219, 6
      %v893 = vsel %vm875, %v891, %v892
      %v894 = vrot.slane %v220, 6
      %v895 = vsel %vm875, %v892, %v894
      %v896 = vrot.slane %v223, 6
      %v897 = vrot.slane %v224, 6
      %v898 = vsel %vm875, %v896, %v897
      %v899 = vrot.slane %v225, 6
      %v900 = vsel %vm875, %v897, %v899
      %v901 = vrot.slane %v228, 6
      %v902 = vrot.slane %v229, 6
      %v903 = vsel %vm875, %v901, %v902
      %v904 = vrot.slane %v230, 6
      %v905 = vsel %vm875, %v902, %v904
      %v906 = vrot.slane %v233, 6
      %v907 = vrot.slane %v234, 6
      %v908 = vsel %vm875, %v906, %v907
      %v909 = vrot.slane %v235, 6
      %v910 = vsel %vm875, %v907, %v909
      %v911 = vrot.slane %v238, 6
      %v912 = vrot.slane %v239, 6
      %v913 = vsel %vm875, %v911, %v912
      %v914 = vrot.slane %v240, 6
      %v915 = vsel %vm875, %v912, %v914
      %916 = vrot.lane.b32.xlu0 %v876, 127
      %v917 = vpop.permute.xlu0 %916
      %918 = vrot.lane.b32.xlu0 %v878, 127
      %v919 = vpop.permute.xlu0 %918
      %920 = vrot.lane.b32.xlu0 %v880, 127
      %v921 = vpop.permute.xlu0 %920
      %922 = vrot.lane.b32.xlu0 %v881, 127
      %v923 = vpop.permute.xlu0 %922
      %924 = vrot.lane.b32.xlu0 %v883, 127
      %v925 = vpop.permute.xlu0 %924
      %926 = vrot.lane.b32.xlu0 %v885, 127
      %v927 = vpop.permute.xlu0 %926
      %928 = vrot.lane.b32.xlu0 %v886, 127
      %v929 = vpop.permute.xlu0 %928
      %930 = vrot.lane.b32.xlu0 %v888, 127
      %v931 = vpop.permute.xlu0 %930
      %932 = vrot.lane.b32.xlu0 %v890, 127
      %v933 = vpop.permute.xlu0 %932
      %934 = vrot.lane.b32.xlu0 %v891, 127
      %v935 = vpop.permute.xlu0 %934
      %936 = vrot.lane.b32.xlu0 %v893, 127
      %v937 = vpop.permute.xlu0 %936
      %938 = vrot.lane.b32.xlu0 %v895, 127
      %v939 = vpop.permute.xlu0 %938
      %940 = vrot.lane.b32.xlu0 %v896, 127
      %v941 = vpop.permute.xlu0 %940
      %942 = vrot.lane.b32.xlu0 %v898, 127
      %v943 = vpop.permute.xlu0 %942
      %944 = vrot.lane.b32.xlu0 %v900, 127
      %v945 = vpop.permute.xlu0 %944
      %946 = vrot.lane.b32.xlu0 %v901, 127
      %v947 = vpop.permute.xlu0 %946
      %948 = vrot.lane.b32.xlu0 %v903, 127
      %v949 = vpop.permute.xlu0 %948
      %950 = vrot.lane.b32.xlu0 %v905, 127
      %v951 = vpop.permute.xlu0 %950
      %952 = vrot.lane.b32.xlu0 %v906, 127
      %v953 = vpop.permute.xlu0 %952
      %954 = vrot.lane.b32.xlu0 %v908, 127
      %v955 = vpop.permute.xlu0 %954
      %956 = vrot.lane.b32.xlu0 %v910, 127
      %v957 = vpop.permute.xlu0 %956
      %958 = vrot.lane.b32.xlu0 %v911, 127
      %v959 = vpop.permute.xlu0 %958
      %960 = vrot.lane.b32.xlu0 %v913, 127
      %v961 = vpop.permute.xlu0 %960
      %962 = vrot.lane.b32.xlu0 %v915, 127
      %v963 = vpop.permute.xlu0 %962
      %v988 = vrot.slane %v206, 6
      %v989 = vsel %vm875, %v879, %v988
      %v990 = vrot.slane %v207, 6
      %v991 = vsel %vm875, %v988, %v990
      %v992 = vrot.slane %v211, 6
      %v993 = vsel %vm875, %v884, %v992
      %v994 = vrot.slane %v212, 6
      %v995 = vsel %vm875, %v992, %v994
      %v996 = vrot.slane %v216, 6
      %v997 = vsel %vm875, %v889, %v996
      %v998 = vrot.slane %v217, 6
      %v999 = vsel %vm875, %v996, %v998
      %v1000 = vrot.slane %v221, 6
      %v1001 = vsel %vm875, %v894, %v1000
      %v1002 = vrot.slane %v222, 6
      %v1003 = vsel %vm875, %v1000, %v1002
      %v1004 = vrot.slane %v226, 6
      %v1005 = vsel %vm875, %v899, %v1004
      %v1006 = vrot.slane %v227, 6
      %v1007 = vsel %vm875, %v1004, %v1006
      %v1008 = vrot.slane %v231, 6
      %v1009 = vsel %vm875, %v904, %v1008
      %v1010 = vrot.slane %v232, 6
      %v1011 = vsel %vm875, %v1008, %v1010
      %v1012 = vrot.slane %v236, 6
      %v1013 = vsel %vm875, %v909, %v1012
      %v1014 = vrot.slane %v237, 6
      %v1015 = vsel %vm875, %v1012, %v1014
      %v1016 = vrot.slane %v241, 6
      %v1017 = vsel %vm875, %v914, %v1016
      %v1018 = vrot.slane %v242, 6
      %v1019 = vsel %vm875, %v1016, %v1018
      %1020 = vrot.lane.b32.xlu0 %v879, 127
      %v1021 = vpop.permute.xlu0 %1020
      %1022 = vrot.lane.b32.xlu0 %v989, 127
      %v1023 = vpop.permute.xlu0 %1022
      %1024 = vrot.lane.b32.xlu0 %v991, 127
      %v1025 = vpop.permute.xlu0 %1024
      %1026 = vrot.lane.b32.xlu0 %v884, 127
      %v1027 = vpop.permute.xlu0 %1026
      %1028 = vrot.lane.b32.xlu0 %v993, 127
      %v1029 = vpop.permute.xlu0 %1028
      %1030 = vrot.lane.b32.xlu0 %v995, 127
      %v1031 = vpop.permute.xlu0 %1030
      %1032 = vrot.lane.b32.xlu0 %v889, 127
      %v1033 = vpop.permute.xlu0 %1032
      %1034 = vrot.lane.b32.xlu0 %v997, 127
      %v1035 = vpop.permute.xlu0 %1034
      %1036 = vrot.lane.b32.xlu0 %v999, 127
      %v1037 = vpop.permute.xlu0 %1036
      %1038 = vrot.lane.b32.xlu0 %v894, 127
      %v1039 = vpop.permute.xlu0 %1038
      %1040 = vrot.lane.b32.xlu0 %v1001, 127
      %v1041 = vpop.permute.xlu0 %1040
      %1042 = vrot.lane.b32.xlu0 %v1003, 127
      %v1043 = vpop.permute.xlu0 %1042
      %1044 = vrot.lane.b32.xlu0 %v899, 127
      %v1045 = vpop.permute.xlu0 %1044
      %1046 = vrot.lane.b32.xlu0 %v1005, 127
      %v1047 = vpop.permute.xlu0 %1046
      %1048 = vrot.lane.b32.xlu0 %v1007, 127
      %v1049 = vpop.permute.xlu0 %1048
      %1050 = vrot.lane.b32.xlu0 %v904, 127
      %v1051 = vpop.permute.xlu0 %1050
      %1052 = vrot.lane.b32.xlu0 %v1009, 127
      %v1053 = vpop.permute.xlu0 %1052
      %1054 = vrot.lane.b32.xlu0 %v1011, 127
      %v1055 = vpop.permute.xlu0 %1054
      %1056 = vrot.lane.b32.xlu0 %v909, 127
      %v1057 = vpop.permute.xlu0 %1056
      %1058 = vrot.lane.b32.xlu0 %v1013, 127
      %v1059 = vpop.permute.xlu0 %1058
      %1060 = vrot.lane.b32.xlu0 %v1015, 127
      %v1061 = vpop.permute.xlu0 %1060
      %1062 = vrot.lane.b32.xlu0 %v914, 127
      %v1063 = vpop.permute.xlu0 %1062
      %1064 = vrot.lane.b32.xlu0 %v1017, 127
      %v1065 = vpop.permute.xlu0 %1064
      %1066 = vrot.lane.b32.xlu0 %v1019, 127
      %v1067 = vpop.permute.xlu0 %1066
      %1092 = vrot.lane.b32.xlu0 %v753, 126
      %v1093 = vpop.permute.xlu0 %1092
      %1094 = vrot.lane.b32.xlu0 %v755, 126
      %v1095 = vpop.permute.xlu0 %1094
      %1096 = vrot.lane.b32.xlu0 %v757, 126
      %v1097 = vpop.permute.xlu0 %1096
      %1098 = vrot.lane.b32.xlu0 %v758, 126
      %v1099 = vpop.permute.xlu0 %1098
      %1100 = vrot.lane.b32.xlu0 %v760, 126
      %v1101 = vpop.permute.xlu0 %1100
      %1102 = vrot.lane.b32.xlu0 %v762, 126
      %v1103 = vpop.permute.xlu0 %1102
      %1104 = vrot.lane.b32.xlu0 %v763, 126
      %v1105 = vpop.permute.xlu0 %1104
      %1106 = vrot.lane.b32.xlu0 %v765, 126
      %v1107 = vpop.permute.xlu0 %1106
      %1108 = vrot.lane.b32.xlu0 %v767, 126
      %v1109 = vpop.permute.xlu0 %1108
      %1110 = vrot.lane.b32.xlu0 %v768, 126
      %v1111 = vpop.permute.xlu0 %1110
      %1112 = vrot.lane.b32.xlu0 %v770, 126
      %v1113 = vpop.permute.xlu0 %1112
      %1114 = vrot.lane.b32.xlu0 %v772, 126
      %v1115 = vpop.permute.xlu0 %1114
      %1116 = vrot.lane.b32.xlu0 %v773, 126
      %v1117 = vpop.permute.xlu0 %1116
      %1118 = vrot.lane.b32.xlu0 %v775, 126
      %v1119 = vpop.permute.xlu0 %1118
      %1120 = vrot.lane.b32.xlu0 %v777, 126
      %v1121 = vpop.permute.xlu0 %1120
      %1122 = vrot.lane.b32.xlu0 %v778, 126
      %v1123 = vpop.permute.xlu0 %1122
      %1124 = vrot.lane.b32.xlu0 %v780, 126
      %v1125 = vpop.permute.xlu0 %1124
      %1126 = vrot.lane.b32.xlu0 %v782, 126
      %v1127 = vpop.permute.xlu0 %1126
      %1128 = vrot.lane.b32.xlu0 %v783, 126
      %v1129 = vpop.permute.xlu0 %1128
      %1130 = vrot.lane.b32.xlu0 %v785, 126
      %v1131 = vpop.permute.xlu0 %1130
      %1132 = vrot.lane.b32.xlu0 %v787, 126
      %v1133 = vpop.permute.xlu0 %1132
      %1134 = vrot.lane.b32.xlu0 %v788, 126
      %v1135 = vpop.permute.xlu0 %1134
      %1136 = vrot.lane.b32.xlu0 %v790, 126
      %v1137 = vpop.permute.xlu0 %1136
      %1138 = vrot.lane.b32.xlu0 %v792, 126
      %v1139 = vpop.permute.xlu0 %1138
      %1164 = vrot.lane.b32.xlu0 %v820, 126
      %v1165 = vpop.permute.xlu0 %1164
      %1166 = vrot.lane.b32.xlu0 %v822, 126
      %v1167 = vpop.permute.xlu0 %1166
      %1168 = vrot.lane.b32.xlu0 %v821, 126
      %v1169 = vpop.permute.xlu0 %1168
      %1170 = vrot.lane.b32.xlu0 %v824, 126
      %v1171 = vpop.permute.xlu0 %1170
      %1172 = vrot.lane.b32.xlu0 %v826, 126
      %v1173 = vpop.permute.xlu0 %1172
      %1174 = vrot.lane.b32.xlu0 %v825, 126
      %v1175 = vpop.permute.xlu0 %1174
      %1176 = vrot.lane.b32.xlu0 %v828, 126
      %v1177 = vpop.permute.xlu0 %1176
      %1178 = vrot.lane.b32.xlu0 %v830, 126
      %v1179 = vpop.permute.xlu0 %1178
      %1180 = vrot.lane.b32.xlu0 %v829, 126
      %v1181 = vpop.permute.xlu0 %1180
      %1182 = vrot.lane.b32.xlu0 %v832, 126
      %v1183 = vpop.permute.xlu0 %1182
      %1184 = vrot.lane.b32.xlu0 %v834, 126
      %v1185 = vpop.permute.xlu0 %1184
      %1186 = vrot.lane.b32.xlu0 %v833, 126
      %v1187 = vpop.permute.xlu0 %1186
      %1188 = vrot.lane.b32.xlu0 %v836, 126
      %v1189 = vpop.permute.xlu0 %1188
      %1190 = vrot.lane.b32.xlu0 %v838, 126
      %v1191 = vpop.permute.xlu0 %1190
      %1192 = vrot.lane.b32.xlu0 %v837, 126
      %v1193 = vpop.permute.xlu0 %1192
      %1194 = vrot.lane.b32.xlu0 %v840, 126
      %v1195 = vpop.permute.xlu0 %1194
      %1196 = vrot.lane.b32.xlu0 %v842, 126
      %v1197 = vpop.permute.xlu0 %1196
      %1198 = vrot.lane.b32.xlu0 %v841, 126
      %v1199 = vpop.permute.xlu0 %1198
      %1200 = vrot.lane.b32.xlu0 %v844, 126
      %v1201 = vpop.permute.xlu0 %1200
      %1202 = vrot.lane.b32.xlu0 %v846, 126
      %v1203 = vpop.permute.xlu0 %1202
      %1204 = vrot.lane.b32.xlu0 %v845, 126
      %v1205 = vpop.permute.xlu0 %1204
      %1206 = vrot.lane.b32.xlu0 %v848, 126
      %v1207 = vpop.permute.xlu0 %1206
      %1208 = vrot.lane.b32.xlu0 %v850, 126
      %v1209 = vpop.permute.xlu0 %1208
      %1210 = vrot.lane.b32.xlu0 %v849, 126
      %v1211 = vpop.permute.xlu0 %1210
      %1236 = vrot.lane.b32.xlu0 %v876, 125
      %v1237 = vpop.permute.xlu0 %1236
      %1238 = vrot.lane.b32.xlu0 %v878, 125
      %v1239 = vpop.permute.xlu0 %1238
      %1240 = vrot.lane.b32.xlu0 %v881, 125
      %v1241 = vpop.permute.xlu0 %1240
      %1242 = vrot.lane.b32.xlu0 %v883, 125
      %v1243 = vpop.permute.xlu0 %1242
      %1244 = vrot.lane.b32.xlu0 %v886, 125
      %v1245 = vpop.permute.xlu0 %1244
      %1246 = vrot.lane.b32.xlu0 %v888, 125
      %v1247 = vpop.permute.xlu0 %1246
      %1248 = vrot.lane.b32.xlu0 %v891, 125
      %v1249 = vpop.permute.xlu0 %1248
      %1250 = vrot.lane.b32.xlu0 %v893, 125
      %v1251 = vpop.permute.xlu0 %1250
      %1252 = vrot.lane.b32.xlu0 %v896, 125
      %v1253 = vpop.permute.xlu0 %1252
      %1254 = vrot.lane.b32.xlu0 %v898, 125
      %v1255 = vpop.permute.xlu0 %1254
      %1256 = vrot.lane.b32.xlu0 %v901, 125
      %v1257 = vpop.permute.xlu0 %1256
      %1258 = vrot.lane.b32.xlu0 %v903, 125
      %v1259 = vpop.permute.xlu0 %1258
      %1260 = vrot.lane.b32.xlu0 %v906, 125
      %v1261 = vpop.permute.xlu0 %1260
      %1262 = vrot.lane.b32.xlu0 %v908, 125
      %v1263 = vpop.permute.xlu0 %1262
      %1264 = vrot.lane.b32.xlu0 %v911, 125
      %v1265 = vpop.permute.xlu0 %1264
      %1266 = vrot.lane.b32.xlu0 %v913, 125
      %v1267 = vpop.permute.xlu0 %1266
      %vm1284 = vcmask 1040384
      %v1285 = vrot.slane %v205, 7
      %v1286 = vrot.slane %v206, 7
      %v1287 = vsel %vm1284, %v1285, %v1286
      %v1288 = vrot.slane %v210, 7
      %v1289 = vrot.slane %v211, 7
      %v1290 = vsel %vm1284, %v1288, %v1289
      %v1291 = vrot.slane %v215, 7
      %v1292 = vrot.slane %v216, 7
      %v1293 = vsel %vm1284, %v1291, %v1292
      %v1294 = vrot.slane %v220, 7
      %v1295 = vrot.slane %v221, 7
      %v1296 = vsel %vm1284, %v1294, %v1295
      %v1297 = vrot.slane %v225, 7
      %v1298 = vrot.slane %v226, 7
      %v1299 = vsel %vm1284, %v1297, %v1298
      %v1300 = vrot.slane %v230, 7
      %v1301 = vrot.slane %v231, 7
      %v1302 = vsel %vm1284, %v1300, %v1301
      %v1303 = vrot.slane %v235, 7
      %v1304 = vrot.slane %v236, 7
      %v1305 = vsel %vm1284, %v1303, %v1304
      %v1306 = vrot.slane %v240, 7
      %v1307 = vrot.slane %v241, 7
      %v1308 = vsel %vm1284, %v1306, %v1307
      %1309 = vrot.lane.b32.xlu0 %v1285, 125
      %v1310 = vpop.permute.xlu0 %1309
      %1311 = vrot.lane.b32.xlu0 %v1287, 125
      %v1312 = vpop.permute.xlu0 %1311
      %1313 = vrot.lane.b32.xlu0 %v1288, 125
      %v1314 = vpop.permute.xlu0 %1313
      %1315 = vrot.lane.b32.xlu0 %v1290, 125
      %v1316 = vpop.permute.xlu0 %1315
      %1317 = vrot.lane.b32.xlu0 %v1291, 125
      %v1318 = vpop.permute.xlu0 %1317
      %1319 = vrot.lane.b32.xlu0 %v1293, 125
      %v1320 = vpop.permute.xlu0 %1319
      %1321 = vrot.lane.b32.xlu0 %v1294, 125
      %v1322 = vpop.permute.xlu0 %1321
      %1323 = vrot.lane.b32.xlu0 %v1296, 125
      %v1324 = vpop.permute.xlu0 %1323
      %1325 = vrot.lane.b32.xlu0 %v1297, 125
      %v1326 = vpop.permute.xlu0 %1325
      %1327 = vrot.lane.b32.xlu0 %v1299, 125
      %v1328 = vpop.permute.xlu0 %1327
      %1329 = vrot.lane.b32.xlu0 %v1300, 125
      %v1330 = vpop.permute.xlu0 %1329
      %1331 = vrot.lane.b32.xlu0 %v1302, 125
      %v1332 = vpop.permute.xlu0 %1331
      %1333 = vrot.lane.b32.xlu0 %v1303, 125
      %v1334 = vpop.permute.xlu0 %1333
      %1335 = vrot.lane.b32.xlu0 %v1305, 125
      %v1336 = vpop.permute.xlu0 %1335
      %1337 = vrot.lane.b32.xlu0 %v1306, 125
      %v1338 = vpop.permute.xlu0 %1337
      %1339 = vrot.lane.b32.xlu0 %v1308, 125
      %v1340 = vpop.permute.xlu0 %1339
      %v1357 = vsel %vm275, %v202, %v317
      %v1358 = vsel %vm275, %v207, %v323
      %v1359 = vsel %vm275, %v212, %v329
      %v1360 = vsel %vm275, %v217, %v335
      %v1361 = vsel %vm275, %v222, %v341
      %v1362 = vsel %vm275, %v227, %v347
      %v1363 = vsel %vm275, %v232, %v353
      %v1364 = vsel %vm275, %v237, %v359
      %v1365 = vsel %vm752, %v321, %v437
      %v1366 = vsel %vm752, %v327, %v443
      %v1367 = vsel %vm752, %v333, %v449
      %v1368 = vsel %vm752, %v339, %v455
      %v1369 = vsel %vm752, %v345, %v461
      %v1370 = vsel %vm752, %v351, %v467
      %v1371 = vsel %vm752, %v357, %v473
      %v1372 = vsel %vm752, %v363, %v479
      %v1373 = vsel %vm275, %v583, %v629
      %v1374 = vsel %vm275, %v587, %v633
      %v1375 = vsel %vm275, %v591, %v637
      %v1376 = vsel %vm275, %v595, %v641
      %v1377 = vsel %vm275, %v599, %v645
      %v1378 = vsel %vm275, %v603, %v649
      %v1379 = vsel %vm275, %v607, %v653
      %v1380 = vsel %vm275, %v611, %v657
      %vm1381 = vcmask 1044480
      %v1382 = vsel %vm1381, %v631, %v702
      %v1383 = vsel %vm1381, %v635, %v706
      %v1384 = vsel %vm1381, %v639, %v710
      %v1385 = vsel %vm1381, %v643, %v714
      %v1386 = vsel %vm1381, %v647, %v718
      %v1387 = vsel %vm1381, %v651, %v722
      %v1388 = vsel %vm1381, %v655, %v726
      %v1389 = vsel %vm1381, %v659, %v730
      %v1390 = vsel %vm752, %v704, %v753
      %v1391 = vsel %vm752, %v708, %v758
      %v1392 = vsel %vm752, %v712, %v763
      %v1393 = vsel %vm752, %v716, %v768
      %v1394 = vsel %vm752, %v720, %v773
      %v1395 = vsel %vm752, %v724, %v778
      %v1396 = vsel %vm752, %v728, %v783
      %v1397 = vsel %vm752, %v732, %v788
      %v1398 = vsel %vm875, %v821, %v917
      %v1399 = vsel %vm875, %v825, %v923
      %v1400 = vsel %vm875, %v829, %v929
      %v1401 = vsel %vm875, %v833, %v935
      %v1402 = vsel %vm875, %v837, %v941
      %v1403 = vsel %vm875, %v841, %v947
      %v1404 = vsel %vm875, %v845, %v953
      %v1405 = vsel %vm875, %v849, %v959
      %v1406 = vsel %vm275, %v921, %v1021
      %v1407 = vsel %vm275, %v927, %v1027
      %v1408 = vsel %vm275, %v933, %v1033
      %v1409 = vsel %vm275, %v939, %v1039
      %v1410 = vsel %vm275, %v945, %v1045
      %v1411 = vsel %vm275, %v951, %v1051
      %v1412 = vsel %vm275, %v957, %v1057
      %v1413 = vsel %vm275, %v963, %v1063
      %v1414 = vsel %vm752, %v1025, %v1093
      %v1415 = vsel %vm752, %v1031, %v1099
      %v1416 = vsel %vm752, %v1037, %v1105
      %v1417 = vsel %vm752, %v1043, %v1111
      %v1418 = vsel %vm752, %v1049, %v1117
      %v1419 = vsel %vm752, %v1055, %v1123
      %v1420 = vsel %vm752, %v1061, %v1129
      %v1421 = vsel %vm752, %v1067, %v1135
      %v1422 = vsel %vm875, %v1169, %v1237
      %v1423 = vsel %vm875, %v1175, %v1241
      %v1424 = vsel %vm875, %v1181, %v1245
      %v1425 = vsel %vm875, %v1187, %v1249
      %v1426 = vsel %vm875, %v1193, %v1253
      %v1427 = vsel %vm875, %v1199, %v1257
      %v1428 = vsel %vm875, %v1205, %v1261
      %v1429 = vsel %vm875, %v1211, %v1265
      %v1430 = vsel %vm676, %v1239, %v1310
      %v1431 = vsel %vm676, %v1243, %v1314
      %v1432 = vsel %vm676, %v1247, %v1318
      %v1433 = vsel %vm676, %v1251, %v1322
      %v1434 = vsel %vm676, %v1255, %v1326
      %v1435 = vsel %vm676, %v1259, %v1330
      %v1436 = vsel %vm676, %v1263, %v1334
      %v1437 = vsel %vm676, %v1267, %v1338
      %v1441 = vrot.slane %v238, 4
      %v1442 = vrot.slane %v239, 4
      %v1443 = vsel %vm275, %v1441, %v1442
      %v1444 = vrot.slane %v240, 4
      %v1445 = vsel %vm275, %v1442, %v1444
      %v1446 = vrot.slane %v243, 4
      %v1447 = vrot.slane %v244, 4
      %v1448 = vsel %vm275, %v1446, %v1447
      %v1449 = vrot.slane %v245, 4
      %v1450 = vsel %vm275, %v1447, %v1449
      %1451 = vrot.lane.b32.xlu0 %v1441, 127
      %v1452 = vpop.permute.xlu0 %1451
      %1453 = vrot.lane.b32.xlu0 %v1443, 127
      %v1454 = vpop.permute.xlu0 %1453
      %1455 = vrot.lane.b32.xlu0 %v1445, 127
      %v1456 = vpop.permute.xlu0 %1455
      %1457 = vrot.lane.b32.xlu0 %v1446, 127
      %v1458 = vpop.permute.xlu0 %1457
      %1459 = vrot.lane.b32.xlu0 %v1448, 127
      %v1460 = vpop.permute.xlu0 %1459
      %1461 = vrot.lane.b32.xlu0 %v1450, 127
      %v1462 = vpop.permute.xlu0 %1461
      %v1469 = vrot.slane %v241, 4
      %v1470 = vsel %vm275, %v1444, %v1469
      %v1471 = vrot.slane %v242, 4
      %v1472 = vsel %vm275, %v1469, %v1471
      %v1473 = vrot.slane %v246, 4
      %v1474 = vsel %vm275, %v1449, %v1473
      %v1475 = vrot.slane %v247, 4
      %v1476 = vsel %vm275, %v1473, %v1475
      %1477 = vrot.lane.b32.xlu0 %v1444, 127
      %v1478 = vpop.permute.xlu0 %1477
      %1479 = vrot.lane.b32.xlu0 %v1470, 127
      %v1480 = vpop.permute.xlu0 %1479
      %1481 = vrot.lane.b32.xlu0 %v1472, 127
      %v1482 = vpop.permute.xlu0 %1481
      %1483 = vrot.lane.b32.xlu0 %v1449, 127
      %v1484 = vpop.permute.xlu0 %1483
      %1485 = vrot.lane.b32.xlu0 %v1474, 127
      %v1486 = vpop.permute.xlu0 %1485
      %1487 = vrot.lane.b32.xlu0 %v1476, 127
      %v1488 = vpop.permute.xlu0 %1487
      %1491 = vrot.lane.b32.xlu0 %v238, 126
      %v1492 = vpop.permute.xlu0 %1491
      %1493 = vrot.lane.b32.xlu0 %v239, 126
      %v1494 = vpop.permute.xlu0 %1493
      %1495 = vrot.lane.b32.xlu0 %v240, 126
      %v1496 = vpop.permute.xlu0 %1495
      %1497 = vrot.lane.b32.xlu0 %v243, 126
      %v1498 = vpop.permute.xlu0 %1497
      %1499 = vrot.lane.b32.xlu0 %v244, 126
      %v1500 = vpop.permute.xlu0 %1499
      %1501 = vrot.lane.b32.xlu0 %v245, 126
      %v1502 = vpop.permute.xlu0 %1501
      %1505 = vrot.lane.b32.xlu0 %v241, 126
      %v1506 = vpop.permute.xlu0 %1505
      %1507 = vrot.lane.b32.xlu0 %v242, 126
      %v1508 = vpop.permute.xlu0 %1507
      %1509 = vrot.lane.b32.xlu0 %v246, 126
      %v1510 = vpop.permute.xlu0 %1509
      %1511 = vrot.lane.b32.xlu0 %v247, 126
      %v1512 = vpop.permute.xlu0 %1511
      %1515 = vrot.lane.b32.xlu0 %v1441, 125
      %v1516 = vpop.permute.xlu0 %1515
      %1517 = vrot.lane.b32.xlu0 %v1443, 125
      %v1518 = vpop.permute.xlu0 %1517
      %1519 = vrot.lane.b32.xlu0 %v1446, 125
      %v1520 = vpop.permute.xlu0 %1519
      %1521 = vrot.lane.b32.xlu0 %v1448, 125
      %v1522 = vpop.permute.xlu0 %1521
      %v1527 = vrot.slane %v240, 5
      %v1528 = vrot.slane %v241, 5
      %v1529 = vsel %vm676, %v1527, %v1528
      %v1530 = vrot.slane %v245, 5
      %v1531 = vrot.slane %v246, 5
      %v1532 = vsel %vm676, %v1530, %v1531
      %1533 = vrot.lane.b32.xlu0 %v1527, 125
      %v1534 = vpop.permute.xlu0 %1533
      %1535 = vrot.lane.b32.xlu0 %v1529, 125
      %v1536 = vpop.permute.xlu0 %1535
      %1537 = vrot.lane.b32.xlu0 %v1530, 125
      %v1538 = vpop.permute.xlu0 %1537
      %1539 = vrot.lane.b32.xlu0 %v1532, 125
      %v1540 = vpop.permute.xlu0 %1539
      %v1548 = vrot.slane %v243, 2
      %v1549 = vrot.slane %v244, 2
      %v1550 = vsel %vm752, %v1548, %v1549
      %v1551 = vrot.slane %v245, 2
      %v1552 = vsel %vm752, %v1549, %v1551
      %v1553 = vrot.slane %v248, 2
      %v1554 = vrot.slane %v249, 2
      %v1555 = vsel %vm752, %v1553, %v1554
      %v1556 = vrot.slane %v250, 2
      %v1557 = vsel %vm752, %v1554, %v1556
      %1560 = vrot.lane.b32.xlu0 %v213, 127
      %v1561 = vpop.permute.xlu0 %1560
      %1562 = vrot.lane.b32.xlu0 %v214, 127
      %v1563 = vpop.permute.xlu0 %1562
      %1564 = vrot.lane.b32.xlu0 %v215, 127
      %v1565 = vpop.permute.xlu0 %1564
      %1566 = vrot.lane.b32.xlu0 %v218, 127
      %v1567 = vpop.permute.xlu0 %1566
      %1568 = vrot.lane.b32.xlu0 %v219, 127
      %v1569 = vpop.permute.xlu0 %1568
      %1570 = vrot.lane.b32.xlu0 %v220, 127
      %v1571 = vpop.permute.xlu0 %1570
      %1572 = vrot.lane.b32.xlu0 %v223, 127
      %v1573 = vpop.permute.xlu0 %1572
      %1574 = vrot.lane.b32.xlu0 %v224, 127
      %v1575 = vpop.permute.xlu0 %1574
      %1576 = vrot.lane.b32.xlu0 %v225, 127
      %v1577 = vpop.permute.xlu0 %1576
      %1578 = vrot.lane.b32.xlu0 %v228, 127
      %v1579 = vpop.permute.xlu0 %1578
      %1580 = vrot.lane.b32.xlu0 %v229, 127
      %v1581 = vpop.permute.xlu0 %1580
      %1582 = vrot.lane.b32.xlu0 %v230, 127
      %v1583 = vpop.permute.xlu0 %1582
      %1584 = vrot.lane.b32.xlu0 %v233, 127
      %v1585 = vpop.permute.xlu0 %1584
      %1586 = vrot.lane.b32.xlu0 %v234, 127
      %v1587 = vpop.permute.xlu0 %1586
      %1588 = vrot.lane.b32.xlu0 %v235, 127
      %v1589 = vpop.permute.xlu0 %1588
      %1590 = vrot.lane.b32.xlu0 %v238, 127
      %v1591 = vpop.permute.xlu0 %1590
      %1592 = vrot.lane.b32.xlu0 %v239, 127
      %v1593 = vpop.permute.xlu0 %1592
      %1594 = vrot.lane.b32.xlu0 %v240, 127
      %v1595 = vpop.permute.xlu0 %1594
      %1596 = vrot.lane.b32.xlu0 %v243, 127
      %v1597 = vpop.permute.xlu0 %1596
      %1598 = vrot.lane.b32.xlu0 %v244, 127
      %v1599 = vpop.permute.xlu0 %1598
      %1600 = vrot.lane.b32.xlu0 %v245, 127
      %v1601 = vpop.permute.xlu0 %1600
      %1602 = vrot.lane.b32.xlu0 %v248, 127
      %v1603 = vpop.permute.xlu0 %1602
      %1604 = vrot.lane.b32.xlu0 %v249, 127
      %v1605 = vpop.permute.xlu0 %1604
      %1606 = vrot.lane.b32.xlu0 %v250, 127
      %v1607 = vpop.permute.xlu0 %1606
      %v1616 = vrot.slane %v243, 6
      %v1617 = vrot.slane %v244, 6
      %v1618 = vsel %vm875, %v1616, %v1617
      %v1619 = vrot.slane %v245, 6
      %v1620 = vsel %vm875, %v1617, %v1619
      %v1621 = vrot.slane %v248, 6
      %v1622 = vrot.slane %v249, 6
      %v1623 = vsel %vm875, %v1621, %v1622
      %v1624 = vrot.slane %v250, 6
      %v1625 = vsel %vm875, %v1622, %v1624
      %1626 = vrot.lane.b32.xlu0 %v886, 126
      %v1627 = vpop.permute.xlu0 %1626
      %1628 = vrot.lane.b32.xlu0 %v888, 126
      %v1629 = vpop.permute.xlu0 %1628
      %1630 = vrot.lane.b32.xlu0 %v890, 126
      %v1631 = vpop.permute.xlu0 %1630
      %1632 = vrot.lane.b32.xlu0 %v891, 126
      %v1633 = vpop.permute.xlu0 %1632
      %1634 = vrot.lane.b32.xlu0 %v893, 126
      %v1635 = vpop.permute.xlu0 %1634
      %1636 = vrot.lane.b32.xlu0 %v895, 126
      %v1637 = vpop.permute.xlu0 %1636
      %1638 = vrot.lane.b32.xlu0 %v896, 126
      %v1639 = vpop.permute.xlu0 %1638
      %1640 = vrot.lane.b32.xlu0 %v898, 126
      %v1641 = vpop.permute.xlu0 %1640
      %1642 = vrot.lane.b32.xlu0 %v900, 126
      %v1643 = vpop.permute.xlu0 %1642
      %1644 = vrot.lane.b32.xlu0 %v901, 126
      %v1645 = vpop.permute.xlu0 %1644
      %1646 = vrot.lane.b32.xlu0 %v903, 126
      %v1647 = vpop.permute.xlu0 %1646
      %1648 = vrot.lane.b32.xlu0 %v905, 126
      %v1649 = vpop.permute.xlu0 %1648
      %1650 = vrot.lane.b32.xlu0 %v906, 126
      %v1651 = vpop.permute.xlu0 %1650
      %1652 = vrot.lane.b32.xlu0 %v908, 126
      %v1653 = vpop.permute.xlu0 %1652
      %1654 = vrot.lane.b32.xlu0 %v910, 126
      %v1655 = vpop.permute.xlu0 %1654
      %1656 = vrot.lane.b32.xlu0 %v911, 126
      %v1657 = vpop.permute.xlu0 %1656
      %1658 = vrot.lane.b32.xlu0 %v913, 126
      %v1659 = vpop.permute.xlu0 %1658
      %1660 = vrot.lane.b32.xlu0 %v915, 126
      %v1661 = vpop.permute.xlu0 %1660
      %1662 = vrot.lane.b32.xlu0 %v1616, 126
      %v1663 = vpop.permute.xlu0 %1662
      %1664 = vrot.lane.b32.xlu0 %v1618, 126
      %v1665 = vpop.permute.xlu0 %1664
      %1666 = vrot.lane.b32.xlu0 %v1620, 126
      %v1667 = vpop.permute.xlu0 %1666
      %1668 = vrot.lane.b32.xlu0 %v1621, 126
      %v1669 = vpop.permute.xlu0 %1668
      %1670 = vrot.lane.b32.xlu0 %v1623, 126
      %v1671 = vpop.permute.xlu0 %1670
      %1672 = vrot.lane.b32.xlu0 %v1625, 126
      %v1673 = vpop.permute.xlu0 %1672
      %v1690 = vrot.slane %v248, 4
      %v1691 = vrot.slane %v249, 4
      %v1692 = vsel %vm275, %v1690, %v1691
      %1693 = vrot.lane.b32.xlu0 %v1690, 125
      %v1694 = vpop.permute.xlu0 %1693
      %1695 = vrot.lane.b32.xlu0 %v1692, 125
      %v1696 = vpop.permute.xlu0 %1695
      %v1698 = vsel %vm275, %v242, %v1452
      %v1699 = vsel %vm275, %v247, %v1458
      %v1700 = vsel %vm752, %v1456, %v1478
      %v1701 = vsel %vm752, %v1462, %v1484
      %v1702 = vsel %vm275, %v1508, %v1516
      %v1703 = vsel %vm275, %v1512, %v1520
      %v1704 = vsel %vm1381, %v1518, %v1534
      %v1705 = vsel %vm1381, %v1522, %v1538
      %v1706 = vsel %vm752, %v1536, %v1548
      %v1707 = vsel %vm752, %v1540, %v1553
      %v1708 = vsel %vm875, %v1565, %v1627
      %v1709 = vsel %vm875, %v1571, %v1633
      %v1710 = vsel %vm875, %v1577, %v1639
      %v1711 = vsel %vm875, %v1583, %v1645
      %v1712 = vsel %vm875, %v1589, %v1651
      %v1713 = vsel %vm875, %v1595, %v1657
      %v1714 = vsel %vm875, %v1601, %v1663
      %v1715 = vsel %vm875, %v1607, %v1669
      %v1716 = vsel %vm275, %v1631, %v641
      %v1717 = vsel %vm275, %v1637, %v645
      %v1718 = vsel %vm275, %v1643, %v649
      %v1719 = vsel %vm275, %v1649, %v653
      %v1720 = vsel %vm275, %v1655, %v657
      %v1721 = vsel %vm275, %v1661, %v1516
      %v1722 = vsel %vm275, %v1667, %v1520
      %v1723 = vsel %vm275, %v1673, %v1694
      %v1788 = vrot.slane %v1359, 4
      %v1789 = vsel %vm275, %v412, %v1788
      %v1790 = vrot.slane %v331, 4
      %v1791 = vsel %vm275, %v1788, %v1790
      %v1792 = vrot.slane %v1367, 4
      %v1793 = vsel %vm275, %v1790, %v1792
      %v1794 = vrot.slane %v451, 4
      %v1795 = vsel %vm275, %v1792, %v1794
      %v1796 = vrot.slane %v453, 4
      %v1797 = vsel %vm275, %v1794, %v1796
      %v1798 = vrot.slane %v521, 4
      %v1799 = vsel %vm275, %v1796, %v1798
      %v1800 = vrot.slane %v523, 4
      %v1801 = vsel %vm275, %v1798, %v1800
      %v1802 = vrot.slane %v525, 4
      %v1803 = vsel %vm275, %v1800, %v1802
      %v1804 = vrot.slane %v589, 4
      %v1805 = vsel %vm275, %v1802, %v1804
      %v1806 = vrot.slane %v1375, 4
      %v1807 = vsel %vm275, %v1804, %v1806
      %v1808 = vrot.slane %v1384, 4
      %v1809 = vsel %vm275, %v1806, %v1808
      %v1810 = vrot.slane %v1392, 4
      %v1811 = vsel %vm275, %v1808, %v1810
      %v1812 = vrot.slane %v765, 4
      %v1813 = vsel %vm275, %v1810, %v1812
      %v1814 = vrot.slane %v767, 4
      %v1815 = vsel %vm275, %v1812, %v1814
      %v1816 = vrot.slane %v1561, 4
      %v1817 = vsel %vm275, %v1814, %v1816
      %v1818 = vrot.slane %v1563, 4
      %v1819 = vsel %vm275, %v1816, %v1818
      %v1820 = vrot.slane %v1708, 4
      %v1821 = vsel %vm275, %v1818, %v1820
      %v1822 = vrot.slane %v1629, 4
      %v1823 = vsel %vm275, %v1820, %v1822
      %v1824 = vrot.slane %v1716, 4
      %v1825 = vsel %vm275, %v1822, %v1824
      %v1826 = vrot.slane %v643, 4
      %v1827 = vsel %vm275, %v1824, %v1826
      %v1828 = vrot.slane %v1360, 4
      %v1829 = vsel %vm275, %v416, %v1828
      %v1830 = vrot.slane %v337, 4
      %v1831 = vsel %vm275, %v1828, %v1830
      %v1832 = vrot.slane %v1368, 4
      %v1833 = vsel %vm275, %v1830, %v1832
      %v1834 = vrot.slane %v457, 4
      %v1835 = vsel %vm275, %v1832, %v1834
      %v1836 = vrot.slane %v459, 4
      %v1837 = vsel %vm275, %v1834, %v1836
      %v1838 = vrot.slane %v527, 4
      %v1839 = vsel %vm275, %v1836, %v1838
      %v1840 = vrot.slane %v529, 4
      %v1841 = vsel %vm275, %v1838, %v1840
      %v1842 = vrot.slane %v531, 4
      %v1843 = vsel %vm275, %v1840, %v1842
      %v1844 = vrot.slane %v593, 4
      %v1845 = vsel %vm275, %v1842, %v1844
      %v1846 = vrot.slane %v1376, 4
      %v1847 = vsel %vm275, %v1844, %v1846
      %v1848 = vrot.slane %v1385, 4
      %v1849 = vsel %vm275, %v1846, %v1848
      %v1850 = vrot.slane %v1393, 4
      %v1851 = vsel %vm275, %v1848, %v1850
      %v1852 = vrot.slane %v770, 4
      %v1853 = vsel %vm275, %v1850, %v1852
      %v1854 = vrot.slane %v772, 4
      %v1855 = vsel %vm275, %v1852, %v1854
      %v1856 = vrot.slane %v1567, 4
      %v1857 = vsel %vm275, %v1854, %v1856
      %v1858 = vrot.slane %v1569, 4
      %v1859 = vsel %vm275, %v1856, %v1858
      %v1860 = vrot.slane %v1709, 4
      %v1861 = vsel %vm275, %v1858, %v1860
      %v1862 = vrot.slane %v1635, 4
      %v1863 = vsel %vm275, %v1860, %v1862
      %v1864 = vrot.slane %v1717, 4
      %v1865 = vsel %vm275, %v1862, %v1864
      %v1866 = vrot.slane %v647, 4
      %v1867 = vsel %vm275, %v1864, %v1866
      %v1868 = vrot.slane %v1361, 4
      %v1869 = vsel %vm275, %v420, %v1868
      %v1870 = vrot.slane %v343, 4
      %v1871 = vsel %vm275, %v1868, %v1870
      %v1872 = vrot.slane %v1369, 4
      %v1873 = vsel %vm275, %v1870, %v1872
      %v1874 = vrot.slane %v463, 4
      %v1875 = vsel %vm275, %v1872, %v1874
      %v1876 = vrot.slane %v465, 4
      %v1877 = vsel %vm275, %v1874, %v1876
      %v1878 = vrot.slane %v533, 4
      %v1879 = vsel %vm275, %v1876, %v1878
      %v1880 = vrot.slane %v535, 4
      %v1881 = vsel %vm275, %v1878, %v1880
      %v1882 = vrot.slane %v537, 4
      %v1883 = vsel %vm275, %v1880, %v1882
      %v1884 = vrot.slane %v597, 4
      %v1885 = vsel %vm275, %v1882, %v1884
      %v1886 = vrot.slane %v1377, 4
      %v1887 = vsel %vm275, %v1884, %v1886
      %v1888 = vrot.slane %v1386, 4
      %v1889 = vsel %vm275, %v1886, %v1888
      %v1890 = vrot.slane %v1394, 4
      %v1891 = vsel %vm275, %v1888, %v1890
      %v1892 = vrot.slane %v775, 4
      %v1893 = vsel %vm275, %v1890, %v1892
      %v1894 = vrot.slane %v777, 4
      %v1895 = vsel %vm275, %v1892, %v1894
      %v1896 = vrot.slane %v1573, 4
      %v1897 = vsel %vm275, %v1894, %v1896
      %v1898 = vrot.slane %v1575, 4
      %v1899 = vsel %vm275, %v1896, %v1898
      %v1900 = vrot.slane %v1710, 4
      %v1901 = vsel %vm275, %v1898, %v1900
      %v1902 = vrot.slane %v1641, 4
      %v1903 = vsel %vm275, %v1900, %v1902
      %v1904 = vrot.slane %v1718, 4
      %v1905 = vsel %vm275, %v1902, %v1904
      %v1906 = vrot.slane %v651, 4
      %v1907 = vsel %vm275, %v1904, %v1906
      %v1908 = vrot.slane %v1362, 4
      %v1909 = vsel %vm275, %v424, %v1908
      %v1910 = vrot.slane %v349, 4
      %v1911 = vsel %vm275, %v1908, %v1910
      %v1912 = vrot.slane %v1370, 4
      %v1913 = vsel %vm275, %v1910, %v1912
      %v1914 = vrot.slane %v469, 4
      %v1915 = vsel %vm275, %v1912, %v1914
      %v1916 = vrot.slane %v471, 4
      %v1917 = vsel %vm275, %v1914, %v1916
      %v1918 = vrot.slane %v539, 4
      %v1919 = vsel %vm275, %v1916, %v1918
      %v1920 = vrot.slane %v541, 4
      %v1921 = vsel %vm275, %v1918, %v1920
      %v1922 = vrot.slane %v543, 4
      %v1923 = vsel %vm275, %v1920, %v1922
      %v1924 = vrot.slane %v601, 4
      %v1925 = vsel %vm275, %v1922, %v1924
      %v1926 = vrot.slane %v1378, 4
      %v1927 = vsel %vm275, %v1924, %v1926
      %v1928 = vrot.slane %v1387, 4
      %v1929 = vsel %vm275, %v1926, %v1928
      %v1930 = vrot.slane %v1395, 4
      %v1931 = vsel %vm275, %v1928, %v1930
      %v1932 = vrot.slane %v780, 4
      %v1933 = vsel %vm275, %v1930, %v1932
      %v1934 = vrot.slane %v782, 4
      %v1935 = vsel %vm275, %v1932, %v1934
      %v1936 = vrot.slane %v1579, 4
      %v1937 = vsel %vm275, %v1934, %v1936
      %v1938 = vrot.slane %v1581, 4
      %v1939 = vsel %vm275, %v1936, %v1938
      %v1940 = vrot.slane %v1711, 4
      %v1941 = vsel %vm275, %v1938, %v1940
      %v1942 = vrot.slane %v1647, 4
      %v1943 = vsel %vm275, %v1940, %v1942
      %v1944 = vrot.slane %v1719, 4
      %v1945 = vsel %vm275, %v1942, %v1944
      %v1946 = vrot.slane %v655, 4
      %v1947 = vsel %vm275, %v1944, %v1946
      %v1948 = vrot.slane %v1363, 4
      %v1949 = vsel %vm275, %v428, %v1948
      %v1950 = vrot.slane %v355, 4
      %v1951 = vsel %vm275, %v1948, %v1950
      %v1952 = vrot.slane %v1371, 4
      %v1953 = vsel %vm275, %v1950, %v1952
      %v1954 = vrot.slane %v475, 4
      %v1955 = vsel %vm275, %v1952, %v1954
      %v1956 = vrot.slane %v477, 4
      %v1957 = vsel %vm275, %v1954, %v1956
      %v1958 = vrot.slane %v545, 4
      %v1959 = vsel %vm275, %v1956, %v1958
      %v1960 = vrot.slane %v547, 4
      %v1961 = vsel %vm275, %v1958, %v1960
      %v1962 = vrot.slane %v549, 4
      %v1963 = vsel %vm275, %v1960, %v1962
      %v1964 = vrot.slane %v605, 4
      %v1965 = vsel %vm275, %v1962, %v1964
      %v1966 = vrot.slane %v1379, 4
      %v1967 = vsel %vm275, %v1964, %v1966
      %v1968 = vrot.slane %v1388, 4
      %v1969 = vsel %vm275, %v1966, %v1968
      %v1970 = vrot.slane %v1396, 4
      %v1971 = vsel %vm275, %v1968, %v1970
      %v1972 = vrot.slane %v785, 4
      %v1973 = vsel %vm275, %v1970, %v1972
      %v1974 = vrot.slane %v787, 4
      %v1975 = vsel %vm275, %v1972, %v1974
      %v1976 = vrot.slane %v1585, 4
      %v1977 = vsel %vm275, %v1974, %v1976
      %v1978 = vrot.slane %v1587, 4
      %v1979 = vsel %vm275, %v1976, %v1978
      %v1980 = vrot.slane %v1712, 4
      %v1981 = vsel %vm275, %v1978, %v1980
      %v1982 = vrot.slane %v1653, 4
      %v1983 = vsel %vm275, %v1980, %v1982
      %v1984 = vrot.slane %v1720, 4
      %v1985 = vsel %vm275, %v1982, %v1984
      %v1986 = vrot.slane %v659, 4
      %v1987 = vsel %vm275, %v1984, %v1986
      %v1988 = vrot.slane %v1364, 4
      %v1989 = vsel %vm275, %v432, %v1988
      %v1990 = vrot.slane %v361, 4
      %v1991 = vsel %vm275, %v1988, %v1990
      %v1992 = vrot.slane %v1372, 4
      %v1993 = vsel %vm275, %v1990, %v1992
      %v1994 = vrot.slane %v481, 4
      %v1995 = vsel %vm275, %v1992, %v1994
      %v1996 = vrot.slane %v483, 4
      %v1997 = vsel %vm275, %v1994, %v1996
      %v1998 = vrot.slane %v551, 4
      %v1999 = vsel %vm275, %v1996, %v1998
      %v2000 = vrot.slane %v553, 4
      %v2001 = vsel %vm275, %v1998, %v2000
      %v2002 = vrot.slane %v555, 4
      %v2003 = vsel %vm275, %v2000, %v2002
      %v2004 = vrot.slane %v609, 4
      %v2005 = vsel %vm275, %v2002, %v2004
      %v2006 = vrot.slane %v1380, 4
      %v2007 = vsel %vm275, %v2004, %v2006
      %v2008 = vrot.slane %v1389, 4
      %v2009 = vsel %vm275, %v2006, %v2008
      %v2010 = vrot.slane %v1397, 4
      %v2011 = vsel %vm275, %v2008, %v2010
      %v2012 = vrot.slane %v790, 4
      %v2013 = vsel %vm275, %v2010, %v2012
      %v2014 = vrot.slane %v792, 4
      %v2015 = vsel %vm275, %v2012, %v2014
      %v2016 = vrot.slane %v1591, 4
      %v2017 = vsel %vm275, %v2014, %v2016
      %v2018 = vrot.slane %v1593, 4
      %v2019 = vsel %vm275, %v2016, %v2018
      %v2020 = vrot.slane %v1713, 4
      %v2021 = vsel %vm275, %v2018, %v2020
      %v2022 = vrot.slane %v1659, 4
      %v2023 = vsel %vm275, %v2020, %v2022
      %v2024 = vrot.slane %v1721, 4
      %v2025 = vsel %vm275, %v2022, %v2024
      %v2026 = vrot.slane %v1518, 4
      %v2027 = vsel %vm275, %v2024, %v2026
      %v2028 = vrot.slane %v1698, 4
      %v2029 = vsel %vm275, %v1469, %v2028
      %v2030 = vrot.slane %v1454, 4
      %v2031 = vsel %vm275, %v2028, %v2030
      %v2032 = vrot.slane %v1700, 4
      %v2033 = vsel %vm275, %v2030, %v2032
      %v2034 = vrot.slane %v1480, 4
      %v2035 = vsel %vm275, %v2032, %v2034
      %v2036 = vrot.slane %v1482, 4
      %v2037 = vsel %vm275, %v2034, %v2036
      %v2038 = vrot.slane %v1492, 4
      %v2039 = vsel %vm275, %v2036, %v2038
      %v2040 = vrot.slane %v1494, 4
      %v2041 = vsel %vm275, %v2038, %v2040
      %v2042 = vrot.slane %v1496, 4
      %v2043 = vsel %vm275, %v2040, %v2042
      %v2044 = vrot.slane %v1506, 4
      %v2045 = vsel %vm275, %v2042, %v2044
      %v2046 = vrot.slane %v1702, 4
      %v2047 = vsel %vm275, %v2044, %v2046
      %v2048 = vrot.slane %v1704, 4
      %v2049 = vsel %vm275, %v2046, %v2048
      %v2050 = vrot.slane %v1706, 4
      %v2051 = vsel %vm275, %v2048, %v2050
      %v2052 = vrot.slane %v1550, 4
      %v2053 = vsel %vm275, %v2050, %v2052
      %v2054 = vrot.slane %v1552, 4
      %v2055 = vsel %vm275, %v2052, %v2054
      %v2056 = vrot.slane %v1597, 4
      %v2057 = vsel %vm275, %v2054, %v2056
      %v2058 = vrot.slane %v1599, 4
      %v2059 = vsel %vm275, %v2056, %v2058
      %v2060 = vrot.slane %v1714, 4
      %v2061 = vsel %vm275, %v2058, %v2060
      %v2062 = vrot.slane %v1665, 4
      %v2063 = vsel %vm275, %v2060, %v2062
      %v2064 = vrot.slane %v1722, 4
      %v2065 = vsel %vm275, %v2062, %v2064
      %v2066 = vrot.slane %v1522, 4
      %v2067 = vsel %vm275, %v2064, %v2066
      %v2068 = vrot.slane %v1699, 4
      %v2069 = vsel %vm275, %v1473, %v2068
      %v2070 = vrot.slane %v1460, 4
      %v2071 = vsel %vm275, %v2068, %v2070
      %v2072 = vrot.slane %v1701, 4
      %v2073 = vsel %vm275, %v2070, %v2072
      %v2074 = vrot.slane %v1486, 4
      %v2075 = vsel %vm275, %v2072, %v2074
      %v2076 = vrot.slane %v1488, 4
      %v2077 = vsel %vm275, %v2074, %v2076
      %v2078 = vrot.slane %v1498, 4
      %v2079 = vsel %vm275, %v2076, %v2078
      %v2080 = vrot.slane %v1500, 4
      %v2081 = vsel %vm275, %v2078, %v2080
      %v2082 = vrot.slane %v1502, 4
      %v2083 = vsel %vm275, %v2080, %v2082
      %v2084 = vrot.slane %v1510, 4
      %v2085 = vsel %vm275, %v2082, %v2084
      %v2086 = vrot.slane %v1703, 4
      %v2087 = vsel %vm275, %v2084, %v2086
      %v2088 = vrot.slane %v1705, 4
      %v2089 = vsel %vm275, %v2086, %v2088
      %v2090 = vrot.slane %v1707, 4
      %v2091 = vsel %vm275, %v2088, %v2090
      %v2092 = vrot.slane %v1555, 4
      %v2093 = vsel %vm275, %v2090, %v2092
      %v2094 = vrot.slane %v1557, 4
      %v2095 = vsel %vm275, %v2092, %v2094
      %v2096 = vrot.slane %v1603, 4
      %v2097 = vsel %vm275, %v2094, %v2096
      %v2098 = vrot.slane %v1605, 4
      %v2099 = vsel %vm275, %v2096, %v2098
      %v2100 = vrot.slane %v1715, 4
      %v2101 = vsel %vm275, %v2098, %v2100
      %v2102 = vrot.slane %v1671, 4
      %v2103 = vsel %vm275, %v2100, %v2102
      %v2104 = vrot.slane %v1723, 4
      %v2105 = vsel %vm275, %v2102, %v2104
      %v2106 = vrot.slane %v1696, 4
      %v2107 = vsel %vm275, %v2104, %v2106
      %v2300 = vsel %vm275, %v1312, %v286
      %v2301 = vsel %vm275, %v1316, %v291
      %v2302 = vsel %vm275, %v1320, %v296
      %v2303 = vsel %vm275, %v1324, %v301
      %v2304 = vsel %vm275, %v1328, %v306
      %v2305 = vsel %vm275, %v1332, %v311
      %v2306 = vsel %vm275, %v1336, %v1441
      %v2307 = vsel %vm275, %v1340, %v1446
      %v2308 = vld [vmem:[%s1] sm:$0xff]
      %v2309 = vld [vmem:[%s1 + $0x8] sm:$0xff]
      %v2310 = vld [vmem:[%s1 + $0x10] sm:$0xff]
      %v2311 = vld [vmem:[%s1 + $0x18] sm:$0xff]
      %v2312 = vld [vmem:[%s2] sm:$0xff]
      %2314 = vset.pattern.permute.xlu0 0
      %2315 = vperm.xlu0 %2314, %v2312
      %v2316 = vpop.permute.xlu0 %2315
      %vm2318 = vcmask 465920
      %v2320 = vsel %vm2318, %v2311, 0
      %v2322 = vsel %vm1284, %v1826, 0
      %2324 = vmatprep.subr.mxu0 0.0
      %2325 = vmatpush1.msra.mxu0 %v1390
      %2326 = vmatprep.subr.mxu0 0.0
      %2327 = vmatpush1.msra.mxu0 %v1382
      %2328 = vmatprep.subr.mxu0 0.0
      %2329 = vmatpush1.msra.mxu0 %v1373
      %2330 = vmatprep.subr.mxu0 0.0
      %2331 = vmatpush1.msra.mxu0 %v581
      %2332 = vmatprep.subr.mxu0 0.0
      %2333 = vmatpush1.msra.mxu0 %v513
      %2334 = vmatprep.subr.mxu0 0.0
      %2335 = vmatpush1.msra.mxu0 %v511
      %2336 = vmatprep.subr.mxu0 0.0
      %2337 = vmatpush1.msra.mxu0 %v509
      %2338 = vmatprep.subr.mxu0 0.0
      %2339 = vmatpush1.msra.mxu0 %v441
      %2340 = vmatprep.subr.mxu0 0.0
      %2341 = vmatpush1.msra.mxu0 %v439
      %2342 = vmatprep.subr.mxu0 0.0
      %2343 = vmatpush1.msra.mxu0 %v1365
      %2344 = vmatprep.subr.mxu0 0.0
      %2345 = vmatpush1.msra.mxu0 %v319
      %2346 = vmatprep.subr.mxu0 0.0
      %2347 = vmatpush1.msra.mxu0 %v1357
      %2348 = vmatprep.subr.mxu0 0.0
      %2349 = vmatpush1.msra.mxu0 %v201
      %2350 = vmatprep.subr.mxu0 0.0
      %2351 = vmatpush1.msra.mxu0 %v200
      %2352 = vmatprep.subr.mxu0 0.0
      %2353 = vmatpush1.msra.mxu0 %v199
      %2354 = vmatprep.subr.mxu0 0.0
      %2355 = vmatpush1.msra.mxu0 %v198
      %2356 = vmatprep.subr.mxu0 0.0
      %2357 = vmatpush2.msra.mxu0 %v2300
      %2358 = vmatprep.subr.mxu0 0.0
      %2359 = vmatpush2.msra.mxu0 %v1430
      %2360 = vmatprep.subr.mxu0 0.0
      %2361 = vmatpush2.msra.mxu0 %v1422
      %2362 = vmatprep.subr.mxu0 0.0
      %2363 = vmatpush2.msra.mxu0 %v1167
      %2364 = vmatprep.subr.mxu0 0.0
      %2365 = vmatpush2.msra.mxu0 %v1165
      %2366 = vmatprep.subr.mxu0 0.0
      %2367 = vmatpush2.msra.mxu0 %v1097
      %2368 = vmatprep.subr.mxu0 0.0
      %2369 = vmatpush2.msra.mxu0 %v1095
      %2370 = vmatprep.subr.mxu0 0.0
      %2371 = vmatpush2.msra.mxu0 %v1414
      %2372 = vmatprep.subr.mxu0 0.0
      %2373 = vmatpush2.msra.mxu0 %v1023
      %2374 = vmatprep.subr.mxu0 0.0
      %2375 = vmatpush2.msra.mxu0 %v1406
      %2376 = vmatprep.subr.mxu0 0.0
      %2377 = vmatpush2.msra.mxu0 %v919
      %2378 = vmatprep.subr.mxu0 0.0
      %2379 = vmatpush2.msra.mxu0 %v1398
      %2380 = vmatprep.subr.mxu0 0.0
      %2381 = vmatpush2.msra.mxu0 %v822
      %2382 = vmatprep.subr.mxu0 0.0
      %2383 = vmatpush2.msra.mxu0 %v820
      %2384 = vmatprep.subr.mxu0 0.0
      %2385 = vmatpush2.msra.mxu0 %v757
      %2386 = vmatprep.subr.mxu0 0.0
      %2387 = vmatpush2.msra.mxu0 %v755
      %2388 = vmatprep.mubr.f32.mxu0 %v2309
      %2389 = vmatmul.mubr.f32.gmra.mxu0 %v2308
      %v2390 = vpop.f32.mrf.mxu0
      %v2391 = vadd.f32 %v2316, %v2390
      %v2392 = vpop.f32.mrf.mxu0
      %2393 = vdwg.mxu0
      %2394 = vmatprep.subr.mxu0 0.0
      %2395 = vmatpush1.msra.mxu0 %v1813
      %2396 = vmatprep.subr.mxu0 0.0
      %2397 = vmatpush1.msra.mxu0 %v1811
      %2398 = vmatprep.subr.mxu0 0.0
      %2399 = vmatpush1.msra.mxu0 %v1809
      %2400 = vmatprep.subr.mxu0 0.0
      %2401 = vmatpush1.msra.mxu0 %v1807
      %2402 = vmatprep.subr.mxu0 0.0
      %2403 = vmatpush1.msra.mxu0 %v1805
      %2404 = vmatprep.subr.mxu0 0.0
      %2405 = vmatpush1.msra.mxu0 %v1803
      %2406 = vmatprep.subr.mxu0 0.0
      %2407 = vmatpush1.msra.mxu0 %v1801
      %2408 = vmatprep.subr.mxu0 0.0
      %2409 = vmatpush1.msra.mxu0 %v1799
      %2410 = vmatprep.subr.mxu0 0.0
      %2411 = vmatpush1.msra.mxu0 %v1797
      %2412 = vmatprep.subr.mxu0 0.0
      %2413 = vmatpush1.msra.mxu0 %v1795
      %2414 = vmatprep.subr.mxu0 0.0
      %2415 = vmatpush1.msra.mxu0 %v1793
      %2416 = vmatprep.subr.mxu0 0.0
      %2417 = vmatpush1.msra.mxu0 %v1791
      %2418 = vmatprep.subr.mxu0 0.0
      %2419 = vmatpush1.msra.mxu0 %v1789
      %2420 = vmatprep.subr.mxu0 0.0
      %2421 = vmatpush1.msra.mxu0 %v413
      %2422 = vmatprep.subr.mxu0 0.0
      %2423 = vmatpush1.msra.mxu0 %v290
      %2424 = vmatprep.subr.mxu0 0.0
      %2425 = vmatpush1.msra.mxu0 %v288
      %2426 = vmatprep.subr.mxu0 0.0
      %2427 = vmatpush2.msra.mxu0 0.0
      %2428 = vmatprep.subr.mxu0 0.0
      %2429 = vmatpush2.msra.mxu0 0.0
      %2430 = vmatprep.subr.mxu0 0.0
      %2431 = vmatpush2.msra.mxu0 0.0
      %2432 = vmatprep.subr.mxu0 0.0
      %2433 = vmatpush2.msra.mxu0 0.0
      %2434 = vmatprep.subr.mxu0 0.0
      %2435 = vmatpush2.msra.mxu0 0.0
      %2436 = vmatprep.subr.mxu0 0.0
      %2437 = vmatpush2.msra.mxu0 0.0
      %2438 = vmatprep.subr.mxu0 0.0
      %2439 = vmatpush2.msra.mxu0 0.0
      %2440 = vmatprep.subr.mxu0 0.0
      %2441 = vmatpush2.msra.mxu0 0.0
      %2442 = vmatprep.subr.mxu0 0.0
      %2443 = vmatpush2.msra.mxu0 %v2322
      %2444 = vmatprep.subr.mxu0 0.0
      %2445 = vmatpush2.msra.mxu0 %v1827
      %2446 = vmatprep.subr.mxu0 0.0
      %2447 = vmatpush2.msra.mxu0 %v1825
      %2448 = vmatprep.subr.mxu0 0.0
      %2449 = vmatpush2.msra.mxu0 %v1823
      %2450 = vmatprep.subr.mxu0 0.0
      %2451 = vmatpush2.msra.mxu0 %v1821
      %2452 = vmatprep.subr.mxu0 0.0
      %2453 = vmatpush2.msra.mxu0 %v1819
      %2454 = vmatprep.subr.mxu0 0.0
      %2455 = vmatpush2.msra.mxu0 %v1817
      %2456 = vmatprep.subr.mxu0 0.0
      %2457 = vmatpush2.msra.mxu0 %v1815
      %2458 = vmatprep.mubr.f32.mxu0 %v2320
      %2459 = vmatmul.mubr.f32.gmra.mxu0 %v2310
      %v2460 = vpop.f32.mrf.mxu0
      %v2461 = vadd.f32 %v2391, %v2460
      %v2462 = vpop.f32.mrf.mxu0
      %2463 = vdwg.mxu0
      %v2464 = vsel %vm1284, %v1866, 0
      %2466 = vmatprep.subr.mxu0 0.0
      %2467 = vmatpush1.msra.mxu0 %v1391
      %2468 = vmatprep.subr.mxu0 0.0
      %2469 = vmatpush1.msra.mxu0 %v1383
      %2470 = vmatprep.subr.mxu0 0.0
      %2471 = vmatpush1.msra.mxu0 %v1374
      %2472 = vmatprep.subr.mxu0 0.0
      %2473 = vmatpush1.msra.mxu0 %v585
      %2474 = vmatprep.subr.mxu0 0.0
      %2475 = vmatpush1.msra.mxu0 %v519
      %2476 = vmatprep.subr.mxu0 0.0
      %2477 = vmatpush1.msra.mxu0 %v517
      %2478 = vmatprep.subr.mxu0 0.0
      %2479 = vmatpush1.msra.mxu0 %v515
      %2480 = vmatprep.subr.mxu0 0.0
      %2481 = vmatpush1.msra.mxu0 %v447
      %2482 = vmatprep.subr.mxu0 0.0
      %2483 = vmatpush1.msra.mxu0 %v445
      %2484 = vmatprep.subr.mxu0 0.0
      %2485 = vmatpush1.msra.mxu0 %v1366
      %2486 = vmatprep.subr.mxu0 0.0
      %2487 = vmatpush1.msra.mxu0 %v325
      %2488 = vmatprep.subr.mxu0 0.0
      %2489 = vmatpush1.msra.mxu0 %v1358
      %2490 = vmatprep.subr.mxu0 0.0
      %2491 = vmatpush1.msra.mxu0 %v206
      %2492 = vmatprep.subr.mxu0 0.0
      %2493 = vmatpush1.msra.mxu0 %v205
      %2494 = vmatprep.subr.mxu0 0.0
      %2495 = vmatpush1.msra.mxu0 %v204
      %2496 = vmatprep.subr.mxu0 0.0
      %2497 = vmatpush1.msra.mxu0 %v203
      %2498 = vmatprep.subr.mxu0 0.0
      %2499 = vmatpush2.msra.mxu0 %v2301
      %2500 = vmatprep.subr.mxu0 0.0
      %2501 = vmatpush2.msra.mxu0 %v1431
      %2502 = vmatprep.subr.mxu0 0.0
      %2503 = vmatpush2.msra.mxu0 %v1423
      %2504 = vmatprep.subr.mxu0 0.0
      %2505 = vmatpush2.msra.mxu0 %v1173
      %2506 = vmatprep.subr.mxu0 0.0
      %2507 = vmatpush2.msra.mxu0 %v1171
      %2508 = vmatprep.subr.mxu0 0.0
      %2509 = vmatpush2.msra.mxu0 %v1103
      %2510 = vmatprep.subr.mxu0 0.0
      %2511 = vmatpush2.msra.mxu0 %v1101
      %2512 = vmatprep.subr.mxu0 0.0
      %2513 = vmatpush2.msra.mxu0 %v1415
      %2514 = vmatprep.subr.mxu0 0.0
      %2515 = vmatpush2.msra.mxu0 %v1029
      %2516 = vmatprep.subr.mxu0 0.0
      %2517 = vmatpush2.msra.mxu0 %v1407
      %2518 = vmatprep.subr.mxu0 0.0
      %2519 = vmatpush2.msra.mxu0 %v925
      %2520 = vmatprep.subr.mxu0 0.0
      %2521 = vmatpush2.msra.mxu0 %v1399
      %2522 = vmatprep.subr.mxu0 0.0
      %2523 = vmatpush2.msra.mxu0 %v826
      %2524 = vmatprep.subr.mxu0 0.0
      %2525 = vmatpush2.msra.mxu0 %v824
      %2526 = vmatprep.subr.mxu0 0.0
      %2527 = vmatpush2.msra.mxu0 %v762
      %2528 = vmatprep.subr.mxu0 0.0
      %2529 = vmatpush2.msra.mxu0 %v760
      %2530 = vmatprep.mubr.f32.mxu0 %v2309
      %2531 = vmatmul.mubr.f32.gmra.mxu0 %v2308
      %v2532 = vpop.f32.mrf.mxu0
      %v2533 = vadd.f32 %v2316, %v2532
      %v2534 = vpop.f32.mrf.mxu0
      %2535 = vdwg.mxu0
      %2536 = vmatprep.subr.mxu0 0.0
      %2537 = vmatpush1.msra.mxu0 %v1853
      %2538 = vmatprep.subr.mxu0 0.0
      %2539 = vmatpush1.msra.mxu0 %v1851
      %2540 = vmatprep.subr.mxu0 0.0
      %2541 = vmatpush1.msra.mxu0 %v1849
      %2542 = vmatprep.subr.mxu0 0.0
      %2543 = vmatpush1.msra.mxu0 %v1847
      %2544 = vmatprep.subr.mxu0 0.0
      %2545 = vmatpush1.msra.mxu0 %v1845
      %2546 = vmatprep.subr.mxu0 0.0
      %2547 = vmatpush1.msra.mxu0 %v1843
      %2548 = vmatprep.subr.mxu0 0.0
      %2549 = vmatpush1.msra.mxu0 %v1841
      %2550 = vmatprep.subr.mxu0 0.0
      %2551 = vmatpush1.msra.mxu0 %v1839
      %2552 = vmatprep.subr.mxu0 0.0
      %2553 = vmatpush1.msra.mxu0 %v1837
      %2554 = vmatprep.subr.mxu0 0.0
      %2555 = vmatpush1.msra.mxu0 %v1835
      %2556 = vmatprep.subr.mxu0 0.0
      %2557 = vmatpush1.msra.mxu0 %v1833
      %2558 = vmatprep.subr.mxu0 0.0
      %2559 = vmatpush1.msra.mxu0 %v1831
      %2560 = vmatprep.subr.mxu0 0.0
      %2561 = vmatpush1.msra.mxu0 %v1829
      %2562 = vmatprep.subr.mxu0 0.0
      %2563 = vmatpush1.msra.mxu0 %v417
      %2564 = vmatprep.subr.mxu0 0.0
      %2565 = vmatpush1.msra.mxu0 %v295
      %2566 = vmatprep.subr.mxu0 0.0
      %2567 = vmatpush1.msra.mxu0 %v293
      %2568 = vmatprep.subr.mxu0 0.0
      %2569 = vmatpush2.msra.mxu0 0.0
      %2570 = vmatprep.subr.mxu0 0.0
      %2571 = vmatpush2.msra.mxu0 0.0
      %2572 = vmatprep.subr.mxu0 0.0
      %2573 = vmatpush2.msra.mxu0 0.0
      %2574 = vmatprep.subr.mxu0 0.0
      %2575 = vmatpush2.msra.mxu0 0.0
      %2576 = vmatprep.subr.mxu0 0.0
      %2577 = vmatpush2.msra.mxu0 0.0
      %2578 = vmatprep.subr.mxu0 0.0
      %2579 = vmatpush2.msra.mxu0 0.0
      %2580 = vmatprep.subr.mxu0 0.0
      %2581 = vmatpush2.msra.mxu0 0.0
      %2582 = vmatprep.subr.mxu0 0.0
      %2583 = vmatpush2.msra.mxu0 0.0
      %2584 = vmatprep.subr.mxu0 0.0
      %2585 = vmatpush2.msra.mxu0 %v2464
      %2586 = vmatprep.subr.mxu0 0.0
      %2587 = vmatpush2.msra.mxu0 %v1867
      %2588 = vmatprep.subr.mxu0 0.0
      %2589 = vmatpush2.msra.mxu0 %v1865
      %2590 = vmatprep.subr.mxu0 0.0
      %2591 = vmatpush2.msra.mxu0 %v1863
      %2592 = vmatprep.subr.mxu0 0.0
      %2593 = vmatpush2.msra.mxu0 %v1861
      %2594 = vmatprep.subr.mxu0 0.0
      %2595 = vmatpush2.msra.mxu0 %v1859
      %2596 = vmatprep.subr.mxu0 0.0
      %2597 = vmatpush2.msra.mxu0 %v1857
      %2598 = vmatprep.subr.mxu0 0.0
      %2599 = vmatpush2.msra.mxu0 %v1855
      %2600 = vmatprep.mubr.f32.mxu0 %v2320
      %2601 = vmatmul.mubr.f32.gmra.mxu0 %v2310
      %v2602 = vpop.f32.mrf.mxu0
      %v2603 = vadd.f32 %v2533, %v2602
      %v2604 = vpop.f32.mrf.mxu0
      %2605 = vdwg.mxu0
      %v2606 = vsel %vm1284, %v1906, 0
      %2608 = vmatprep.subr.mxu0 0.0
      %2609 = vmatpush1.msra.mxu0 %v1392
      %2610 = vmatprep.subr.mxu0 0.0
      %2611 = vmatpush1.msra.mxu0 %v1384
      %2612 = vmatprep.subr.mxu0 0.0
      %2613 = vmatpush1.msra.mxu0 %v1375
      %2614 = vmatprep.subr.mxu0 0.0
      %2615 = vmatpush1.msra.mxu0 %v589
      %2616 = vmatprep.subr.mxu0 0.0
      %2617 = vmatpush1.msra.mxu0 %v525
      %2618 = vmatprep.subr.mxu0 0.0
      %2619 = vmatpush1.msra.mxu0 %v523
      %2620 = vmatprep.subr.mxu0 0.0
      %2621 = vmatpush1.msra.mxu0 %v521
      %2622 = vmatprep.subr.mxu0 0.0
      %2623 = vmatpush1.msra.mxu0 %v453
      %2624 = vmatprep.subr.mxu0 0.0
      %2625 = vmatpush1.msra.mxu0 %v451
      %2626 = vmatprep.subr.mxu0 0.0
      %2627 = vmatpush1.msra.mxu0 %v1367
      %2628 = vmatprep.subr.mxu0 0.0
      %2629 = vmatpush1.msra.mxu0 %v331
      %2630 = vmatprep.subr.mxu0 0.0
      %2631 = vmatpush1.msra.mxu0 %v1359
      %2632 = vmatprep.subr.mxu0 0.0
      %2633 = vmatpush1.msra.mxu0 %v211
      %2634 = vmatprep.subr.mxu0 0.0
      %2635 = vmatpush1.msra.mxu0 %v210
      %2636 = vmatprep.subr.mxu0 0.0
      %2637 = vmatpush1.msra.mxu0 %v209
      %2638 = vmatprep.subr.mxu0 0.0
      %2639 = vmatpush1.msra.mxu0 %v208
      %2640 = vmatprep.subr.mxu0 0.0
      %2641 = vmatpush2.msra.mxu0 %v2302
      %2642 = vmatprep.subr.mxu0 0.0
      %2643 = vmatpush2.msra.mxu0 %v1432
      %2644 = vmatprep.subr.mxu0 0.0
      %2645 = vmatpush2.msra.mxu0 %v1424
      %2646 = vmatprep.subr.mxu0 0.0
      %2647 = vmatpush2.msra.mxu0 %v1179
      %2648 = vmatprep.subr.mxu0 0.0
      %2649 = vmatpush2.msra.mxu0 %v1177
      %2650 = vmatprep.subr.mxu0 0.0
      %2651 = vmatpush2.msra.mxu0 %v1109
      %2652 = vmatprep.subr.mxu0 0.0
      %2653 = vmatpush2.msra.mxu0 %v1107
      %2654 = vmatprep.subr.mxu0 0.0
      %2655 = vmatpush2.msra.mxu0 %v1416
      %2656 = vmatprep.subr.mxu0 0.0
      %2657 = vmatpush2.msra.mxu0 %v1035
      %2658 = vmatprep.subr.mxu0 0.0
      %2659 = vmatpush2.msra.mxu0 %v1408
      %2660 = vmatprep.subr.mxu0 0.0
      %2661 = vmatpush2.msra.mxu0 %v931
      %2662 = vmatprep.subr.mxu0 0.0
      %2663 = vmatpush2.msra.mxu0 %v1400
      %2664 = vmatprep.subr.mxu0 0.0
      %2665 = vmatpush2.msra.mxu0 %v830
      %2666 = vmatprep.subr.mxu0 0.0
      %2667 = vmatpush2.msra.mxu0 %v828
      %2668 = vmatprep.subr.mxu0 0.0
      %2669 = vmatpush2.msra.mxu0 %v767
      %2670 = vmatprep.subr.mxu0 0.0
      %2671 = vmatpush2.msra.mxu0 %v765
      %2672 = vmatprep.mubr.f32.mxu0 %v2309
      %2673 = vmatmul.mubr.f32.gmra.mxu0 %v2308
      %v2674 = vpop.f32.mrf.mxu0
      %v2675 = vadd.f32 %v2316, %v2674
      %v2676 = vpop.f32.mrf.mxu0
      %2677 = vdwg.mxu0
      %2678 = vmatprep.subr.mxu0 0.0
      %2679 = vmatpush1.msra.mxu0 %v1893
      %2680 = vmatprep.subr.mxu0 0.0
      %2681 = vmatpush1.msra.mxu0 %v1891
      %2682 = vmatprep.subr.mxu0 0.0
      %2683 = vmatpush1.msra.mxu0 %v1889
      %2684 = vmatprep.subr.mxu0 0.0
      %2685 = vmatpush1.msra.mxu0 %v1887
      %2686 = vmatprep.subr.mxu0 0.0
      %2687 = vmatpush1.msra.mxu0 %v1885
      %2688 = vmatprep.subr.mxu0 0.0
      %2689 = vmatpush1.msra.mxu0 %v1883
      %2690 = vmatprep.subr.mxu0 0.0
      %2691 = vmatpush1.msra.mxu0 %v1881
      %2692 = vmatprep.subr.mxu0 0.0
      %2693 = vmatpush1.msra.mxu0 %v1879
      %2694 = vmatprep.subr.mxu0 0.0
      %2695 = vmatpush1.msra.mxu0 %v1877
      %2696 = vmatprep.subr.mxu0 0.0
      %2697 = vmatpush1.msra.mxu0 %v1875
      %2698 = vmatprep.subr.mxu0 0.0
      %2699 = vmatpush1.msra.mxu0 %v1873
      %2700 = vmatprep.subr.mxu0 0.0
      %2701 = vmatpush1.msra.mxu0 %v1871
      %2702 = vmatprep.subr.mxu0 0.0
      %2703 = vmatpush1.msra.mxu0 %v1869
      %2704 = vmatprep.subr.mxu0 0.0
      %2705 = vmatpush1.msra.mxu0 %v421
      %2706 = vmatprep.subr.mxu0 0.0
      %2707 = vmatpush1.msra.mxu0 %v300
      %2708 = vmatprep.subr.mxu0 0.0
      %2709 = vmatpush1.msra.mxu0 %v298
      %2710 = vmatprep.subr.mxu0 0.0
      %2711 = vmatpush2.msra.mxu0 0.0
      %2712 = vmatprep.subr.mxu0 0.0
      %2713 = vmatpush2.msra.mxu0 0.0
      %2714 = vmatprep.subr.mxu0 0.0
      %2715 = vmatpush2.msra.mxu0 0.0
      %2716 = vmatprep.subr.mxu0 0.0
      %2717 = vmatpush2.msra.mxu0 0.0
      %2718 = vmatprep.subr.mxu0 0.0
      %2719 = vmatpush2.msra.mxu0 0.0
      %2720 = vmatprep.subr.mxu0 0.0
      %2721 = vmatpush2.msra.mxu0 0.0
      %2722 = vmatprep.subr.mxu0 0.0
      %2723 = vmatpush2.msra.mxu0 0.0
      %2724 = vmatprep.subr.mxu0 0.0
      %2725 = vmatpush2.msra.mxu0 0.0
      %2726 = vmatprep.subr.mxu0 0.0
      %2727 = vmatpush2.msra.mxu0 %v2606
      %2728 = vmatprep.subr.mxu0 0.0
      %2729 = vmatpush2.msra.mxu0 %v1907
      %2730 = vmatprep.subr.mxu0 0.0
      %2731 = vmatpush2.msra.mxu0 %v1905
      %2732 = vmatprep.subr.mxu0 0.0
      %2733 = vmatpush2.msra.mxu0 %v1903
      %2734 = vmatprep.subr.mxu0 0.0
      %2735 = vmatpush2.msra.mxu0 %v1901
      %2736 = vmatprep.subr.mxu0 0.0
      %2737 = vmatpush2.msra.mxu0 %v1899
      %2738 = vmatprep.subr.mxu0 0.0
      %2739 = vmatpush2.msra.mxu0 %v1897
      %2740 = vmatprep.subr.mxu0 0.0
      %2741 = vmatpush2.msra.mxu0 %v1895
      %2742 = vmatprep.mubr.f32.mxu0 %v2320
      %2743 = vmatmul.mubr.f32.gmra.mxu0 %v2310
      %v2744 = vpop.f32.mrf.mxu0
      %v2745 = vadd.f32 %v2675, %v2744
      %v2746 = vpop.f32.mrf.mxu0
      %2747 = vdwg.mxu0
      %v2748 = vsel %vm1284, %v1946, 0
      %2750 = vmatprep.subr.mxu0 0.0
      %2751 = vmatpush1.msra.mxu0 %v1393
      %2752 = vmatprep.subr.mxu0 0.0
      %2753 = vmatpush1.msra.mxu0 %v1385
      %2754 = vmatprep.subr.mxu0 0.0
      %2755 = vmatpush1.msra.mxu0 %v1376
      %2756 = vmatprep.subr.mxu0 0.0
      %2757 = vmatpush1.msra.mxu0 %v593
      %2758 = vmatprep.subr.mxu0 0.0
      %2759 = vmatpush1.msra.mxu0 %v531
      %2760 = vmatprep.subr.mxu0 0.0
      %2761 = vmatpush1.msra.mxu0 %v529
      %2762 = vmatprep.subr.mxu0 0.0
      %2763 = vmatpush1.msra.mxu0 %v527
      %2764 = vmatprep.subr.mxu0 0.0
      %2765 = vmatpush1.msra.mxu0 %v459
      %2766 = vmatprep.subr.mxu0 0.0
      %2767 = vmatpush1.msra.mxu0 %v457
      %2768 = vmatprep.subr.mxu0 0.0
      %2769 = vmatpush1.msra.mxu0 %v1368
      %2770 = vmatprep.subr.mxu0 0.0
      %2771 = vmatpush1.msra.mxu0 %v337
      %2772 = vmatprep.subr.mxu0 0.0
      %2773 = vmatpush1.msra.mxu0 %v1360
      %2774 = vmatprep.subr.mxu0 0.0
      %2775 = vmatpush1.msra.mxu0 %v216
      %2776 = vmatprep.subr.mxu0 0.0
      %2777 = vmatpush1.msra.mxu0 %v215
      %2778 = vmatprep.subr.mxu0 0.0
      %2779 = vmatpush1.msra.mxu0 %v214
      %2780 = vmatprep.subr.mxu0 0.0
      %2781 = vmatpush1.msra.mxu0 %v213
      %2782 = vmatprep.subr.mxu0 0.0
      %2783 = vmatpush2.msra.mxu0 %v2303
      %2784 = vmatprep.subr.mxu0 0.0
      %2785 = vmatpush2.msra.mxu0 %v1433
      %2786 = vmatprep.subr.mxu0 0.0
      %2787 = vmatpush2.msra.mxu0 %v1425
      %2788 = vmatprep.subr.mxu0 0.0
      %2789 = vmatpush2.msra.mxu0 %v1185
      %2790 = vmatprep.subr.mxu0 0.0
      %2791 = vmatpush2.msra.mxu0 %v1183
      %2792 = vmatprep.subr.mxu0 0.0
      %2793 = vmatpush2.msra.mxu0 %v1115
      %2794 = vmatprep.subr.mxu0 0.0
      %2795 = vmatpush2.msra.mxu0 %v1113
      %2796 = vmatprep.subr.mxu0 0.0
      %2797 = vmatpush2.msra.mxu0 %v1417
      %2798 = vmatprep.subr.mxu0 0.0
      %2799 = vmatpush2.msra.mxu0 %v1041
      %2800 = vmatprep.subr.mxu0 0.0
      %2801 = vmatpush2.msra.mxu0 %v1409
      %2802 = vmatprep.subr.mxu0 0.0
      %2803 = vmatpush2.msra.mxu0 %v937
      %2804 = vmatprep.subr.mxu0 0.0
      %2805 = vmatpush2.msra.mxu0 %v1401
      %2806 = vmatprep.subr.mxu0 0.0
      %2807 = vmatpush2.msra.mxu0 %v834
      %2808 = vmatprep.subr.mxu0 0.0
      %2809 = vmatpush2.msra.mxu0 %v832
      %2810 = vmatprep.subr.mxu0 0.0
      %2811 = vmatpush2.msra.mxu0 %v772
      %2812 = vmatprep.subr.mxu0 0.0
      %2813 = vmatpush2.msra.mxu0 %v770
      %2814 = vmatprep.mubr.f32.mxu0 %v2309
      %2815 = vmatmul.mubr.f32.gmra.mxu0 %v2308
      %v2816 = vpop.f32.mrf.mxu0
      %v2817 = vadd.f32 %v2316, %v2816
      %v2818 = vpop.f32.mrf.mxu0
      %2819 = vdwg.mxu0
      %2820 = vmatprep.subr.mxu0 0.0
      %2821 = vmatpush1.msra.mxu0 %v1933
      %2822 = vmatprep.subr.mxu0 0.0
      %2823 = vmatpush1.msra.mxu0 %v1931
      %2824 = vmatprep.subr.mxu0 0.0
      %2825 = vmatpush1.msra.mxu0 %v1929
      %2826 = vmatprep.subr.mxu0 0.0
      %2827 = vmatpush1.msra.mxu0 %v1927
      %2828 = vmatprep.subr.mxu0 0.0
      %2829 = vmatpush1.msra.mxu0 %v1925
      %2830 = vmatprep.subr.mxu0 0.0
      %2831 = vmatpush1.msra.mxu0 %v1923
      %2832 = vmatprep.subr.mxu0 0.0
      %2833 = vmatpush1.msra.mxu0 %v1921
      %2834 = vmatprep.subr.mxu0 0.0
      %2835 = vmatpush1.msra.mxu0 %v1919
      %2836 = vmatprep.subr.mxu0 0.0
      %2837 = vmatpush1.msra.mxu0 %v1917
      %2838 = vmatprep.subr.mxu0 0.0
      %2839 = vmatpush1.msra.mxu0 %v1915
      %2840 = vmatprep.subr.mxu0 0.0
      %2841 = vmatpush1.msra.mxu0 %v1913
      %2842 = vmatprep.subr.mxu0 0.0
      %2843 = vmatpush1.msra.mxu0 %v1911
      %2844 = vmatprep.subr.mxu0 0.0
      %2845 = vmatpush1.msra.mxu0 %v1909
      %2846 = vmatprep.subr.mxu0 0.0
      %2847 = vmatpush1.msra.mxu0 %v425
      %2848 = vmatprep.subr.mxu0 0.0
      %2849 = vmatpush1.msra.mxu0 %v305
      %2850 = vmatprep.subr.mxu0 0.0
      %2851 = vmatpush1.msra.mxu0 %v303
      %2852 = vmatprep.subr.mxu0 0.0
      %2853 = vmatpush2.msra.mxu0 0.0
      %2854 = vmatprep.subr.mxu0 0.0
      %2855 = vmatpush2.msra.mxu0 0.0
      %2856 = vmatprep.subr.mxu0 0.0
      %2857 = vmatpush2.msra.mxu0 0.0
      %2858 = vmatprep.subr.mxu0 0.0
      %2859 = vmatpush2.msra.mxu0 0.0
      %2860 = vmatprep.subr.mxu0 0.0
      %2861 = vmatpush2.msra.mxu0 0.0
      %2862 = vmatprep.subr.mxu0 0.0
      %2863 = vmatpush2.msra.mxu0 0.0
      %2864 = vmatprep.subr.mxu0 0.0
      %2865 = vmatpush2.msra.mxu0 0.0
      %2866 = vmatprep.subr.mxu0 0.0
      %2867 = vmatpush2.msra.mxu0 0.0
      %2868 = vmatprep.subr.mxu0 0.0
      %2869 = vmatpush2.msra.mxu0 %v2748
      %2870 = vmatprep.subr.mxu0 0.0
      %2871 = vmatpush2.msra.mxu0 %v1947
      %2872 = vmatprep.subr.mxu0 0.0
      %2873 = vmatpush2.msra.mxu0 %v1945
      %2874 = vmatprep.subr.mxu0 0.0
      %2875 = vmatpush2.msra.mxu0 %v1943
      %2876 = vmatprep.subr.mxu0 0.0
      %2877 = vmatpush2.msra.mxu0 %v1941
      %2878 = vmatprep.subr.mxu0 0.0
      %2879 = vmatpush2.msra.mxu0 %v1939
      %2880 = vmatprep.subr.mxu0 0.0
      %2881 = vmatpush2.msra.mxu0 %v1937
      %2882 = vmatprep.subr.mxu0 0.0
      %2883 = vmatpush2.msra.mxu0 %v1935
      %2884 = vmatprep.mubr.f32.mxu0 %v2320
      %2885 = vmatmul.mubr.f32.gmra.mxu0 %v2310
      %v2886 = vpop.f32.mrf.mxu0
      %v2887 = vadd.f32 %v2817, %v2886
      %v2888 = vpop.f32.mrf.mxu0
      %2889 = vdwg.mxu0
      %v2890 = vsel %vm1284, %v1986, 0
      %2892 = vmatprep.subr.mxu0 0.0
      %2893 = vmatpush1.msra.mxu0 %v1394
      %2894 = vmatprep.subr.mxu0 0.0
      %2895 = vmatpush1.msra.mxu0 %v1386
      %2896 = vmatprep.subr.mxu0 0.0
      %2897 = vmatpush1.msra.mxu0 %v1377
      %2898 = vmatprep.subr.mxu0 0.0
      %2899 = vmatpush1.msra.mxu0 %v597
      %2900 = vmatprep.subr.mxu0 0.0
      %2901 = vmatpush1.msra.mxu0 %v537
      %2902 = vmatprep.subr.mxu0 0.0
      %2903 = vmatpush1.msra.mxu0 %v535
      %2904 = vmatprep.subr.mxu0 0.0
      %2905 = vmatpush1.msra.mxu0 %v533
      %2906 = vmatprep.subr.mxu0 0.0
      %2907 = vmatpush1.msra.mxu0 %v465
      %2908 = vmatprep.subr.mxu0 0.0
      %2909 = vmatpush1.msra.mxu0 %v463
      %2910 = vmatprep.subr.mxu0 0.0
      %2911 = vmatpush1.msra.mxu0 %v1369
      %2912 = vmatprep.subr.mxu0 0.0
      %2913 = vmatpush1.msra.mxu0 %v343
      %2914 = vmatprep.subr.mxu0 0.0
      %2915 = vmatpush1.msra.mxu0 %v1361
      %2916 = vmatprep.subr.mxu0 0.0
      %2917 = vmatpush1.msra.mxu0 %v221
      %2918 = vmatprep.subr.mxu0 0.0
      %2919 = vmatpush1.msra.mxu0 %v220
      %2920 = vmatprep.subr.mxu0 0.0
      %2921 = vmatpush1.msra.mxu0 %v219
      %2922 = vmatprep.subr.mxu0 0.0
      %2923 = vmatpush1.msra.mxu0 %v218
      %2924 = vmatprep.subr.mxu0 0.0
      %2925 = vmatpush2.msra.mxu0 %v2304
      %2926 = vmatprep.subr.mxu0 0.0
      %2927 = vmatpush2.msra.mxu0 %v1434
      %2928 = vmatprep.subr.mxu0 0.0
      %2929 = vmatpush2.msra.mxu0 %v1426
      %2930 = vmatprep.subr.mxu0 0.0
      %2931 = vmatpush2.msra.mxu0 %v1191
      %2932 = vmatprep.subr.mxu0 0.0
      %2933 = vmatpush2.msra.mxu0 %v1189
      %2934 = vmatprep.subr.mxu0 0.0
      %2935 = vmatpush2.msra.mxu0 %v1121
      %2936 = vmatprep.subr.mxu0 0.0
      %2937 = vmatpush2.msra.mxu0 %v1119
      %2938 = vmatprep.subr.mxu0 0.0
      %2939 = vmatpush2.msra.mxu0 %v1418
      %2940 = vmatprep.subr.mxu0 0.0
      %2941 = vmatpush2.msra.mxu0 %v1047
      %2942 = vmatprep.subr.mxu0 0.0
      %2943 = vmatpush2.msra.mxu0 %v1410
      %2944 = vmatprep.subr.mxu0 0.0
      %2945 = vmatpush2.msra.mxu0 %v943
      %2946 = vmatprep.subr.mxu0 0.0
      %2947 = vmatpush2.msra.mxu0 %v1402
      %2948 = vmatprep.subr.mxu0 0.0
      %2949 = vmatpush2.msra.mxu0 %v838
      %2950 = vmatprep.subr.mxu0 0.0
      %2951 = vmatpush2.msra.mxu0 %v836
      %2952 = vmatprep.subr.mxu0 0.0
      %2953 = vmatpush2.msra.mxu0 %v777
      %2954 = vmatprep.subr.mxu0 0.0
      %2955 = vmatpush2.msra.mxu0 %v775
      %2956 = vmatprep.mubr.f32.mxu0 %v2309
      %2957 = vmatmul.mubr.f32.gmra.mxu0 %v2308
      %v2958 = vpop.f32.mrf.mxu0
      %v2959 = vadd.f32 %v2316, %v2958
      %v2960 = vpop.f32.mrf.mxu0
      %2961 = vdwg.mxu0
      %2962 = vmatprep.subr.mxu0 0.0
      %2963 = vmatpush1.msra.mxu0 %v1973
      %2964 = vmatprep.subr.mxu0 0.0
      %2965 = vmatpush1.msra.mxu0 %v1971
      %2966 = vmatprep.subr.mxu0 0.0
      %2967 = vmatpush1.msra.mxu0 %v1969
      %2968 = vmatprep.subr.mxu0 0.0
      %2969 = vmatpush1.msra.mxu0 %v1967
      %2970 = vmatprep.subr.mxu0 0.0
      %2971 = vmatpush1.msra.mxu0 %v1965
      %2972 = vmatprep.subr.mxu0 0.0
      %2973 = vmatpush1.msra.mxu0 %v1963
      %2974 = vmatprep.subr.mxu0 0.0
      %2975 = vmatpush1.msra.mxu0 %v1961
      %2976 = vmatprep.subr.mxu0 0.0
      %2977 = vmatpush1.msra.mxu0 %v1959
      %2978 = vmatprep.subr.mxu0 0.0
      %2979 = vmatpush1.msra.mxu0 %v1957
      %2980 = vmatprep.subr.mxu0 0.0
      %2981 = vmatpush1.msra.mxu0 %v1955
      %2982 = vmatprep.subr.mxu0 0.0
      %2983 = vmatpush1.msra.mxu0 %v1953
      %2984 = vmatprep.subr.mxu0 0.0
      %2985 = vmatpush1.msra.mxu0 %v1951
      %2986 = vmatprep.subr.mxu0 0.0
      %2987 = vmatpush1.msra.mxu0 %v1949
      %2988 = vmatprep.subr.mxu0 0.0
      %2989 = vmatpush1.msra.mxu0 %v429
      %2990 = vmatprep.subr.mxu0 0.0
      %2991 = vmatpush1.msra.mxu0 %v310
      %2992 = vmatprep.subr.mxu0 0.0
      %2993 = vmatpush1.msra.mxu0 %v308
      %2994 = vmatprep.subr.mxu0 0.0
      %2995 = vmatpush2.msra.mxu0 0.0
      %2996 = vmatprep.subr.mxu0 0.0
      %2997 = vmatpush2.msra.mxu0 0.0
      %2998 = vmatprep.subr.mxu0 0.0
      %2999 = vmatpush2.msra.mxu0 0.0
      %3000 = vmatprep.subr.mxu0 0.0
      %3001 = vmatpush2.msra.mxu0 0.0
      %3002 = vmatprep.subr.mxu0 0.0
      %3003 = vmatpush2.msra.mxu0 0.0
      %3004 = vmatprep.subr.mxu0 0.0
      %3005 = vmatpush2.msra.mxu0 0.0
      %3006 = vmatprep.subr.mxu0 0.0
      %3007 = vmatpush2.msra.mxu0 0.0
      %3008 = vmatprep.subr.mxu0 0.0
      %3009 = vmatpush2.msra.mxu0 0.0
      %3010 = vmatprep.subr.mxu0 0.0
      %3011 = vmatpush2.msra.mxu0 %v2890
      %3012 = vmatprep.subr.mxu0 0.0
      %3013 = vmatpush2.msra.mxu0 %v1987
      %3014 = vmatprep.subr.mxu0 0.0
      %3015 = vmatpush2.msra.mxu0 %v1985
      %3016 = vmatprep.subr.mxu0 0.0
      %3017 = vmatpush2.msra.mxu0 %v1983
      %3018 = vmatprep.subr.mxu0 0.0
      %3019 = vmatpush2.msra.mxu0 %v1981
      %3020 = vmatprep.subr.mxu0 0.0
      %3021 = vmatpush2.msra.mxu0 %v1979
      %3022 = vmatprep.subr.mxu0 0.0
      %3023 = vmatpush2.msra.mxu0 %v1977
      %3024 = vmatprep.subr.mxu0 0.0
      %3025 = vmatpush2.msra.mxu0 %v1975
      %3026 = vmatprep.mubr.f32.mxu0 %v2320
      %3027 = vmatmul.mubr.f32.gmra.mxu0 %v2310
      %v3028 = vpop.f32.mrf.mxu0
      %v3029 = vadd.f32 %v2959, %v3028
      %v3030 = vpop.f32.mrf.mxu0
      %3031 = vdwg.mxu0
      %v3032 = vsel %vm1284, %v2026, 0
      %3034 = vmatprep.subr.mxu0 0.0
      %3035 = vmatpush1.msra.mxu0 %v1395
      %3036 = vmatprep.subr.mxu0 0.0
      %3037 = vmatpush1.msra.mxu0 %v1387
      %3038 = vmatprep.subr.mxu0 0.0
      %3039 = vmatpush1.msra.mxu0 %v1378
      %3040 = vmatprep.subr.mxu0 0.0
      %3041 = vmatpush1.msra.mxu0 %v601
      %3042 = vmatprep.subr.mxu0 0.0
      %3043 = vmatpush1.msra.mxu0 %v543
      %3044 = vmatprep.subr.mxu0 0.0
      %3045 = vmatpush1.msra.mxu0 %v541
      %3046 = vmatprep.subr.mxu0 0.0
      %3047 = vmatpush1.msra.mxu0 %v539
      %3048 = vmatprep.subr.mxu0 0.0
      %3049 = vmatpush1.msra.mxu0 %v471
      %3050 = vmatprep.subr.mxu0 0.0
      %3051 = vmatpush1.msra.mxu0 %v469
      %3052 = vmatprep.subr.mxu0 0.0
      %3053 = vmatpush1.msra.mxu0 %v1370
      %3054 = vmatprep.subr.mxu0 0.0
      %3055 = vmatpush1.msra.mxu0 %v349
      %3056 = vmatprep.subr.mxu0 0.0
      %3057 = vmatpush1.msra.mxu0 %v1362
      %3058 = vmatprep.subr.mxu0 0.0
      %3059 = vmatpush1.msra.mxu0 %v226
      %3060 = vmatprep.subr.mxu0 0.0
      %3061 = vmatpush1.msra.mxu0 %v225
      %3062 = vmatprep.subr.mxu0 0.0
      %3063 = vmatpush1.msra.mxu0 %v224
      %3064 = vmatprep.subr.mxu0 0.0
      %3065 = vmatpush1.msra.mxu0 %v223
      %3066 = vmatprep.subr.mxu0 0.0
      %3067 = vmatpush2.msra.mxu0 %v2305
      %3068 = vmatprep.subr.mxu0 0.0
      %3069 = vmatpush2.msra.mxu0 %v1435
      %3070 = vmatprep.subr.mxu0 0.0
      %3071 = vmatpush2.msra.mxu0 %v1427
      %3072 = vmatprep.subr.mxu0 0.0
      %3073 = vmatpush2.msra.mxu0 %v1197
      %3074 = vmatprep.subr.mxu0 0.0
      %3075 = vmatpush2.msra.mxu0 %v1195
      %3076 = vmatprep.subr.mxu0 0.0
      %3077 = vmatpush2.msra.mxu0 %v1127
      %3078 = vmatprep.subr.mxu0 0.0
      %3079 = vmatpush2.msra.mxu0 %v1125
      %3080 = vmatprep.subr.mxu0 0.0
      %3081 = vmatpush2.msra.mxu0 %v1419
      %3082 = vmatprep.subr.mxu0 0.0
      %3083 = vmatpush2.msra.mxu0 %v1053
      %3084 = vmatprep.subr.mxu0 0.0
      %3085 = vmatpush2.msra.mxu0 %v1411
      %3086 = vmatprep.subr.mxu0 0.0
      %3087 = vmatpush2.msra.mxu0 %v949
      %3088 = vmatprep.subr.mxu0 0.0
      %3089 = vmatpush2.msra.mxu0 %v1403
      %3090 = vmatprep.subr.mxu0 0.0
      %3091 = vmatpush2.msra.mxu0 %v842
      %3092 = vmatprep.subr.mxu0 0.0
      %3093 = vmatpush2.msra.mxu0 %v840
      %3094 = vmatprep.subr.mxu0 0.0
      %3095 = vmatpush2.msra.mxu0 %v782
      %3096 = vmatprep.subr.mxu0 0.0
      %3097 = vmatpush2.msra.mxu0 %v780
      %3098 = vmatprep.mubr.f32.mxu0 %v2309
      %3099 = vmatmul.mubr.f32.gmra.mxu0 %v2308
      %v3100 = vpop.f32.mrf.mxu0
      %v3101 = vadd.f32 %v2316, %v3100
      %v3102 = vpop.f32.mrf.mxu0
      %3103 = vdwg.mxu0
      %3104 = vmatprep.subr.mxu0 0.0
      %3105 = vmatpush1.msra.mxu0 %v2013
      %3106 = vmatprep.subr.mxu0 0.0
      %3107 = vmatpush1.msra.mxu0 %v2011
      %3108 = vmatprep.subr.mxu0 0.0
      %3109 = vmatpush1.msra.mxu0 %v2009
      %3110 = vmatprep.subr.mxu0 0.0
      %3111 = vmatpush1.msra.mxu0 %v2007
      %3112 = vmatprep.subr.mxu0 0.0
      %3113 = vmatpush1.msra.mxu0 %v2005
      %3114 = vmatprep.subr.mxu0 0.0
      %3115 = vmatpush1.msra.mxu0 %v2003
      %3116 = vmatprep.subr.mxu0 0.0
      %3117 = vmatpush1.msra.mxu0 %v2001
      %3118 = vmatprep.subr.mxu0 0.0
      %3119 = vmatpush1.msra.mxu0 %v1999
      %3120 = vmatprep.subr.mxu0 0.0
      %3121 = vmatpush1.msra.mxu0 %v1997
      %3122 = vmatprep.subr.mxu0 0.0
      %3123 = vmatpush1.msra.mxu0 %v1995
      %3124 = vmatprep.subr.mxu0 0.0
      %3125 = vmatpush1.msra.mxu0 %v1993
      %3126 = vmatprep.subr.mxu0 0.0
      %3127 = vmatpush1.msra.mxu0 %v1991
      %3128 = vmatprep.subr.mxu0 0.0
      %3129 = vmatpush1.msra.mxu0 %v1989
      %3130 = vmatprep.subr.mxu0 0.0
      %3131 = vmatpush1.msra.mxu0 %v433
      %3132 = vmatprep.subr.mxu0 0.0
      %3133 = vmatpush1.msra.mxu0 %v315
      %3134 = vmatprep.subr.mxu0 0.0
      %3135 = vmatpush1.msra.mxu0 %v313
      %3136 = vmatprep.subr.mxu0 0.0
      %3137 = vmatpush2.msra.mxu0 0.0
      %3138 = vmatprep.subr.mxu0 0.0
      %3139 = vmatpush2.msra.mxu0 0.0
      %3140 = vmatprep.subr.mxu0 0.0
      %3141 = vmatpush2.msra.mxu0 0.0
      %3142 = vmatprep.subr.mxu0 0.0
      %3143 = vmatpush2.msra.mxu0 0.0
      %3144 = vmatprep.subr.mxu0 0.0
      %3145 = vmatpush2.msra.mxu0 0.0
      %3146 = vmatprep.subr.mxu0 0.0
      %3147 = vmatpush2.msra.mxu0 0.0
      %3148 = vmatprep.subr.mxu0 0.0
      %3149 = vmatpush2.msra.mxu0 0.0
      %3150 = vmatprep.subr.mxu0 0.0
      %3151 = vmatpush2.msra.mxu0 0.0
      %3152 = vmatprep.subr.mxu0 0.0
      %3153 = vmatpush2.msra.mxu0 %v3032
      %3154 = vmatprep.subr.mxu0 0.0
      %3155 = vmatpush2.msra.mxu0 %v2027
      %3156 = vmatprep.subr.mxu0 0.0
      %3157 = vmatpush2.msra.mxu0 %v2025
      %3158 = vmatprep.subr.mxu0 0.0
      %3159 = vmatpush2.msra.mxu0 %v2023
      %3160 = vmatprep.subr.mxu0 0.0
      %3161 = vmatpush2.msra.mxu0 %v2021
      %3162 = vmatprep.subr.mxu0 0.0
      %3163 = vmatpush2.msra.mxu0 %v2019
      %3164 = vmatprep.subr.mxu0 0.0
      %3165 = vmatpush2.msra.mxu0 %v2017
      %3166 = vmatprep.subr.mxu0 0.0
      %3167 = vmatpush2.msra.mxu0 %v2015
      %3168 = vmatprep.mubr.f32.mxu0 %v2320
      %3169 = vmatmul.mubr.f32.gmra.mxu0 %v2310
      %v3170 = vpop.f32.mrf.mxu0
      %v3171 = vadd.f32 %v3101, %v3170
      %v3172 = vpop.f32.mrf.mxu0
      %3173 = vdwg.mxu0
      %v3174 = vsel %vm1284, %v2066, 0
      %3176 = vmatprep.subr.mxu0 0.0
      %3177 = vmatpush1.msra.mxu0 %v1396
      %3178 = vmatprep.subr.mxu0 0.0
      %3179 = vmatpush1.msra.mxu0 %v1388
      %3180 = vmatprep.subr.mxu0 0.0
      %3181 = vmatpush1.msra.mxu0 %v1379
      %3182 = vmatprep.subr.mxu0 0.0
      %3183 = vmatpush1.msra.mxu0 %v605
      %3184 = vmatprep.subr.mxu0 0.0
      %3185 = vmatpush1.msra.mxu0 %v549
      %3186 = vmatprep.subr.mxu0 0.0
      %3187 = vmatpush1.msra.mxu0 %v547
      %3188 = vmatprep.subr.mxu0 0.0
      %3189 = vmatpush1.msra.mxu0 %v545
      %3190 = vmatprep.subr.mxu0 0.0
      %3191 = vmatpush1.msra.mxu0 %v477
      %3192 = vmatprep.subr.mxu0 0.0
      %3193 = vmatpush1.msra.mxu0 %v475
      %3194 = vmatprep.subr.mxu0 0.0
      %3195 = vmatpush1.msra.mxu0 %v1371
      %3196 = vmatprep.subr.mxu0 0.0
      %3197 = vmatpush1.msra.mxu0 %v355
      %3198 = vmatprep.subr.mxu0 0.0
      %3199 = vmatpush1.msra.mxu0 %v1363
      %3200 = vmatprep.subr.mxu0 0.0
      %3201 = vmatpush1.msra.mxu0 %v231
      %3202 = vmatprep.subr.mxu0 0.0
      %3203 = vmatpush1.msra.mxu0 %v230
      %3204 = vmatprep.subr.mxu0 0.0
      %3205 = vmatpush1.msra.mxu0 %v229
      %3206 = vmatprep.subr.mxu0 0.0
      %3207 = vmatpush1.msra.mxu0 %v228
      %3208 = vmatprep.subr.mxu0 0.0
      %3209 = vmatpush2.msra.mxu0 %v2306
      %3210 = vmatprep.subr.mxu0 0.0
      %3211 = vmatpush2.msra.mxu0 %v1436
      %3212 = vmatprep.subr.mxu0 0.0
      %3213 = vmatpush2.msra.mxu0 %v1428
      %3214 = vmatprep.subr.mxu0 0.0
      %3215 = vmatpush2.msra.mxu0 %v1203
      %3216 = vmatprep.subr.mxu0 0.0
      %3217 = vmatpush2.msra.mxu0 %v1201
      %3218 = vmatprep.subr.mxu0 0.0
      %3219 = vmatpush2.msra.mxu0 %v1133
      %3220 = vmatprep.subr.mxu0 0.0
      %3221 = vmatpush2.msra.mxu0 %v1131
      %3222 = vmatprep.subr.mxu0 0.0
      %3223 = vmatpush2.msra.mxu0 %v1420
      %3224 = vmatprep.subr.mxu0 0.0
      %3225 = vmatpush2.msra.mxu0 %v1059
      %3226 = vmatprep.subr.mxu0 0.0
      %3227 = vmatpush2.msra.mxu0 %v1412
      %3228 = vmatprep.subr.mxu0 0.0
      %3229 = vmatpush2.msra.mxu0 %v955
      %3230 = vmatprep.subr.mxu0 0.0
      %3231 = vmatpush2.msra.mxu0 %v1404
      %3232 = vmatprep.subr.mxu0 0.0
      %3233 = vmatpush2.msra.mxu0 %v846
      %3234 = vmatprep.subr.mxu0 0.0
      %3235 = vmatpush2.msra.mxu0 %v844
      %3236 = vmatprep.subr.mxu0 0.0
      %3237 = vmatpush2.msra.mxu0 %v787
      %3238 = vmatprep.subr.mxu0 0.0
      %3239 = vmatpush2.msra.mxu0 %v785
      %3240 = vmatprep.mubr.f32.mxu0 %v2309
      %3241 = vmatmul.mubr.f32.gmra.mxu0 %v2308
      %v3242 = vpop.f32.mrf.mxu0
      %v3243 = vadd.f32 %v2316, %v3242
      %v3244 = vpop.f32.mrf.mxu0
      %3245 = vdwg.mxu0
      %3246 = vmatprep.subr.mxu0 0.0
      %3247 = vmatpush1.msra.mxu0 %v2053
      %3248 = vmatprep.subr.mxu0 0.0
      %3249 = vmatpush1.msra.mxu0 %v2051
      %3250 = vmatprep.subr.mxu0 0.0
      %3251 = vmatpush1.msra.mxu0 %v2049
      %3252 = vmatprep.subr.mxu0 0.0
      %3253 = vmatpush1.msra.mxu0 %v2047
      %3254 = vmatprep.subr.mxu0 0.0
      %3255 = vmatpush1.msra.mxu0 %v2045
      %3256 = vmatprep.subr.mxu0 0.0
      %3257 = vmatpush1.msra.mxu0 %v2043
      %3258 = vmatprep.subr.mxu0 0.0
      %3259 = vmatpush1.msra.mxu0 %v2041
      %3260 = vmatprep.subr.mxu0 0.0
      %3261 = vmatpush1.msra.mxu0 %v2039
      %3262 = vmatprep.subr.mxu0 0.0
      %3263 = vmatpush1.msra.mxu0 %v2037
      %3264 = vmatprep.subr.mxu0 0.0
      %3265 = vmatpush1.msra.mxu0 %v2035
      %3266 = vmatprep.subr.mxu0 0.0
      %3267 = vmatpush1.msra.mxu0 %v2033
      %3268 = vmatprep.subr.mxu0 0.0
      %3269 = vmatpush1.msra.mxu0 %v2031
      %3270 = vmatprep.subr.mxu0 0.0
      %3271 = vmatpush1.msra.mxu0 %v2029
      %3272 = vmatprep.subr.mxu0 0.0
      %3273 = vmatpush1.msra.mxu0 %v1470
      %3274 = vmatprep.subr.mxu0 0.0
      %3275 = vmatpush1.msra.mxu0 %v1445
      %3276 = vmatprep.subr.mxu0 0.0
      %3277 = vmatpush1.msra.mxu0 %v1443
      %3278 = vmatprep.subr.mxu0 0.0
      %3279 = vmatpush2.msra.mxu0 0.0
      %3280 = vmatprep.subr.mxu0 0.0
      %3281 = vmatpush2.msra.mxu0 0.0
      %3282 = vmatprep.subr.mxu0 0.0
      %3283 = vmatpush2.msra.mxu0 0.0
      %3284 = vmatprep.subr.mxu0 0.0
      %3285 = vmatpush2.msra.mxu0 0.0
      %3286 = vmatprep.subr.mxu0 0.0
      %3287 = vmatpush2.msra.mxu0 0.0
      %3288 = vmatprep.subr.mxu0 0.0
      %3289 = vmatpush2.msra.mxu0 0.0
      %3290 = vmatprep.subr.mxu0 0.0
      %3291 = vmatpush2.msra.mxu0 0.0
      %3292 = vmatprep.subr.mxu0 0.0
      %3293 = vmatpush2.msra.mxu0 0.0
      %3294 = vmatprep.subr.mxu0 0.0
      %3295 = vmatpush2.msra.mxu0 %v3174
      %3296 = vmatprep.subr.mxu0 0.0
      %3297 = vmatpush2.msra.mxu0 %v2067
      %3298 = vmatprep.subr.mxu0 0.0
      %3299 = vmatpush2.msra.mxu0 %v2065
      %3300 = vmatprep.subr.mxu0 0.0
      %3301 = vmatpush2.msra.mxu0 %v2063
      %3302 = vmatprep.subr.mxu0 0.0
      %3303 = vmatpush2.msra.mxu0 %v2061
      %3304 = vmatprep.subr.mxu0 0.0
      %3305 = vmatpush2.msra.mxu0 %v2059
      %3306 = vmatprep.subr.mxu0 0.0
      %3307 = vmatpush2.msra.mxu0 %v2057
      %3308 = vmatprep.subr.mxu0 0.0
      %3309 = vmatpush2.msra.mxu0 %v2055
      %3310 = vmatprep.mubr.f32.mxu0 %v2320
      %3311 = vmatmul.mubr.f32.gmra.mxu0 %v2310
      %v3312 = vpop.f32.mrf.mxu0
      %v3313 = vadd.f32 %v3243, %v3312
      %v3314 = vpop.f32.mrf.mxu0
      %3315 = vdwg.mxu0
      %v3316 = vsel %vm1284, %v2106, 0
      %3318 = vmatprep.subr.mxu0 0.0
      %3319 = vmatpush1.msra.mxu0 %v1397
      %3320 = vmatprep.subr.mxu0 0.0
      %3321 = vmatpush1.msra.mxu0 %v1389
      %3322 = vmatprep.subr.mxu0 0.0
      %3323 = vmatpush1.msra.mxu0 %v1380
      %3324 = vmatprep.subr.mxu0 0.0
      %3325 = vmatpush1.msra.mxu0 %v609
      %3326 = vmatprep.subr.mxu0 0.0
      %3327 = vmatpush1.msra.mxu0 %v555
      %3328 = vmatprep.subr.mxu0 0.0
      %3329 = vmatpush1.msra.mxu0 %v553
      %3330 = vmatprep.subr.mxu0 0.0
      %3331 = vmatpush1.msra.mxu0 %v551
      %3332 = vmatprep.subr.mxu0 0.0
      %3333 = vmatpush1.msra.mxu0 %v483
      %3334 = vmatprep.subr.mxu0 0.0
      %3335 = vmatpush1.msra.mxu0 %v481
      %3336 = vmatprep.subr.mxu0 0.0
      %3337 = vmatpush1.msra.mxu0 %v1372
      %3338 = vmatprep.subr.mxu0 0.0
      %3339 = vmatpush1.msra.mxu0 %v361
      %3340 = vmatprep.subr.mxu0 0.0
      %3341 = vmatpush1.msra.mxu0 %v1364
      %3342 = vmatprep.subr.mxu0 0.0
      %3343 = vmatpush1.msra.mxu0 %v236
      %3344 = vmatprep.subr.mxu0 0.0
      %3345 = vmatpush1.msra.mxu0 %v235
      %3346 = vmatprep.subr.mxu0 0.0
      %3347 = vmatpush1.msra.mxu0 %v234
      %3348 = vmatprep.subr.mxu0 0.0
      %3349 = vmatpush1.msra.mxu0 %v233
      %3350 = vmatprep.subr.mxu0 0.0
      %3351 = vmatpush2.msra.mxu0 %v2307
      %3352 = vmatprep.subr.mxu0 0.0
      %3353 = vmatpush2.msra.mxu0 %v1437
      %3354 = vmatprep.subr.mxu0 0.0
      %3355 = vmatpush2.msra.mxu0 %v1429
      %3356 = vmatprep.subr.mxu0 0.0
      %3357 = vmatpush2.msra.mxu0 %v1209
      %3358 = vmatprep.subr.mxu0 0.0
      %3359 = vmatpush2.msra.mxu0 %v1207
      %3360 = vmatprep.subr.mxu0 0.0
      %3361 = vmatpush2.msra.mxu0 %v1139
      %3362 = vmatprep.subr.mxu0 0.0
      %3363 = vmatpush2.msra.mxu0 %v1137
      %3364 = vmatprep.subr.mxu0 0.0
      %3365 = vmatpush2.msra.mxu0 %v1421
      %3366 = vmatprep.subr.mxu0 0.0
      %3367 = vmatpush2.msra.mxu0 %v1065
      %3368 = vmatprep.subr.mxu0 0.0
      %3369 = vmatpush2.msra.mxu0 %v1413
      %3370 = vmatprep.subr.mxu0 0.0
      %3371 = vmatpush2.msra.mxu0 %v961
      %3372 = vmatprep.subr.mxu0 0.0
      %3373 = vmatpush2.msra.mxu0 %v1405
      %3374 = vmatprep.subr.mxu0 0.0
      %3375 = vmatpush2.msra.mxu0 %v850
      %3376 = vmatprep.subr.mxu0 0.0
      %3377 = vmatpush2.msra.mxu0 %v848
      %3378 = vmatprep.subr.mxu0 0.0
      %3379 = vmatpush2.msra.mxu0 %v792
      %3380 = vmatprep.subr.mxu0 0.0
      %3381 = vmatpush2.msra.mxu0 %v790
      %3382 = vmatprep.mubr.f32.mxu0 %v2309
      %3383 = vmatmul.mubr.f32.gmra.mxu0 %v2308
      %v3384 = vpop.f32.mrf.mxu0
      %v3385 = vadd.f32 %v2316, %v3384
      %v3386 = vpop.f32.mrf.mxu0
      %3387 = vdwg.mxu0
      %3388 = vmatprep.subr.mxu0 0.0
      %3389 = vmatpush1.msra.mxu0 %v2093
      %3390 = vmatprep.subr.mxu0 0.0
      %3391 = vmatpush1.msra.mxu0 %v2091
      %3392 = vmatprep.subr.mxu0 0.0
      %3393 = vmatpush1.msra.mxu0 %v2089
      %3394 = vmatprep.subr.mxu0 0.0
      %3395 = vmatpush1.msra.mxu0 %v2087
      %3396 = vmatprep.subr.mxu0 0.0
      %3397 = vmatpush1.msra.mxu0 %v2085
      %3398 = vmatprep.subr.mxu0 0.0
      %3399 = vmatpush1.msra.mxu0 %v2083
      %3400 = vmatprep.subr.mxu0 0.0
      %3401 = vmatpush1.msra.mxu0 %v2081
      %3402 = vmatprep.subr.mxu0 0.0
      %3403 = vmatpush1.msra.mxu0 %v2079
      %3404 = vmatprep.subr.mxu0 0.0
      %3405 = vmatpush1.msra.mxu0 %v2077
      %3406 = vmatprep.subr.mxu0 0.0
      %3407 = vmatpush1.msra.mxu0 %v2075
      %3408 = vmatprep.subr.mxu0 0.0
      %3409 = vmatpush1.msra.mxu0 %v2073
      %3410 = vmatprep.subr.mxu0 0.0
      %3411 = vmatpush1.msra.mxu0 %v2071
      %3412 = vmatprep.subr.mxu0 0.0
      %3413 = vmatpush1.msra.mxu0 %v2069
      %3414 = vmatprep.subr.mxu0 0.0
      %3415 = vmatpush1.msra.mxu0 %v1474
      %3416 = vmatprep.subr.mxu0 0.0
      %3417 = vmatpush1.msra.mxu0 %v1450
      %3418 = vmatprep.subr.mxu0 0.0
      %3419 = vmatpush1.msra.mxu0 %v1448
      %3420 = vmatprep.subr.mxu0 0.0
      %3421 = vmatpush2.msra.mxu0 0.0
      %3422 = vmatprep.subr.mxu0 0.0
      %3423 = vmatpush2.msra.mxu0 0.0
      %3424 = vmatprep.subr.mxu0 0.0
      %3425 = vmatpush2.msra.mxu0 0.0
      %3426 = vmatprep.subr.mxu0 0.0
      %3427 = vmatpush2.msra.mxu0 0.0
      %3428 = vmatprep.subr.mxu0 0.0
      %3429 = vmatpush2.msra.mxu0 0.0
      %3430 = vmatprep.subr.mxu0 0.0
      %3431 = vmatpush2.msra.mxu0 0.0
      %3432 = vmatprep.subr.mxu0 0.0
      %3433 = vmatpush2.msra.mxu0 0.0
      %3434 = vmatprep.subr.mxu0 0.0
      %3435 = vmatpush2.msra.mxu0 0.0
      %3436 = vmatprep.subr.mxu0 0.0
      %3437 = vmatpush2.msra.mxu0 %v3316
      %3438 = vmatprep.subr.mxu0 0.0
      %3439 = vmatpush2.msra.mxu0 %v2107
      %3440 = vmatprep.subr.mxu0 0.0
      %3441 = vmatpush2.msra.mxu0 %v2105
      %3442 = vmatprep.subr.mxu0 0.0
      %3443 = vmatpush2.msra.mxu0 %v2103
      %3444 = vmatprep.subr.mxu0 0.0
      %3445 = vmatpush2.msra.mxu0 %v2101
      %3446 = vmatprep.subr.mxu0 0.0
      %3447 = vmatpush2.msra.mxu0 %v2099
      %3448 = vmatprep.subr.mxu0 0.0
      %3449 = vmatpush2.msra.mxu0 %v2097
      %3450 = vmatprep.subr.mxu0 0.0
      %3451 = vmatpush2.msra.mxu0 %v2095
      %3452 = vmatprep.mubr.f32.mxu0 %v2320
      %3453 = vmatmul.mubr.f32.gmra.mxu0 %v2310
      %v3454 = vpop.f32.mrf.mxu0
      %v3455 = vadd.f32 %v3385, %v3454
      %v3456 = vpop.f32.mrf.mxu0
      %3457 = vdwg.mxu0
      %v3458 = vmax.f32 %v2461, 0.0
      %v3459 = vmax.f32 %v2603, 0.0
      %v3460 = vmax.f32 %v2745, 0.0
      %v3461 = vmax.f32 %v2887, 0.0
      %v3462 = vmax.f32 %v3029, 0.0
      %v3463 = vmax.f32 %v3171, 0.0
      %v3464 = vmax.f32 %v3313, 0.0
      %v3465 = vmax.f32 %v3455, 0.0
      %v3466 = vmax.f32 %v3458, %v3459
      %v3467 = vmax.f32 %v3460, %v3461
      %v3468 = vmax.f32 %v3462, %v3463
      %v3469 = vmax.f32 %v3464, %v3465
      %v3470 = vmax.f32 %v3466, 0.0
      %v3471 = vmax.f32 %v3467, %v3459
      %v3472 = vmax.f32 %v3468, %v3461
      %v3473 = vmax.f32 %v3469, %v3463
      %v3474 = vld [vmem:[%s3] sm:$0xff]
      %vm3475 = vcmask 64512
      %v3477 = vsel %vm3475, %v3470, 0
      %3479 = vmatprep.subr.mxu0 0.0
      %3480 = vmatpush1.msra.mxu0 0.0
      %3481 = vmatprep.subr.mxu0 0.0
      %3482 = vmatpush1.msra.mxu0 0.0
      %3483 = vmatprep.subr.mxu0 0.0
      %3484 = vmatpush1.msra.mxu0 0.0
      %3485 = vmatprep.subr.mxu0 0.0
      %3486 = vmatpush1.msra.mxu0 0.0
      %3487 = vmatprep.subr.mxu0 0.0
      %3488 = vmatpush1.msra.mxu0 0.0
      %3489 = vmatprep.subr.mxu0 0.0
      %3490 = vmatpush1.msra.mxu0 0.0
      %3491 = vmatprep.subr.mxu0 0.0
      %3492 = vmatpush1.msra.mxu0 0.0
      %3493 = vmatprep.subr.mxu0 0.0
      %3494 = vmatpush1.msra.mxu0 0.0
      %3495 = vmatprep.subr.mxu0 0.0
      %3496 = vmatpush1.msra.mxu0 0.0
      %3497 = vmatprep.subr.mxu0 0.0
      %3498 = vmatpush1.msra.mxu0 0.0
      %3499 = vmatprep.subr.mxu0 0.0
      %3500 = vmatpush1.msra.mxu0 0.0
      %3501 = vmatprep.subr.mxu0 0.0
      %3502 = vmatpush1.msra.mxu0 0.0
      %3503 = vmatprep.subr.mxu0 0.0
      %3504 = vmatpush1.msra.mxu0 0.0
      %3505 = vmatprep.subr.mxu0 0.0
      %3506 = vmatpush1.msra.mxu0 0.0
      %3507 = vmatprep.subr.mxu0 0.0
      %3508 = vmatpush1.msra.mxu0 0.0
      %3509 = vmatprep.subr.mxu0 0.0
      %3510 = vmatpush1.msra.mxu0 %v3474
      %3511 = vmatprep.subr.mxu0 0.0
      %3512 = vmatpush2.msra.mxu0 0.0
      %3513 = vmatprep.subr.mxu0 0.0
      %3514 = vmatpush2.msra.mxu0 0.0
      %3515 = vmatprep.subr.mxu0 0.0
      %3516 = vmatpush2.msra.mxu0 0.0
      %3517 = vmatprep.subr.mxu0 0.0
      %3518 = vmatpush2.msra.mxu0 0.0
      %3519 = vmatprep.subr.mxu0 0.0
      %3520 = vmatpush2.msra.mxu0 0.0
      %3521 = vmatprep.subr.mxu0 0.0
      %3522 = vmatpush2.msra.mxu0 0.0
      %3523 = vmatprep.subr.mxu0 0.0
      %3524 = vmatpush2.msra.mxu0 0.0
      %3525 = vmatprep.subr.mxu0 0.0
      %3526 = vmatpush2.msra.mxu0 0.0
      %3527 = vmatprep.subr.mxu0 0.0
      %3528 = vmatpush2.msra.mxu0 0.0
      %3529 = vmatprep.subr.mxu0 0.0
      %3530 = vmatpush2.msra.mxu0 0.0
      %3531 = vmatprep.subr.mxu0 0.0
      %3532 = vmatpush2.msra.mxu0 0.0
      %3533 = vmatprep.subr.mxu0 0.0
      %3534 = vmatpush2.msra.mxu0 0.0
      %3535 = vmatprep.subr.mxu0 0.0
      %3536 = vmatpush2.msra.mxu0 0.0
      %3537 = vmatprep.subr.mxu0 0.0
      %3538 = vmatpush2.msra.mxu0 0.0
      %3539 = vmatprep.subr.mxu0 0.0
      %3540 = vmatpush2.msra.mxu0 0.0
      %3541 = vmatprep.subr.mxu0 0.0
      %3542 = vmatpush2.msra.mxu0 0.0
      %3543 = vmatprep.mubr.f32.mxu0 0.0
      %3544 = vmatmul.mubr.f32.gmra.mxu0 %v3477
      %v3545 = vpop.f32.mrf.mxu0
      %v3546 = vadd.f32 0.0, %v3545
      %v3547 = vpop.f32.mrf.mxu0
      %3548 = vdwg.mxu0
      %v3550 = vsel %vm3475, %v3471, 0
      %3552 = vmatprep.subr.mxu0 0.0
      %3553 = vmatpush1.msra.mxu0 0.0
      %3554 = vmatprep.subr.mxu0 0.0
      %3555 = vmatpush1.msra.mxu0 0.0
      %3556 = vmatprep.subr.mxu0 0.0
      %3557 = vmatpush1.msra.mxu0 0.0
      %3558 = vmatprep.subr.mxu0 0.0
      %3559 = vmatpush1.msra.mxu0 0.0
      %3560 = vmatprep.subr.mxu0 0.0
      %3561 = vmatpush1.msra.mxu0 0.0
      %3562 = vmatprep.subr.mxu0 0.0
      %3563 = vmatpush1.msra.mxu0 0.0
      %3564 = vmatprep.subr.mxu0 0.0
      %3565 = vmatpush1.msra.mxu0 0.0
      %3566 = vmatprep.subr.mxu0 0.0
      %3567 = vmatpush1.msra.mxu0 0.0
      %3568 = vmatprep.subr.mxu0 0.0
      %3569 = vmatpush1.msra.mxu0 0.0
      %3570 = vmatprep.subr.mxu0 0.0
      %3571 = vmatpush1.msra.mxu0 0.0
      %3572 = vmatprep.subr.mxu0 0.0
      %3573 = vmatpush1.msra.mxu0 0.0
      %3574 = vmatprep.subr.mxu0 0.0
      %3575 = vmatpush1.msra.mxu0 0.0
      %3576 = vmatprep.subr.mxu0 0.0
      %3577 = vmatpush1.msra.mxu0 0.0
      %3578 = vmatprep.subr.mxu0 0.0
      %3579 = vmatpush1.msra.mxu0 0.0
      %3580 = vmatprep.subr.mxu0 0.0
      %3581 = vmatpush1.msra.mxu0 0.0
      %3582 = vmatprep.subr.mxu0 0.0
      %3583 = vmatpush1.msra.mxu0 %v3474
      %3584 = vmatprep.subr.mxu0 0.0
      %3585 = vmatpush2.msra.mxu0 0.0
      %3586 = vmatprep.subr.mxu0 0.0
      %3587 = vmatpush2.msra.mxu0 0.0
      %3588 = vmatprep.subr.mxu0 0.0
      %3589 = vmatpush2.msra.mxu0 0.0
      %3590 = vmatprep.subr.mxu0 0.0
      %3591 = vmatpush2.msra.mxu0 0.0
      %3592 = vmatprep.subr.mxu0 0.0
      %3593 = vmatpush2.msra.mxu0 0.0
      %3594 = vmatprep.subr.mxu0 0.0
      %3595 = vmatpush2.msra.mxu0 0.0
      %3596 = vmatprep.subr.mxu0 0.0
      %3597 = vmatpush2.msra.mxu0 0.0
      %3598 = vmatprep.subr.mxu0 0.0
      %3599 = vmatpush2.msra.mxu0 0.0
      %3600 = vmatprep.subr.mxu0 0.0
      %3601 = vmatpush2.msra.mxu0 0.0
      %3602 = vmatprep.subr.mxu0 0.0
      %3603 = vmatpush2.msra.mxu0 0.0
      %3604 = vmatprep.subr.mxu0 0.0
      %3605 = vmatpush2.msra.mxu0 0.0
      %3606 = vmatprep.subr.mxu0 0.0
      %3607 = vmatpush2.msra.mxu0 0.0
      %3608 = vmatprep.subr.mxu0 0.0
      %3609 = vmatpush2.msra.mxu0 0.0
      %3610 = vmatprep.subr.mxu0 0.0
      %3611 = vmatpush2.msra.mxu0 0.0
      %3612 = vmatprep.subr.mxu0 0.0
      %3613 = vmatpush2.msra.mxu0 0.0
      %3614 = vmatprep.subr.mxu0 0.0
      %3615 = vmatpush2.msra.mxu0 0.0
      %3616 = vmatprep.mubr.f32.mxu0 0.0
      %3617 = vmatmul.mubr.f32.gmra.mxu0 %v3550
      %v3618 = vpop.f32.mrf.mxu0
      %v3619 = vadd.f32 0.0, %v3618
      %v3620 = vpop.f32.mrf.mxu0
      %3621 = vdwg.mxu0
      %v3623 = vsel %vm3475, %v3472, 0
      %3625 = vmatprep.subr.mxu0 0.0
      %3626 = vmatpush1.msra.mxu0 0.0
      %3627 = vmatprep.subr.mxu0 0.0
      %3628 = vmatpush1.msra.mxu0 0.0
      %3629 = vmatprep.subr.mxu0 0.0
      %3630 = vmatpush1.msra.mxu0 0.0
      %3631 = vmatprep.subr.mxu0 0.0
      %3632 = vmatpush1.msra.mxu0 0.0
      %3633 = vmatprep.subr.mxu0 0.0
      %3634 = vmatpush1.msra.mxu0 0.0
      %3635 = vmatprep.subr.mxu0 0.0
      %3636 = vmatpush1.msra.mxu0 0.0
      %3637 = vmatprep.subr.mxu0 0.0
      %3638 = vmatpush1.msra.mxu0 0.0
      %3639 = vmatprep.subr.mxu0 0.0
      %3640 = vmatpush1.msra.mxu0 0.0
      %3641 = vmatprep.subr.mxu0 0.0
      %3642 = vmatpush1.msra.mxu0 0.0
      %3643 = vmatprep.subr.mxu0 0.0
      %3644 = vmatpush1.msra.mxu0 0.0
      %3645 = vmatprep.subr.mxu0 0.0
      %3646 = vmatpush1.msra.mxu0 0.0
      %3647 = vmatprep.subr.mxu0 0.0
      %3648 = vmatpush1.msra.mxu0 0.0
      %3649 = vmatprep.subr.mxu0 0.0
      %3650 = vmatpush1.msra.mxu0 0.0
      %3651 = vmatprep.subr.mxu0 0.0
      %3652 = vmatpush1.msra.mxu0 0.0
      %3653 = vmatprep.subr.mxu0 0.0
      %3654 = vmatpush1.msra.mxu0 0.0
      %3655 = vmatprep.subr.mxu0 0.0
      %3656 = vmatpush1.msra.mxu0 %v3474
      %3657 = vmatprep.subr.mxu0 0.0
      %3658 = vmatpush2.msra.mxu0 0.0
      %3659 = vmatprep.subr.mxu0 0.0
      %3660 = vmatpush2.msra.mxu0 0.0
      %3661 = vmatprep.subr.mxu0 0.0
      %3662 = vmatpush2.msra.mxu0 0.0
      %3663 = vmatprep.subr.mxu0 0.0
      %3664 = vmatpush2.msra.mxu0 0.0
      %3665 = vmatprep.subr.mxu0 0.0
      %3666 = vmatpush2.msra.mxu0 0.0
      %3667 = vmatprep.subr.mxu0 0.0
      %3668 = vmatpush2.msra.mxu0 0.0
      %3669 = vmatprep.subr.mxu0 0.0
      %3670 = vmatpush2.msra.mxu0 0.0
      %3671 = vmatprep.subr.mxu0 0.0
      %3672 = vmatpush2.msra.mxu0 0.0
      %3673 = vmatprep.subr.mxu0 0.0
      %3674 = vmatpush2.msra.mxu0 0.0
      %3675 = vmatprep.subr.mxu0 0.0
      %3676 = vmatpush2.msra.mxu0 0.0
      %3677 = vmatprep.subr.mxu0 0.0
      %3678 = vmatpush2.msra.mxu0 0.0
      %3679 = vmatprep.subr.mxu0 0.0
      %3680 = vmatpush2.msra.mxu0 0.0
      %3681 = vmatprep.subr.mxu0 0.0
      %3682 = vmatpush2.msra.mxu0 0.0
      %3683 = vmatprep.subr.mxu0 0.0
      %3684 = vmatpush2.msra.mxu0 0.0
      %3685 = vmatprep.subr.mxu0 0.0
      %3686 = vmatpush2.msra.mxu0 0.0
      %3687 = vmatprep.subr.mxu0 0.0
      %3688 = vmatpush2.msra.mxu0 0.0
      %3689 = vmatprep.mubr.f32.mxu0 0.0
      %3690 = vmatmul.mubr.f32.gmra.mxu0 %v3623
      %v3691 = vpop.f32.mrf.mxu0
      %v3692 = vadd.f32 0.0, %v3691
      %v3693 = vpop.f32.mrf.mxu0
      %3694 = vdwg.mxu0
      %v3696 = vsel %vm3475, %v3473, 0
      %3698 = vmatprep.subr.mxu0 0.0
      %3699 = vmatpush1.msra.mxu0 0.0
      %3700 = vmatprep.subr.mxu0 0.0
      %3701 = vmatpush1.msra.mxu0 0.0
      %3702 = vmatprep.subr.mxu0 0.0
      %3703 = vmatpush1.msra.mxu0 0.0
      %3704 = vmatprep.subr.mxu0 0.0
      %3705 = vmatpush1.msra.mxu0 0.0
      %3706 = vmatprep.subr.mxu0 0.0
      %3707 = vmatpush1.msra.mxu0 0.0
      %3708 = vmatprep.subr.mxu0 0.0
      %3709 = vmatpush1.msra.mxu0 0.0
      %3710 = vmatprep.subr.mxu0 0.0
      %3711 = vmatpush1.msra.mxu0 0.0
      %3712 = vmatprep.subr.mxu0 0.0
      %3713 = vmatpush1.msra.mxu0 0.0
      %3714 = vmatprep.subr.mxu0 0.0
      %3715 = vmatpush1.msra.mxu0 0.0
      %3716 = vmatprep.subr.mxu0 0.0
      %3717 = vmatpush1.msra.mxu0 0.0
      %3718 = vmatprep.subr.mxu0 0.0
      %3719 = vmatpush1.msra.mxu0 0.0
      %3720 = vmatprep.subr.mxu0 0.0
      %3721 = vmatpush1.msra.mxu0 0.0
      %3722 = vmatprep.subr.mxu0 0.0
      %3723 = vmatpush1.msra.mxu0 0.0
      %3724 = vmatprep.subr.mxu0 0.0
      %3725 = vmatpush1.msra.mxu0 0.0
      %3726 = vmatprep.subr.mxu0 0.0
      %3727 = vmatpush1.msra.mxu0 0.0
      %3728 = vmatprep.subr.mxu0 0.0
      %3729 = vmatpush1.msra.mxu0 %v3474
      %3730 = vmatprep.subr.mxu0 0.0
      %3731 = vmatpush2.msra.mxu0 0.0
      %3732 = vmatprep.subr.mxu0 0.0
      %3733 = vmatpush2.msra.mxu0 0.0
      %3734 = vmatprep.subr.mxu0 0.0
      %3735 = vmatpush2.msra.mxu0 0.0
      %3736 = vmatprep.subr.mxu0 0.0
      %3737 = vmatpush2.msra.mxu0 0.0
      %3738 = vmatprep.subr.mxu0 0.0
      %3739 = vmatpush2.msra.mxu0 0.0
      %3740 = vmatprep.subr.mxu0 0.0
      %3741 = vmatpush2.msra.mxu0 0.0
      %3742 = vmatprep.subr.mxu0 0.0
      %3743 = vmatpush2.msra.mxu0 0.0
      %3744 = vmatprep.subr.mxu0 0.0
      %3745 = vmatpush2.msra.mxu0 0.0
      %3746 = vmatprep.subr.mxu0 0.0
      %3747 = vmatpush2.msra.mxu0 0.0
      %3748 = vmatprep.subr.mxu0 0.0
      %3749 = vmatpush2.msra.mxu0 0.0
      %3750 = vmatprep.subr.mxu0 0.0
      %3751 = vmatpush2.msra.mxu0 0.0
      %3752 = vmatprep.subr.mxu0 0.0
      %3753 = vmatpush2.msra.mxu0 0.0
      %3754 = vmatprep.subr.mxu0 0.0
      %3755 = vmatpush2.msra.mxu0 0.0
      %3756 = vmatprep.subr.mxu0 0.0
      %3757 = vmatpush2.msra.mxu0 0.0
      %3758 = vmatprep.subr.mxu0 0.0
      %3759 = vmatpush2.msra.mxu0 0.0
      %3760 = vmatprep.subr.mxu0 0.0
      %3761 = vmatpush2.msra.mxu0 0.0
      %3762 = vmatprep.mubr.f32.mxu0 0.0
      %3763 = vmatmul.mubr.f32.gmra.mxu0 %v3696
      %v3764 = vpop.f32.mrf.mxu0
      %v3765 = vadd.f32 0.0, %v3764
      %v3766 = vpop.f32.mrf.mxu0
      %3767 = vdwg.mxu0
      %s3768 = scalar_lea.vmem %s3, 8
      %v3769 = vld [vmem:[%s3768] sm:$0xff]
      %3770 = vmatprep.subr.mxu0 0.0
      %3771 = vmatpush1.msra.mxu0 0.0
      %3772 = vmatprep.subr.mxu0 0.0
      %3773 = vmatpush1.msra.mxu0 0.0
      %3774 = vmatprep.subr.mxu0 0.0
      %3775 = vmatpush1.msra.mxu0 0.0
      %3776 = vmatprep.subr.mxu0 0.0
      %3777 = vmatpush1.msra.mxu0 0.0
      %3778 = vmatprep.subr.mxu0 0.0
      %3779 = vmatpush1.msra.mxu0 0.0
      %3780 = vmatprep.subr.mxu0 0.0
      %3781 = vmatpush1.msra.mxu0 0.0
      %3782 = vmatprep.subr.mxu0 0.0
      %3783 = vmatpush1.msra.mxu0 0.0
      %3784 = vmatprep.subr.mxu0 0.0
      %3785 = vmatpush1.msra.mxu0 0.0
      %3786 = vmatprep.subr.mxu0 0.0
      %3787 = vmatpush1.msra.mxu0 0.0
      %3788 = vmatprep.subr.mxu0 0.0
      %3789 = vmatpush1.msra.mxu0 0.0
      %3790 = vmatprep.subr.mxu0 0.0
      %3791 = vmatpush1.msra.mxu0 0.0
      %3792 = vmatprep.subr.mxu0 0.0
      %3793 = vmatpush1.msra.mxu0 0.0
      %3794 = vmatprep.subr.mxu0 0.0
      %3795 = vmatpush1.msra.mxu0 0.0
      %3796 = vmatprep.subr.mxu0 0.0
      %3797 = vmatpush1.msra.mxu0 0.0
      %3798 = vmatprep.subr.mxu0 0.0
      %3799 = vmatpush1.msra.mxu0 0.0
      %3800 = vmatprep.subr.mxu0 0.0
      %3801 = vmatpush1.msra.mxu0 %v3769
      %3802 = vmatprep.subr.mxu0 0.0
      %3803 = vmatpush2.msra.mxu0 0.0
      %3804 = vmatprep.subr.mxu0 0.0
      %3805 = vmatpush2.msra.mxu0 0.0
      %3806 = vmatprep.subr.mxu0 0.0
      %3807 = vmatpush2.msra.mxu0 0.0
      %3808 = vmatprep.subr.mxu0 0.0
      %3809 = vmatpush2.msra.mxu0 0.0
      %3810 = vmatprep.subr.mxu0 0.0
      %3811 = vmatpush2.msra.mxu0 0.0
      %3812 = vmatprep.subr.mxu0 0.0
      %3813 = vmatpush2.msra.mxu0 0.0
      %3814 = vmatprep.subr.mxu0 0.0
      %3815 = vmatpush2.msra.mxu0 0.0
      %3816 = vmatprep.subr.mxu0 0.0
      %3817 = vmatpush2.msra.mxu0 0.0
      %3818 = vmatprep.subr.mxu0 0.0
      %3819 = vmatpush2.msra.mxu0 0.0
      %3820 = vmatprep.subr.mxu0 0.0
      %3821 = vmatpush2.msra.mxu0 0.0
      %3822 = vmatprep.subr.mxu0 0.0
      %3823 = vmatpush2.msra.mxu0 0.0
      %3824 = vmatprep.subr.mxu0 0.0
      %3825 = vmatpush2.msra.mxu0 0.0
      %3826 = vmatprep.subr.mxu0 0.0
      %3827 = vmatpush2.msra.mxu0 0.0
      %3828 = vmatprep.subr.mxu0 0.0
      %3829 = vmatpush2.msra.mxu0 0.0
      %3830 = vmatprep.subr.mxu0 0.0
      %3831 = vmatpush2.msra.mxu0 0.0
      %3832 = vmatprep.subr.mxu0 0.0
      %3833 = vmatpush2.msra.mxu0 0.0
      %3834 = vmatprep.mubr.f32.mxu0 0.0
      %3835 = vmatmul.mubr.f32.gmra.mxu0 %v3477
      %v3836 = vpop.f32.mrf.mxu0
      %v3837 = vadd.f32 0.0, %v3836
      %v3838 = vpop.f32.mrf.mxu0
      %3839 = vdwg.mxu0
      %3840 = vmatprep.subr.mxu0 0.0
      %3841 = vmatpush1.msra.mxu0 0.0
      %3842 = vmatprep.subr.mxu0 0.0
      %3843 = vmatpush1.msra.mxu0 0.0
      %3844 = vmatprep.subr.mxu0 0.0
      %3845 = vmatpush1.msra.mxu0 0.0
      %3846 = vmatprep.subr.mxu0 0.0
      %3847 = vmatpush1.msra.mxu0 0.0
      %3848 = vmatprep.subr.mxu0 0.0
      %3849 = vmatpush1.msra.mxu0 0.0
      %3850 = vmatprep.subr.mxu0 0.0
      %3851 = vmatpush1.msra.mxu0 0.0
      %3852 = vmatprep.subr.mxu0 0.0
      %3853 = vmatpush1.msra.mxu0 0.0
      %3854 = vmatprep.subr.mxu0 0.0
      %3855 = vmatpush1.msra.mxu0 0.0
      %3856 = vmatprep.subr.mxu0 0.0
      %3857 = vmatpush1.msra.mxu0 0.0
      %3858 = vmatprep.subr.mxu0 0.0
      %3859 = vmatpush1.msra.mxu0 0.0
      %3860 = vmatprep.subr.mxu0 0.0
      %3861 = vmatpush1.msra.mxu0 0.0
      %3862 = vmatprep.subr.mxu0 0.0
      %3863 = vmatpush1.msra.mxu0 0.0
      %3864 = vmatprep.subr.mxu0 0.0
      %3865 = vmatpush1.msra.mxu0 0.0
      %3866 = vmatprep.subr.mxu0 0.0
      %3867 = vmatpush1.msra.mxu0 0.0
      %3868 = vmatprep.subr.mxu0 0.0
      %3869 = vmatpush1.msra.mxu0 0.0
      %3870 = vmatprep.subr.mxu0 0.0
      %3871 = vmatpush1.msra.mxu0 %v3769
      %3872 = vmatprep.subr.mxu0 0.0
      %3873 = vmatpush2.msra.mxu0 0.0
      %3874 = vmatprep.subr.mxu0 0.0
      %3875 = vmatpush2.msra.mxu0 0.0
      %3876 = vmatprep.subr.mxu0 0.0
      %3877 = vmatpush2.msra.mxu0 0.0
      %3878 = vmatprep.subr.mxu0 0.0
      %3879 = vmatpush2.msra.mxu0 0.0
      %3880 = vmatprep.subr.mxu0 0.0
      %3881 = vmatpush2.msra.mxu0 0.0
      %3882 = vmatprep.subr.mxu0 0.0
      %3883 = vmatpush2.msra.mxu0 0.0
      %3884 = vmatprep.subr.mxu0 0.0
      %3885 = vmatpush2.msra.mxu0 0.0
      %3886 = vmatprep.subr.mxu0 0.0
      %3887 = vmatpush2.msra.mxu0 0.0
      %3888 = vmatprep.subr.mxu0 0.0
      %3889 = vmatpush2.msra.mxu0 0.0
      %3890 = vmatprep.subr.mxu0 0.0
      %3891 = vmatpush2.msra.mxu0 0.0
      %3892 = vmatprep.subr.mxu0 0.0
      %3893 = vmatpush2.msra.mxu0 0.0
      %3894 = vmatprep.subr.mxu0 0.0
      %3895 = vmatpush2.msra.mxu0 0.0
      %3896 = vmatprep.subr.mxu0 0.0
      %3897 = vmatpush2.msra.mxu0 0.0
      %3898 = vmatprep.subr.mxu0 0.0
      %3899 = vmatpush2.msra.mxu0 0.0
      %3900 = vmatprep.subr.mxu0 0.0
      %3901 = vmatpush2.msra.mxu0 0.0
      %3902 = vmatprep.subr.mxu0 0.0
      %3903 = vmatpush2.msra.mxu0 0.0
      %3904 = vmatprep.mubr.f32.mxu0 0.0
      %3905 = vmatmul.mubr.f32.gmra.mxu0 %v3550
      %v3906 = vpop.f32.mrf.mxu0
      %v3907 = vadd.f32 0.0, %v3906
      %v3908 = vpop.f32.mrf.mxu0
      %3909 = vdwg.mxu0
      %3910 = vmatprep.subr.mxu0 0.0
      %3911 = vmatpush1.msra.mxu0 0.0
      %3912 = vmatprep.subr.mxu0 0.0
      %3913 = vmatpush1.msra.mxu0 0.0
      %3914 = vmatprep.subr.mxu0 0.0
      %3915 = vmatpush1.msra.mxu0 0.0
      %3916 = vmatprep.subr.mxu0 0.0
      %3917 = vmatpush1.msra.mxu0 0.0
      %3918 = vmatprep.subr.mxu0 0.0
      %3919 = vmatpush1.msra.mxu0 0.0
      %3920 = vmatprep.subr.mxu0 0.0
      %3921 = vmatpush1.msra.mxu0 0.0
      %3922 = vmatprep.subr.mxu0 0.0
      %3923 = vmatpush1.msra.mxu0 0.0
      %3924 = vmatprep.subr.mxu0 0.0
      %3925 = vmatpush1.msra.mxu0 0.0
      %3926 = vmatprep.subr.mxu0 0.0
      %3927 = vmatpush1.msra.mxu0 0.0
      %3928 = vmatprep.subr.mxu0 0.0
      %3929 = vmatpush1.msra.mxu0 0.0
      %3930 = vmatprep.subr.mxu0 0.0
      %3931 = vmatpush1.msra.mxu0 0.0
      %3932 = vmatprep.subr.mxu0 0.0
      %3933 = vmatpush1.msra.mxu0 0.0
      %3934 = vmatprep.subr.mxu0 0.0
      %3935 = vmatpush1.msra.mxu0 0.0
      %3936 = vmatprep.subr.mxu0 0.0
      %3937 = vmatpush1.msra.mxu0 0.0
      %3938 = vmatprep.subr.mxu0 0.0
      %3939 = vmatpush1.msra.mxu0 0.0
      %3940 = vmatprep.subr.mxu0 0.0
      %3941 = vmatpush1.msra.mxu0 %v3769
      %3942 = vmatprep.subr.mxu0 0.0
      %3943 = vmatpush2.msra.mxu0 0.0
      %3944 = vmatprep.subr.mxu0 0.0
      %3945 = vmatpush2.msra.mxu0 0.0
      %3946 = vmatprep.subr.mxu0 0.0
      %3947 = vmatpush2.msra.mxu0 0.0
      %3948 = vmatprep.subr.mxu0 0.0
      %3949 = vmatpush2.msra.mxu0 0.0
      %3950 = vmatprep.subr.mxu0 0.0
      %3951 = vmatpush2.msra.mxu0 0.0
      %3952 = vmatprep.subr.mxu0 0.0
      %3953 = vmatpush2.msra.mxu0 0.0
      %3954 = vmatprep.subr.mxu0 0.0
      %3955 = vmatpush2.msra.mxu0 0.0
      %3956 = vmatprep.subr.mxu0 0.0
      %3957 = vmatpush2.msra.mxu0 0.0
      %3958 = vmatprep.subr.mxu0 0.0
      %3959 = vmatpush2.msra.mxu0 0.0
      %3960 = vmatprep.subr.mxu0 0.0
      %3961 = vmatpush2.msra.mxu0 0.0
      %3962 = vmatprep.subr.mxu0 0.0
      %3963 = vmatpush2.msra.mxu0 0.0
      %3964 = vmatprep.subr.mxu0 0.0
      %3965 = vmatpush2.msra.mxu0 0.0
      %3966 = vmatprep.subr.mxu0 0.0
      %3967 = vmatpush2.msra.mxu0 0.0
      %3968 = vmatprep.subr.mxu0 0.0
      %3969 = vmatpush2.msra.mxu0 0.0
      %3970 = vmatprep.subr.mxu0 0.0
      %3971 = vmatpush2.msra.mxu0 0.0
      %3972 = vmatprep.subr.mxu0 0.0
      %3973 = vmatpush2.msra.mxu0 0.0
      %3974 = vmatprep.mubr.f32.mxu0 0.0
      %3975 = vmatmul.mubr.f32.gmra.mxu0 %v3623
      %v3976 = vpop.f32.mrf.mxu0
      %v3977 = vadd.f32 0.0, %v3976
      %v3978 = vpop.f32.mrf.mxu0
      %3979 = vdwg.mxu0
      %3980 = vmatprep.subr.mxu0 0.0
      %3981 = vmatpush1.msra.mxu0 0.0
      %3982 = vmatprep.subr.mxu0 0.0
      %3983 = vmatpush1.msra.mxu0 0.0
      %3984 = vmatprep.subr.mxu0 0.0
      %3985 = vmatpush1.msra.mxu0 0.0
      %3986 = vmatprep.subr.mxu0 0.0
      %3987 = vmatpush1.msra.mxu0 0.0
      %3988 = vmatprep.subr.mxu0 0.0
      %3989 = vmatpush1.msra.mxu0 0.0
      %3990 = vmatprep.subr.mxu0 0.0
      %3991 = vmatpush1.msra.mxu0 0.0
      %3992 = vmatprep.subr.mxu0 0.0
      %3993 = vmatpush1.msra.mxu0 0.0
      %3994 = vmatprep.subr.mxu0 0.0
      %3995 = vmatpush1.msra.mxu0 0.0
      %3996 = vmatprep.subr.mxu0 0.0
      %3997 = vmatpush1.msra.mxu0 0.0
      %3998 = vmatprep.subr.mxu0 0.0
      %3999 = vmatpush1.msra.mxu0 0.0
      %4000 = vmatprep.subr.mxu0 0.0
      %4001 = vmatpush1.msra.mxu0 0.0
      %4002 = vmatprep.subr.mxu0 0.0
      %4003 = vmatpush1.msra.mxu0 0.0
      %4004 = vmatprep.subr.mxu0 0.0
      %4005 = vmatpush1.msra.mxu0 0.0
      %4006 = vmatprep.subr.mxu0 0.0
      %4007 = vmatpush1.msra.mxu0 0.0
      %4008 = vmatprep.subr.mxu0 0.0
      %4009 = vmatpush1.msra.mxu0 0.0
      %4010 = vmatprep.subr.mxu0 0.0
      %4011 = vmatpush1.msra.mxu0 %v3769
      %4012 = vmatprep.subr.mxu0 0.0
      %4013 = vmatpush2.msra.mxu0 0.0
      %4014 = vmatprep.subr.mxu0 0.0
      %4015 = vmatpush2.msra.mxu0 0.0
      %4016 = vmatprep.subr.mxu0 0.0
      %4017 = vmatpush2.msra.mxu0 0.0
      %4018 = vmatprep.subr.mxu0 0.0
      %4019 = vmatpush2.msra.mxu0 0.0
      %4020 = vmatprep.subr.mxu0 0.0
      %4021 = vmatpush2.msra.mxu0 0.0
      %4022 = vmatprep.subr.mxu0 0.0
      %4023 = vmatpush2.msra.mxu0 0.0
      %4024 = vmatprep.subr.mxu0 0.0
      %4025 = vmatpush2.msra.mxu0 0.0
      %4026 = vmatprep.subr.mxu0 0.0
      %4027 = vmatpush2.msra.mxu0 0.0
      %4028 = vmatprep.subr.mxu0 0.0
      %4029 = vmatpush2.msra.mxu0 0.0
      %4030 = vmatprep.subr.mxu0 0.0
      %4031 = vmatpush2.msra.mxu0 0.0
      %4032 = vmatprep.subr.mxu0 0.0
      %4033 = vmatpush2.msra.mxu0 0.0
      %4034 = vmatprep.subr.mxu0 0.0
      %4035 = vmatpush2.msra.mxu0 0.0
      %4036 = vmatprep.subr.mxu0 0.0
      %4037 = vmatpush2.msra.mxu0 0.0
      %4038 = vmatprep.subr.mxu0 0.0
      %4039 = vmatpush2.msra.mxu0 0.0
      %4040 = vmatprep.subr.mxu0 0.0
      %4041 = vmatpush2.msra.mxu0 0.0
      %4042 = vmatprep.subr.mxu0 0.0
      %4043 = vmatpush2.msra.mxu0 0.0
      %4044 = vmatprep.mubr.f32.mxu0 0.0
      %4045 = vmatmul.mubr.f32.gmra.mxu0 %v3696
      %v4046 = vpop.f32.mrf.mxu0
      %v4047 = vadd.f32 0.0, %v4046
      %v4048 = vpop.f32.mrf.mxu0
      %4049 = vdwg.mxu0
      %v4050 = vmax.f32 %v3546, %v3837
      %v4051 = vmax.f32 %v3619, %v3907
      %v4052 = vmax.f32 %v3692, %v3977
      %v4053 = vmax.f32 %v3765, %v4047
      %s4054 = scalar_lea.vmem %s3, 16
      %v4055 = vld [vmem:[%s4054] sm:$0xff]
      %4056 = vmatprep.subr.mxu0 0.0
      %4057 = vmatpush1.msra.mxu0 0.0
      %4058 = vmatprep.subr.mxu0 0.0
      %4059 = vmatpush1.msra.mxu0 0.0
      %4060 = vmatprep.subr.mxu0 0.0
      %4061 = vmatpush1.msra.mxu0 0.0
      %4062 = vmatprep.subr.mxu0 0.0
      %4063 = vmatpush1.msra.mxu0 0.0
      %4064 = vmatprep.subr.mxu0 0.0
      %4065 = vmatpush1.msra.mxu0 0.0
      %4066 = vmatprep.subr.mxu0 0.0
      %4067 = vmatpush1.msra.mxu0 0.0
      %4068 = vmatprep.subr.mxu0 0.0
      %4069 = vmatpush1.msra.mxu0 0.0
      %4070 = vmatprep.subr.mxu0 0.0
      %4071 = vmatpush1.msra.mxu0 0.0
      %4072 = vmatprep.subr.mxu0 0.0
      %4073 = vmatpush1.msra.mxu0 0.0
      %4074 = vmatprep.subr.mxu0 0.0
      %4075 = vmatpush1.msra.mxu0 0.0
      %4076 = vmatprep.subr.mxu0 0.0
      %4077 = vmatpush1.msra.mxu0 0.0
      %4078 = vmatprep.subr.mxu0 0.0
      %4079 = vmatpush1.msra.mxu0 0.0
      %4080 = vmatprep.subr.mxu0 0.0
      %4081 = vmatpush1.msra.mxu0 0.0
      %4082 = vmatprep.subr.mxu0 0.0
      %4083 = vmatpush1.msra.mxu0 0.0
      %4084 = vmatprep.subr.mxu0 0.0
      %4085 = vmatpush1.msra.mxu0 0.0
      %4086 = vmatprep.subr.mxu0 0.0
      %4087 = vmatpush1.msra.mxu0 %v4055
      %4088 = vmatprep.subr.mxu0 0.0
      %4089 = vmatpush2.msra.mxu0 0.0
      %4090 = vmatprep.subr.mxu0 0.0
      %4091 = vmatpush2.msra.mxu0 0.0
      %4092 = vmatprep.subr.mxu0 0.0
      %4093 = vmatpush2.msra.mxu0 0.0
      %4094 = vmatprep.subr.mxu0 0.0
      %4095 = vmatpush2.msra.mxu0 0.0
      %4096 = vmatprep.subr.mxu0 0.0
      %4097 = vmatpush2.msra.mxu0 0.0
      %4098 = vmatprep.subr.mxu0 0.0
      %4099 = vmatpush2.msra.mxu0 0.0
      %4100 = vmatprep.subr.mxu0 0.0
      %4101 = vmatpush2.msra.mxu0 0.0
      %4102 = vmatprep.subr.mxu0 0.0
      %4103 = vmatpush2.msra.mxu0 0.0
      %4104 = vmatprep.subr.mxu0 0.0
      %4105 = vmatpush2.msra.mxu0 0.0
      %4106 = vmatprep.subr.mxu0 0.0
      %4107 = vmatpush2.msra.mxu0 0.0
      %4108 = vmatprep.subr.mxu0 0.0
      %4109 = vmatpush2.msra.mxu0 0.0
      %4110 = vmatprep.subr.mxu0 0.0
      %4111 = vmatpush2.msra.mxu0 0.0
      %4112 = vmatprep.subr.mxu0 0.0
      %4113 = vmatpush2.msra.mxu0 0.0
      %4114 = vmatprep.subr.mxu0 0.0
      %4115 = vmatpush2.msra.mxu0 0.0
      %4116 = vmatprep.subr.mxu0 0.0
      %4117 = vmatpush2.msra.mxu0 0.0
      %4118 = vmatprep.subr.mxu0 0.0
      %4119 = vmatpush2.msra.mxu0 0.0
      %4120 = vmatprep.mubr.f32.mxu0 0.0
      %4121 = vmatmul.mubr.f32.gmra.mxu0 %v3477
      %v4122 = vpop.f32.mrf.mxu0
      %v4123 = vadd.f32 0.0, %v4122
      %v4124 = vpop.f32.mrf.mxu0
      %4125 = vdwg.mxu0
      %4126 = vmatprep.subr.mxu0 0.0
      %4127 = vmatpush1.msra.mxu0 0.0
      %4128 = vmatprep.subr.mxu0 0.0
      %4129 = vmatpush1.msra.mxu0 0.0
      %4130 = vmatprep.subr.mxu0 0.0
      %4131 = vmatpush1.msra.mxu0 0.0
      %4132 = vmatprep.subr.mxu0 0.0
      %4133 = vmatpush1.msra.mxu0 0.0
      %4134 = vmatprep.subr.mxu0 0.0
      %4135 = vmatpush1.msra.mxu0 0.0
      %4136 = vmatprep.subr.mxu0 0.0
      %4137 = vmatpush1.msra.mxu0 0.0
      %4138 = vmatprep.subr.mxu0 0.0
      %4139 = vmatpush1.msra.mxu0 0.0
      %4140 = vmatprep.subr.mxu0 0.0
      %4141 = vmatpush1.msra.mxu0 0.0
      %4142 = vmatprep.subr.mxu0 0.0
      %4143 = vmatpush1.msra.mxu0 0.0
      %4144 = vmatprep.subr.mxu0 0.0
      %4145 = vmatpush1.msra.mxu0 0.0
      %4146 = vmatprep.subr.mxu0 0.0
      %4147 = vmatpush1.msra.mxu0 0.0
      %4148 = vmatprep.subr.mxu0 0.0
      %4149 = vmatpush1.msra.mxu0 0.0
      %4150 = vmatprep.subr.mxu0 0.0
      %4151 = vmatpush1.msra.mxu0 0.0
      %4152 = vmatprep.subr.mxu0 0.0
      %4153 = vmatpush1.msra.mxu0 0.0
      %4154 = vmatprep.subr.mxu0 0.0
      %4155 = vmatpush1.msra.mxu0 0.0
      %4156 = vmatprep.subr.mxu0 0.0
      %4157 = vmatpush1.msra.mxu0 %v4055
      %4158 = vmatprep.subr.mxu0 0.0
      %4159 = vmatpush2.msra.mxu0 0.0
      %4160 = vmatprep.subr.mxu0 0.0
      %4161 = vmatpush2.msra.mxu0 0.0
      %4162 = vmatprep.subr.mxu0 0.0
      %4163 = vmatpush2.msra.mxu0 0.0
      %4164 = vmatprep.subr.mxu0 0.0
      %4165 = vmatpush2.msra.mxu0 0.0
      %4166 = vmatprep.subr.mxu0 0.0
      %4167 = vmatpush2.msra.mxu0 0.0
      %4168 = vmatprep.subr.mxu0 0.0
      %4169 = vmatpush2.msra.mxu0 0.0
      %4170 = vmatprep.subr.mxu0 0.0
      %4171 = vmatpush2.msra.mxu0 0.0
      %4172 = vmatprep.subr.mxu0 0.0
      %4173 = vmatpush2.msra.mxu0 0.0
      %4174 = vmatprep.subr.mxu0 0.0
      %4175 = vmatpush2.msra.mxu0 0.0
      %4176 = vmatprep.subr.mxu0 0.0
      %4177 = vmatpush2.msra.mxu0 0.0
      %4178 = vmatprep.subr.mxu0 0.0
      %4179 = vmatpush2.msra.mxu0 0.0
      %4180 = vmatprep.subr.mxu0 0.0
      %4181 = vmatpush2.msra.mxu0 0.0
      %4182 = vmatprep.subr.mxu0 0.0
      %4183 = vmatpush2.msra.mxu0 0.0
      %4184 = vmatprep.subr.mxu0 0.0
      %4185 = vmatpush2.msra.mxu0 0.0
      %4186 = vmatprep.subr.mxu0 0.0
      %4187 = vmatpush2.msra.mxu0 0.0
      %4188 = vmatprep.subr.mxu0 0.0
      %4189 = vmatpush2.msra.mxu0 0.0
      %4190 = vmatprep.mubr.f32.mxu0 0.0
      %4191 = vmatmul.mubr.f32.gmra.mxu0 %v3550
      %v4192 = vpop.f32.mrf.mxu0
      %v4193 = vadd.f32 0.0, %v4192
      %v4194 = vpop.f32.mrf.mxu0
      %4195 = vdwg.mxu0
      %4196 = vmatprep.subr.mxu0 0.0
      %4197 = vmatpush1.msra.mxu0 0.0
      %4198 = vmatprep.subr.mxu0 0.0
      %4199 = vmatpush1.msra.mxu0 0.0
      %4200 = vmatprep.subr.mxu0 0.0
      %4201 = vmatpush1.msra.mxu0 0.0
      %4202 = vmatprep.subr.mxu0 0.0
      %4203 = vmatpush1.msra.mxu0 0.0
      %4204 = vmatprep.subr.mxu0 0.0
      %4205 = vmatpush1.msra.mxu0 0.0
      %4206 = vmatprep.subr.mxu0 0.0
      %4207 = vmatpush1.msra.mxu0 0.0
      %4208 = vmatprep.subr.mxu0 0.0
      %4209 = vmatpush1.msra.mxu0 0.0
      %4210 = vmatprep.subr.mxu0 0.0
      %4211 = vmatpush1.msra.mxu0 0.0
      %4212 = vmatprep.subr.mxu0 0.0
      %4213 = vmatpush1.msra.mxu0 0.0
      %4214 = vmatprep.subr.mxu0 0.0
      %4215 = vmatpush1.msra.mxu0 0.0
      %4216 = vmatprep.subr.mxu0 0.0
      %4217 = vmatpush1.msra.mxu0 0.0
      %4218 = vmatprep.subr.mxu0 0.0
      %4219 = vmatpush1.msra.mxu0 0.0
      %4220 = vmatprep.subr.mxu0 0.0
      %4221 = vmatpush1.msra.mxu0 0.0
      %4222 = vmatprep.subr.mxu0 0.0
      %4223 = vmatpush1.msra.mxu0 0.0
      %4224 = vmatprep.subr.mxu0 0.0
      %4225 = vmatpush1.msra.mxu0 0.0
      %4226 = vmatprep.subr.mxu0 0.0
      %4227 = vmatpush1.msra.mxu0 %v4055
      %4228 = vmatprep.subr.mxu0 0.0
      %4229 = vmatpush2.msra.mxu0 0.0
      %4230 = vmatprep.subr.mxu0 0.0
      %4231 = vmatpush2.msra.mxu0 0.0
      %4232 = vmatprep.subr.mxu0 0.0
      %4233 = vmatpush2.msra.mxu0 0.0
      %4234 = vmatprep.subr.mxu0 0.0
      %4235 = vmatpush2.msra.mxu0 0.0
      %4236 = vmatprep.subr.mxu0 0.0
      %4237 = vmatpush2.msra.mxu0 0.0
      %4238 = vmatprep.subr.mxu0 0.0
      %4239 = vmatpush2.msra.mxu0 0.0
      %4240 = vmatprep.subr.mxu0 0.0
      %4241 = vmatpush2.msra.mxu0 0.0
      %4242 = vmatprep.subr.mxu0 0.0
      %4243 = vmatpush2.msra.mxu0 0.0
      %4244 = vmatprep.subr.mxu0 0.0
      %4245 = vmatpush2.msra.mxu0 0.0
      %4246 = vmatprep.subr.mxu0 0.0
      %4247 = vmatpush2.msra.mxu0 0.0
      %4248 = vmatprep.subr.mxu0 0.0
      %4249 = vmatpush2.msra.mxu0 0.0
      %4250 = vmatprep.subr.mxu0 0.0
      %4251 = vmatpush2.msra.mxu0 0.0
      %4252 = vmatprep.subr.mxu0 0.0
      %4253 = vmatpush2.msra.mxu0 0.0
      %4254 = vmatprep.subr.mxu0 0.0
      %4255 = vmatpush2.msra.mxu0 0.0
      %4256 = vmatprep.subr.mxu0 0.0
      %4257 = vmatpush2.msra.mxu0 0.0
      %4258 = vmatprep.subr.mxu0 0.0
      %4259 = vmatpush2.msra.mxu0 0.0
      %4260 = vmatprep.mubr.f32.mxu0 0.0
      %4261 = vmatmul.mubr.f32.gmra.mxu0 %v3623
      %v4262 = vpop.f32.mrf.mxu0
      %v4263 = vadd.f32 0.0, %v4262
      %v4264 = vpop.f32.mrf.mxu0
      %4265 = vdwg.mxu0
      %4266 = vmatprep.subr.mxu0 0.0
      %4267 = vmatpush1.msra.mxu0 0.0
      %4268 = vmatprep.subr.mxu0 0.0
      %4269 = vmatpush1.msra.mxu0 0.0
      %4270 = vmatprep.subr.mxu0 0.0
      %4271 = vmatpush1.msra.mxu0 0.0
      %4272 = vmatprep.subr.mxu0 0.0
      %4273 = vmatpush1.msra.mxu0 0.0
      %4274 = vmatprep.subr.mxu0 0.0
      %4275 = vmatpush1.msra.mxu0 0.0
      %4276 = vmatprep.subr.mxu0 0.0
      %4277 = vmatpush1.msra.mxu0 0.0
      %4278 = vmatprep.subr.mxu0 0.0
      %4279 = vmatpush1.msra.mxu0 0.0
      %4280 = vmatprep.subr.mxu0 0.0
      %4281 = vmatpush1.msra.mxu0 0.0
      %4282 = vmatprep.subr.mxu0 0.0
      %4283 = vmatpush1.msra.mxu0 0.0
      %4284 = vmatprep.subr.mxu0 0.0
      %4285 = vmatpush1.msra.mxu0 0.0
      %4286 = vmatprep.subr.mxu0 0.0
      %4287 = vmatpush1.msra.mxu0 0.0
      %4288 = vmatprep.subr.mxu0 0.0
      %4289 = vmatpush1.msra.mxu0 0.0
      %4290 = vmatprep.subr.mxu0 0.0
      %4291 = vmatpush1.msra.mxu0 0.0
      %4292 = vmatprep.subr.mxu0 0.0
      %4293 = vmatpush1.msra.mxu0 0.0
      %4294 = vmatprep.subr.mxu0 0.0
      %4295 = vmatpush1.msra.mxu0 0.0
      %4296 = vmatprep.subr.mxu0 0.0
      %4297 = vmatpush1.msra.mxu0 %v4055
      %4298 = vmatprep.subr.mxu0 0.0
      %4299 = vmatpush2.msra.mxu0 0.0
      %4300 = vmatprep.subr.mxu0 0.0
      %4301 = vmatpush2.msra.mxu0 0.0
      %4302 = vmatprep.subr.mxu0 0.0
      %4303 = vmatpush2.msra.mxu0 0.0
      %4304 = vmatprep.subr.mxu0 0.0
      %4305 = vmatpush2.msra.mxu0 0.0
      %4306 = vmatprep.subr.mxu0 0.0
      %4307 = vmatpush2.msra.mxu0 0.0
      %4308 = vmatprep.subr.mxu0 0.0
      %4309 = vmatpush2.msra.mxu0 0.0
      %4310 = vmatprep.subr.mxu0 0.0
      %4311 = vmatpush2.msra.mxu0 0.0
      %4312 = vmatprep.subr.mxu0 0.0
      %4313 = vmatpush2.msra.mxu0 0.0
      %4314 = vmatprep.subr.mxu0 0.0
      %4315 = vmatpush2.msra.mxu0 0.0
      %4316 = vmatprep.subr.mxu0 0.0
      %4317 = vmatpush2.msra.mxu0 0.0
      %4318 = vmatprep.subr.mxu0 0.0
      %4319 = vmatpush2.msra.mxu0 0.0
      %4320 = vmatprep.subr.mxu0 0.0
      %4321 = vmatpush2.msra.mxu0 0.0
      %4322 = vmatprep.subr.mxu0 0.0
      %4323 = vmatpush2.msra.mxu0 0.0
      %4324 = vmatprep.subr.mxu0 0.0
      %4325 = vmatpush2.msra.mxu0 0.0
      %4326 = vmatprep.subr.mxu0 0.0
      %4327 = vmatpush2.msra.mxu0 0.0
      %4328 = vmatprep.subr.mxu0 0.0
      %4329 = vmatpush2.msra.mxu0 0.0
      %4330 = vmatprep.mubr.f32.mxu0 0.0
      %4331 = vmatmul.mubr.f32.gmra.mxu0 %v3696
      %v4332 = vpop.f32.mrf.mxu0
      %v4333 = vadd.f32 0.0, %v4332
      %v4334 = vpop.f32.mrf.mxu0
      %4335 = vdwg.mxu0
      %v4336 = vmax.f32 %v4050, %v4123
      %v4337 = vmax.f32 %v4051, %v4193
      %v4338 = vmax.f32 %v4052, %v4263
      %v4339 = vmax.f32 %v4053, %v4333
      %vm4340 = vcmask 31744
      %4341 = vst.msk [vmem:[%s197] sm:$0xff] %vm4340, %v4336
      %4342 = vst.msk [vmem:[%s197 + $0x8] sm:$0xff] %vm4340, %v4337
      %4343 = vst.msk [vmem:[%s197 + $0x10] sm:$0xff] %vm4340, %v4338
      %4344 = vst.msk [vmem:[%s197 + $0x18] sm:$0xff] %vm4340, %v4339
      %p4345 = scmp.lt.s32.totalorder %s15, 7
      %s4346 = scalar_select %p4345, %s15, 7
      %s4347 = smul.addr %s4346, 4
      %s4348 = smul.addr %s4347, 8
      %s4349 = scalar_lea.vmem %s4, %s4348
      // Predicated region
      $region37: #{resnet_basic_stem.1} parent=35 // pred_check
        %p4350 = pneg %p122
      $region38: #{resnet_basic_stem.1} parent=35 // pred_check_branch
        %4352 = sbr.rel (%p4350) target = $region40
      $region39: #{resnet_basic_stem.1} parent=35 // pred_region
        _
      $region40: #{resnet_basic_stem.1} parent=35 // pred_fallthru
        _
    $region36: #{resnet_basic_stem.1} parent=5 // pred_fallthru
      _
    %p4353 = scmp.le.s32.totalorder 2, %s10
    // Predicated region
    $region41: #{resnet_basic_stem.1} parent=5 // pred_check
      %p4354 = pneg %p4353
    $region42: #{resnet_basic_stem.1} parent=5 // pred_check_branch
      %4356 = sbr.rel (%p4354) target = $region44
    $region43: #{resnet_basic_stem.1} parent=5 // pred_region
      %s4357 = ssub.s32 %s10, 2
      // Predicated region
      $region45: #{resnet_basic_stem.1} parent=43 // pred_check
        %p4358 = pneg %p128
      $region46: #{resnet_basic_stem.1} parent=43 // pred_check_branch
        %4360 = sbr.rel (%p4358) target = $region48
      $region47: #{resnet_basic_stem.1} parent=43 // pred_region
        %p4361 = scmp.lt.s32.totalorder %s16, 7
        %s4362 = scalar_select %p4361, %s16, 7
        %s4363 = smul.addr %s4362, 4
        %s4364 = smul.addr %s4363, 8
        %s4365 = scalar_lea.vmem %s4, %s4364
      $region48: #{resnet_basic_stem.1} parent=43 // pred_fallthru
        _
    $region44: #{resnet_basic_stem.1} parent=5 // pred_fallthru
      _
  $region6: #{resnet_basic_stem.1} parent=0 // loop_footer
    %s14 = sadd.s32 1, %s10
  $region7: #{resnet_basic_stem.1} parent=0 // loop_footer_branch
    %9 = sbr.rel target = $region3
  $region8: #{resnet_basic_stem.1} parent=0 // loop_exit
    _

</llo_original>
